<compile_context>
chip_gen: v6e
topology: v6e:2x2x1
jax: 0.10.0
libtpu: 0.0.40
codegen_flags: <defaults>
</compile_context>

<pallas_src>
import jax
import jax.numpy as jnp
from jax import lax
from jax.experimental import pallas as pl
from jax.experimental.pallas import tpu as pltpu

# ------------------------- architecture constants ---------------------------
IMG_H = IMG_W = 16
HW = IMG_H * IMG_W                      # 256 spatial positions -> lane axis
HW_S = (IMG_H // 2) * (IMG_W // 2)      # 64 after the stride-2 block
C0 = 8                                  # firstFilterUp / CustomBlock channels
C1 = 16                                 # strideBlock output channels
SE_MID = 8                              # _make_divisible(C0 // 4, 8)
NFEAT = 32

PARAM_ORDER = (
    "stem_w", "stem_b",
    "b1c1_w", "b1c1_b", "b1c2_w", "b1c2_b",
    "se_w1", "se_b1", "se_w2", "se_b2",
    "b2dw_w", "b2dw_b", "b2c2_w", "b2c2_b",
    "b3cv_w", "b3cv_b", "b3sk_w", "b3sk_b",
    "hd_w", "hd_b",
)


# ------------------------------ activations ---------------------------------
def _act(x, act):
    if act == "swish":                                  # nn.Hardswish
        return x * jnp.clip(x + 3.0, 0.0, 6.0) * (1.0 / 6.0)
    return jnp.maximum(x, 0.0)                          # nn.ReLU


def _hardsigmoid(x):                                    # nn.Hardsigmoid
    return jnp.clip(x + 3.0, 0.0, 6.0) * (1.0 / 6.0)


def _instnorm_act(x, act, eps=1e-5):
    """InstanceNorm2d (affine=False, biased var) + activation on a (C, H*W) tile."""
    mean = jnp.mean(x, axis=1, keepdims=True)
    var = jnp.mean((x - mean) ** 2, axis=1, keepdims=True)
    return _act((x - mean) * lax.rsqrt(var + eps), act)


# ------------------------- in-kernel conv helpers ----------------------------
def _shift_taps(x, mask_l, mask_r):
    """The 9 'im2col' taps of a 3x3 / pad=1 conv for a (C, H*W) tile.

    Tap t = (di+1)*3 + (dj+1) holds x[:, (h+di)*W + (w+dj)] at flat position
    h*W + w, and 0 where the source pixel falls outside the image.  Vertical
    overflow is zeroed by the lane shift's zero fill; horizontal wrap is killed
    by the column masks.
    """
    c, m = x.shape
    taps = []
    for di in (-1, 0, 1):
        for dj in (-1, 0, 1):
            s = di * IMG_W + dj
            if s == 0:
                y = x
            elif s > 0:
                y = jnp.concatenate([x[:, s:], jnp.zeros((c, s), x.dtype)], axis=1)
            else:
                y = jnp.concatenate([jnp.zeros((c, -s), x.dtype), x[:, :m + s]], axis=1)
            if dj == -1:
                y = jnp.where(mask_l, y, 0.0)
            elif dj == 1:
                y = jnp.where(mask_r, y, 0.0)
            taps.append(y)
    return taps


def _conv3x3(x, w, b, mask_l, mask_r):
    """Dense 3x3 / pad=1 conv: one lane-dense (Cout, 9*Cin) @ (9*Cin, H*W) MXU matmul."""
    xc = jnp.concatenate(_shift_taps(x, mask_l, mask_r), axis=0)       # (9*Cin, HW)
    return jnp.dot(w, xc, preferred_element_type=jnp.float32) + b      # bias on sublanes


def _dwconv3x3(x, w, b, mask_l, mask_r):
    """Depthwise 3x3 / pad=1 conv as a 9-tap VPU multiply-accumulate."""
    taps = _shift_taps(x, mask_l, mask_r)
    acc = b + w[:, 0:1] * taps[0]
    for t in range(1, 9):
        acc = acc + w[:, t:t + 1] * taps[t]
    return acc


# --------------------------- the fused kernel --------------------------------
def modelparse_kernel(x_ref, sel_ref,
                      stem_w, stem_b,
                      b1c1_w, b1c1_b, b1c2_w, b1c2_b,
                      se_w1, se_b1, se_w2, se_b2,
                      b2dw_w, b2dw_b, b2c2_w, b2c2_b,
                      b3cv_w, b3cv_b, b3sk_w, b3sk_b,
                      hd_w, hd_b,
                      o_ref):
    """Whole-network forward; all activations live in VMEM in (C, H*W) layout."""
    n_batch = x_ref.shape[0]

    # Column-validity masks for the +/-1 horizontal taps (shared by every conv).
    col = lax.broadcasted_iota(jnp.int32, (1, HW), 1) % IMG_W
    mask_l = col >= 1                  # source column w-1 exists
    mask_r = col <= IMG_W - 2          # source column w+1 exists

    sel = sel_ref[...]                 # (HW, HW_S) one-hot stride-2 subsample matrix

    pooled = []
    for n in range(n_batch):           # N=2: unrolled at trace time, single launch
        x0 = x_ref[n]                                                   # (8, 256)

        # stem: Conv2d(3->8, 3x3, pad=1); input channels are zero-padded 3 -> 8.
        a = _conv3x3(x0, stem_w[...], stem_b[...], mask_l, mask_r)

        # ---- CustomBlock 1: (IN + ReLU + conv3x3) x 2, SE, residual ----
        y = _instnorm_act(a, "relu")
        y = _conv3x3(y, b1c1_w[...], b1c1_b[...], mask_l, mask_r)
        y = _instnorm_act(y, "relu")
        y = _conv3x3(y, b1c2_w[...], b1c2_b[...], mask_l, mask_r)
        sq = jnp.mean(y, axis=1, keepdims=True)                         # (8, 1) squeeze
        h = jnp.maximum(                                                # fc1 on VPU
            jnp.sum(sq * se_w1[...], axis=0, keepdims=True) + se_b1[...], 0.0)
        sc = _hardsigmoid(                                              # fc2 on VPU
            jnp.sum(se_w2[...] * h, axis=1, keepdims=True) + se_b2[...])
        a = a + y * sc                                                  # SE scale + residual

        # ---- CustomBlock 2: depthwise 3x3 then dense 3x3 (Hardswish), residual ----
        y = _instnorm_act(a, "swish")
        y = _dwconv3x3(y, b2dw_w[...], b2dw_b[...], mask_l, mask_r)
        y = _instnorm_act(y, "swish")
        y = _conv3x3(y, b2c2_w[...], b2c2_b[...], mask_l, mask_r)
        a = a + y

        # ---- strideBlock: IN + Hardswish + conv3x3(stride 2)  +  1x1(stride 2) skip ----
        y = _instnorm_act(a, "swish")
        y = _conv3x3(y, b3cv_w[...], b3cv_b[...], mask_l, mask_r)       # (16, 256)
        sk = jnp.dot(b3sk_w[...], a, preferred_element_type=jnp.float32) + b3sk_b[...]
        a = jnp.dot(y + sk, sel, preferred_element_type=jnp.float32)    # (16, 64)

        # AdaptiveAvgPool2d(1)
        pooled.append(jnp.mean(a, axis=1, keepdims=True))               # (16, 1)

    # Batched head: one (32, 16) @ (16, N) matmul for every sample.
    pool_mat = jnp.concatenate(pooled, axis=1)                          # (16, N)
    o_ref[...] = (jnp.dot(hd_w[...], pool_mat, preferred_element_type=jnp.float32)
                  + hd_b[...])


# -------------------------------- wrapper ------------------------------------
@jax.jit
def modelparse_forward(params, x_nchw):
    n, cin, hh, ww = x_nchw.shape
    assert (hh, ww) == (IMG_H, IMG_W) and cin <= C0
    x = x_nchw.astype(jnp.float32).reshape(n, cin, hh * ww)
    x = jnp.pad(x, ((0, 0), (0, C0 - cin), (0, 0)))        # zero-pad channels 3 -> 8

    # One-hot (HW, HW_S) matrix selecting the stride-2 positions (2*ho, 2*wo).
    q = jnp.arange(HW_S)
    src = (q // (IMG_W // 2)) * (2 * IMG_W) + (q % (IMG_W // 2)) * 2
    sel = (jnp.arange(HW)[:, None] == src[None, :]).astype(jnp.float32)

    out = pl.pallas_call(
        modelparse_kernel,
        out_shape=jax.ShapeDtypeStruct((NFEAT, n), jnp.float32),
        # Explicit (generous) scoped-VMEM cap; actual working set is < 1 MiB, far
        # under v7x's 64 MiB physical / 32 MiB default scoped budget.
        compiler_params=pltpu.CompilerParams(vmem_limit_bytes=32 * 1024 * 1024),
    )(x, sel, *[params[k] for k in PARAM_ORDER])
    return out.T                                           # (N, NFEAT)


# ----------------------------- parameter setup -------------------------------
def _uniform(key, shape, bound):
    return jax.random.uniform(key, shape, jnp.float32, -bound, bound)


def build_params(key):
    ks = iter(jax.random.split(key, 20))
    p = {}
    # stem Conv2d(3, 8, 3, pad=1): weight layout (Cout, 9, Cin_pad) -> (Cout, 72),
    # channels 3..7 are zero (they multiply the zero-padded input channels).
    b = 1.0 / (3 * 9) ** 0.5
    w = _uniform(next(ks), (C0, 9, 3), b)
    p["stem_w"] = jnp.pad(w, ((0, 0), (0, 0), (0, C0 - 3))).reshape(C0, 9 * C0)
    p["stem_b"] = _uniform(next(ks), (C0, 1), b)
    # CustomBlock 1: two dense 3x3 convs (8 -> 8) + SE(8, mid=8)
    b = 1.0 / (C0 * 9) ** 0.5
    p["b1c1_w"] = _uniform(next(ks), (C0, 9 * C0), b)
    p["b1c1_b"] = _uniform(next(ks), (C0, 1), b)
    p["b1c2_w"] = _uniform(next(ks), (C0, 9 * C0), b)
    p["b1c2_b"] = _uniform(next(ks), (C0, 1), b)
    b = 1.0 / C0 ** 0.5
    p["se_w1"] = _uniform(next(ks), (C0, SE_MID), b)       # = fc1.weight.T  (Cin, mid)
    p["se_b1"] = _uniform(next(ks), (1, SE_MID), b)
    b = 1.0 / SE_MID ** 0.5
    p["se_w2"] = _uniform(next(ks), (C0, SE_MID), b)       # = fc2.weight    (Cout, mid)
    p["se_b2"] = _uniform(next(ks), (C0, 1), b)
    # CustomBlock 2: depthwise 3x3 (groups=8) + dense 3x3
    b = 1.0 / 9 ** 0.5
    p["b2dw_w"] = _uniform(next(ks), (C0, 9), b)
    p["b2dw_b"] = _uniform(next(ks), (C0, 1), b)
    b = 1.0 / (C0 * 9) ** 0.5
    p["b2c2_w"] = _uniform(next(ks), (C0, 9 * C0), b)
    p["b2c2_b"] = _uniform(next(ks), (C0, 1), b)
    # strideBlock: 3x3 stride-2 conv 8 -> 16 and 1x1 stride-2 skip conv
    b = 1.0 / (C0 * 9) ** 0.5
    p["b3cv_w"] = _uniform(next(ks), (C1, 9 * C0), b)
    p["b3cv_b"] = _uniform(next(ks), (C1, 1), b)
    b = 1.0 / C0 ** 0.5
    p["b3sk_w"] = _uniform(next(ks), (C1, C0), b)
    p["b3sk_b"] = _uniform(next(ks), (C1, 1), b)
    # head Linear(16 -> 32)
    b = 1.0 / C1 ** 0.5
    p["hd_w"] = _uniform(next(ks), (NFEAT, C1), b)
    p["hd_b"] = _uniform(next(ks), (NFEAT, 1), b)
    return p


# ---------------------- pure-JAX reference (for checking) --------------------
def _conv_ref(x, w_flat, b, cin, ksize, stride, padding):
    cout = w_flat.shape[0]
    w = (w_flat.reshape(cout, ksize * ksize, cin)
               .transpose(0, 2, 1).reshape(cout, cin, ksize, ksize))
    y = lax.conv_general_dilated(
        x, w, (stride, stride), [(padding, padding)] * 2,
        dimension_numbers=("NCHW", "OIHW", "NCHW"),
        precision=lax.Precision.HIGHEST)
    return y + b.reshape(1, cout, 1, 1)


def _dwconv_ref(x, w, b):
    c = w.shape[0]
    y = lax.conv_general_dilated(
        x, w.reshape(c, 1, 3, 3), (1, 1), [(1, 1), (1, 1)],
        dimension_numbers=("NCHW", "OIHW", "NCHW"),
        feature_group_count=c, precision=lax.Precision.HIGHEST)
    return y + b.reshape(1, c, 1, 1)


def _instnorm_act_ref(x, act, eps=1e-5):
    mean = x.mean((2, 3), keepdims=True)
    var = ((x - mean) ** 2).mean((2, 3), keepdims=True)
    return _act((x - mean) * lax.rsqrt(var + eps), act)


@jax.jit
def reference_forward(p, x_nchw):
    n, cin = x_nchw.shape[:2]
    x = jnp.pad(x_nchw.astype(jnp.float32), ((0, 0), (0, C0 - cin), (0, 0), (0, 0)))
    a = _conv_ref(x, p["stem_w"], p["stem_b"], C0, 3, 1, 1)
    # CustomBlock 1 (relu, dense+dense, SE, residual)
    y = _instnorm_act_ref(a, "relu")
    y = _conv_ref(y, p["b1c1_w"], p["b1c1_b"], C0, 3, 1, 1)
    y = _instnorm_act_ref(y, "relu")
    y = _conv_ref(y, p["b1c2_w"], p["b1c2_b"], C0, 3, 1, 1)
    sq = y.mean((2, 3))                                                  # (N, 8)
    h = jnp.maximum(jnp.dot(sq, p["se_w1"], precision=lax.Precision.HIGHEST)
                    + p["se_b1"], 0.0)
    s = _hardsigmoid(jnp.dot(h, p["se_w2"].T, precision=lax.Precision.HIGHEST)
                     + p["se_b2"].T)
    a = a + y * s[:, :, None, None]
    # CustomBlock 2 (swish, depthwise+dense, residual)
    y = _instnorm_act_ref(a, "swish")
    y = _dwconv_ref(y, p["b2dw_w"], p["b2dw_b"])
    y = _instnorm_act_ref(y, "swish")
    y = _conv_ref(y, p["b2c2_w"], p["b2c2_b"], C0, 3, 1, 1)
    a = a + y
    # strideBlock
    y = _instnorm_act_ref(a, "swish")
    y = _conv_ref(y, p["b3cv_w"], p["b3cv_b"], C0, 3, 2, 1)
    sk = _conv_ref(a, p["b3sk_w"], p["b3sk_b"], C0, 1, 2, 0)
    a = y + sk
    pooled = a.mean((2, 3))                                              # (N, 16)
    return jnp.dot(pooled, p["hd_w"].T, precision=lax.Precision.HIGHEST) + p["hd_b"].T


# ---------------------------------- main --------------------------------------
if __name__ == "__main__":
    key = jax.random.PRNGKey(0)
    pkey, xkey = jax.random.split(key)
    params = build_params(pkey)
    x = jax.random.normal(xkey, (2, 3, IMG_H, IMG_W), jnp.float32)   # NCHW, like PyTorch

    out = jax.block_until_ready(modelparse_forward(params, x))
    assert out.shape == (2, NFEAT), out.shape
    assert bool(jnp.all(jnp.isfinite(out)))

    # Cross-check the fused Pallas kernel against a pure-JAX/XLA reference.
    ref = jax.block_until_ready(reference_forward(params, x))
    err = float(jnp.max(jnp.abs(out - ref)))
    assert err < 1e-2, f"kernel/reference mismatch: max abs err = {err}"

    print("KERNEL_OK")
</pallas_src>

<mosaic_0001>
module attributes {stable_mosaic.version = 11 : i64} {
  func.func @modelparse_kernel(%arg0: memref<2x8x256xf32, #tpu.memory_space<vmem>>, %arg1: memref<256x64xf32, #tpu.memory_space<vmem>>, %arg2: memref<8x72xf32, #tpu.memory_space<vmem>>, %arg3: memref<8x1xf32, #tpu.memory_space<vmem>>, %arg4: memref<8x72xf32, #tpu.memory_space<vmem>>, %arg5: memref<8x1xf32, #tpu.memory_space<vmem>>, %arg6: memref<8x72xf32, #tpu.memory_space<vmem>>, %arg7: memref<8x1xf32, #tpu.memory_space<vmem>>, %arg8: memref<8x8xf32, #tpu.memory_space<vmem>>, %arg9: memref<1x8xf32, #tpu.memory_space<vmem>>, %arg10: memref<8x8xf32, #tpu.memory_space<vmem>>, %arg11: memref<8x1xf32, #tpu.memory_space<vmem>>, %arg12: memref<8x9xf32, #tpu.memory_space<vmem>>, %arg13: memref<8x1xf32, #tpu.memory_space<vmem>>, %arg14: memref<8x72xf32, #tpu.memory_space<vmem>>, %arg15: memref<8x1xf32, #tpu.memory_space<vmem>>, %arg16: memref<16x72xf32, #tpu.memory_space<vmem>>, %arg17: memref<16x1xf32, #tpu.memory_space<vmem>>, %arg18: memref<16x8xf32, #tpu.memory_space<vmem>>, %arg19: memref<16x1xf32, #tpu.memory_space<vmem>>, %arg20: memref<32x16xf32, #tpu.memory_space<vmem>>, %arg21: memref<32x1xf32, #tpu.memory_space<vmem>>, %arg22: memref<32x2xf32, #tpu.memory_space<vmem>>) attributes {dimension_semantics = [], scalar_prefetch = 0 : i64, scratch_operands = 0 : i64, tpu.core_type = #tpu.core_type<tc>} {
    %0 = tpu.iota {dimensions = array<i32: 1>} : vector<1x256xi32>
    %c16_i32 = arith.constant 16 : i32
    %c0_i32 = arith.constant 0 : i32
    %1 = arith.cmpi eq, %c16_i32, %c0_i32 : i32
    %c1_i32 = arith.constant 1 : i32
    %2 = arith.select %1, %c1_i32, %c16_i32 : i32
    %3 = vector.broadcast %2 : i32 to vector<1x256xi32>
    %4 = arith.remsi %0, %3 : vector<1x256xi32>
    %c0_i32_0 = arith.constant 0 : i32
    %5 = vector.broadcast %c0_i32_0 : i32 to vector<1x256xi32>
    %6 = arith.cmpi ne, %4, %5 : vector<1x256xi32>
    %c0_i32_1 = arith.constant 0 : i32
    %7 = vector.broadcast %c0_i32_1 : i32 to vector<1x256xi32>
    %8 = arith.cmpi slt, %4, %7 : vector<1x256xi32>
    %c0_i32_2 = arith.constant 0 : i32
    %9 = arith.cmpi slt, %2, %c0_i32_2 : i32
    %10 = vector.broadcast %9 : i1 to vector<1x256xi1>
    %11 = vector.broadcast %10 : vector<1x256xi1> to vector<1x256xi1>
    %12 = arith.xori %8, %11 : vector<1x256xi1>
    %13 = arith.andi %12, %6 : vector<1x256xi1>
    %14 = vector.broadcast %2 : i32 to vector<1x256xi32>
    %15 = arith.addi %4, %14 : vector<1x256xi32>
    %16 = arith.select %13, %15, %4 : vector<1x256xi1>, vector<1x256xi32>
    %c1_i32_3 = arith.constant 1 : i32
    %17 = vector.broadcast %c1_i32_3 : i32 to vector<1x256xi32>
    %18 = arith.cmpi sge, %16, %17 : vector<1x256xi32>
    %c14_i32 = arith.constant 14 : i32
    %19 = vector.broadcast %c14_i32 : i32 to vector<1x256xi32>
    %20 = arith.cmpi sle, %16, %19 : vector<1x256xi32>
    %c0 = arith.constant 0 : index
    %c0_4 = arith.constant 0 : index
    %21 = vector.load %arg1[%c0, %c0_4] : memref<256x64xf32, #tpu.memory_space<vmem>>, vector<256x64xf32>
    %c0_5 = arith.constant 0 : index
    %c0_6 = arith.constant 0 : index
    %c0_7 = arith.constant 0 : index
    %22 = vector.load %arg0[%c0_5, %c0_6, %c0_7] : memref<2x8x256xf32, #tpu.memory_space<vmem>>, vector<1x8x256xf32>
    %23 = vector.shape_cast %22 : vector<1x8x256xf32> to vector<8x256xf32>
    %c0_8 = arith.constant 0 : index
    %c0_9 = arith.constant 0 : index
    %24 = vector.load %arg2[%c0_8, %c0_9] : memref<8x72xf32, #tpu.memory_space<vmem>>, vector<8x72xf32>
    %c0_10 = arith.constant 0 : index
    %c0_11 = arith.constant 0 : index
    %25 = vector.load %arg3[%c0_10, %c0_11] : memref<8x1xf32, #tpu.memory_space<vmem>>, vector<8x1xf32>
    %cst = arith.constant 0.000000e+00 : f32
    %26 = vector.broadcast %cst : f32 to vector<8x17xf32>
    %27 = vector.extract_strided_slice %23 {offsets = [0, 0], sizes = [8, 239], strides = [1, 1]} : vector<8x256xf32> to vector<8x239xf32>
    %28 = tpu.concatenate %26, %27 in 1 : vector<8x17xf32>, vector<8x239xf32> -> vector<8x256xf32>
    %cst_12 = arith.constant 0.000000e+00 : f32
    %29 = vector.shape_cast %18 : vector<1x256xi1> to vector<1x256xi1>
    %30 = vector.broadcast %29 : vector<1x256xi1> to vector<8x256xi1>
    %31 = vector.broadcast %cst_12 : f32 to vector<8x256xf32>
    %32 = arith.select %30, %28, %31 : vector<8x256xi1>, vector<8x256xf32>
    %cst_13 = arith.constant 0.000000e+00 : f32
    %33 = vector.broadcast %cst_13 : f32 to vector<8x16xf32>
    %34 = vector.extract_strided_slice %23 {offsets = [0, 0], sizes = [8, 240], strides = [1, 1]} : vector<8x256xf32> to vector<8x240xf32>
    %35 = tpu.concatenate %33, %34 in 1 : vector<8x16xf32>, vector<8x240xf32> -> vector<8x256xf32>
    %cst_14 = arith.constant 0.000000e+00 : f32
    %36 = vector.broadcast %cst_14 : f32 to vector<8x15xf32>
    %37 = vector.extract_strided_slice %23 {offsets = [0, 0], sizes = [8, 241], strides = [1, 1]} : vector<8x256xf32> to vector<8x241xf32>
    %38 = tpu.concatenate %36, %37 in 1 : vector<8x15xf32>, vector<8x241xf32> -> vector<8x256xf32>
    %cst_15 = arith.constant 0.000000e+00 : f32
    %39 = vector.shape_cast %20 : vector<1x256xi1> to vector<1x256xi1>
    %40 = vector.broadcast %39 : vector<1x256xi1> to vector<8x256xi1>
    %41 = vector.broadcast %cst_15 : f32 to vector<8x256xf32>
    %42 = arith.select %40, %38, %41 : vector<8x256xi1>, vector<8x256xf32>
    %cst_16 = arith.constant 0.000000e+00 : f32
    %43 = vector.broadcast %cst_16 : f32 to vector<8x1xf32>
    %44 = vector.extract_strided_slice %23 {offsets = [0, 0], sizes = [8, 255], strides = [1, 1]} : vector<8x256xf32> to vector<8x255xf32>
    %45 = tpu.concatenate %43, %44 in 1 : vector<8x1xf32>, vector<8x255xf32> -> vector<8x256xf32>
    %cst_17 = arith.constant 0.000000e+00 : f32
    %46 = vector.shape_cast %18 : vector<1x256xi1> to vector<1x256xi1>
    %47 = vector.broadcast %46 : vector<1x256xi1> to vector<8x256xi1>
    %48 = vector.broadcast %cst_17 : f32 to vector<8x256xf32>
    %49 = arith.select %47, %45, %48 : vector<8x256xi1>, vector<8x256xf32>
    %50 = vector.extract_strided_slice %23 {offsets = [0, 1], sizes = [8, 255], strides = [1, 1]} : vector<8x256xf32> to vector<8x255xf32>
    %cst_18 = arith.constant 0.000000e+00 : f32
    %51 = vector.broadcast %cst_18 : f32 to vector<8x1xf32>
    %52 = tpu.concatenate %50, %51 in 1 : vector<8x255xf32>, vector<8x1xf32> -> vector<8x256xf32>
    %cst_19 = arith.constant 0.000000e+00 : f32
    %53 = vector.shape_cast %20 : vector<1x256xi1> to vector<1x256xi1>
    %54 = vector.broadcast %53 : vector<1x256xi1> to vector<8x256xi1>
    %55 = vector.broadcast %cst_19 : f32 to vector<8x256xf32>
    %56 = arith.select %54, %52, %55 : vector<8x256xi1>, vector<8x256xf32>
    %57 = vector.extract_strided_slice %23 {offsets = [0, 15], sizes = [8, 241], strides = [1, 1]} : vector<8x256xf32> to vector<8x241xf32>
    %cst_20 = arith.constant 0.000000e+00 : f32
    %58 = vector.broadcast %cst_20 : f32 to vector<8x15xf32>
    %59 = tpu.concatenate %57, %58 in 1 : vector<8x241xf32>, vector<8x15xf32> -> vector<8x256xf32>
    %cst_21 = arith.constant 0.000000e+00 : f32
    %60 = vector.shape_cast %18 : vector<1x256xi1> to vector<1x256xi1>
    %61 = vector.broadcast %60 : vector<1x256xi1> to vector<8x256xi1>
    %62 = vector.broadcast %cst_21 : f32 to vector<8x256xf32>
    %63 = arith.select %61, %59, %62 : vector<8x256xi1>, vector<8x256xf32>
    %64 = vector.extract_strided_slice %23 {offsets = [0, 16], sizes = [8, 240], strides = [1, 1]} : vector<8x256xf32> to vector<8x240xf32>
    %cst_22 = arith.constant 0.000000e+00 : f32
    %65 = vector.broadcast %cst_22 : f32 to vector<8x16xf32>
    %66 = tpu.concatenate %64, %65 in 1 : vector<8x240xf32>, vector<8x16xf32> -> vector<8x256xf32>
    %67 = vector.extract_strided_slice %23 {offsets = [0, 17], sizes = [8, 239], strides = [1, 1]} : vector<8x256xf32> to vector<8x239xf32>
    %cst_23 = arith.constant 0.000000e+00 : f32
    %68 = vector.broadcast %cst_23 : f32 to vector<8x17xf32>
    %69 = tpu.concatenate %67, %68 in 1 : vector<8x239xf32>, vector<8x17xf32> -> vector<8x256xf32>
    %cst_24 = arith.constant 0.000000e+00 : f32
    %70 = vector.shape_cast %20 : vector<1x256xi1> to vector<1x256xi1>
    %71 = vector.broadcast %70 : vector<1x256xi1> to vector<8x256xi1>
    %72 = vector.broadcast %cst_24 : f32 to vector<8x256xf32>
    %73 = arith.select %71, %69, %72 : vector<8x256xi1>, vector<8x256xf32>
    %74 = tpu.concatenate %32, %35, %42, %49, %23, %56, %63, %66, %73 in 0 : vector<8x256xf32>, vector<8x256xf32>, vector<8x256xf32>, vector<8x256xf32>, vector<8x256xf32>, vector<8x256xf32>, vector<8x256xf32>, vector<8x256xf32>, vector<8x256xf32> -> vector<72x256xf32>
    %cst_25 = arith.constant dense<0.000000e+00> : vector<8x256xf32>
    %75 = tpu.matmul %24, %74, %cst_25 {dimension_numbers = #tpu.dot_dimension_numbers<[1], [0], [0], [1], [0, 0, 1, 1], [], []>} : vector<8x72xf32>, vector<72x256xf32>, vector<8x256xf32> -> vector<8x256xf32>
    %76 = vector.broadcast %25 : vector<8x1xf32> to vector<8x256xf32>
    %77 = arith.addf %75, %76 : vector<8x256xf32>
    %cst_26 = arith.constant dense<0.000000e+00> : vector<8xf32>
    %78 = vector.multi_reduction <add>, %77, %cst_26 [1] : vector<8x256xf32> to vector<8xf32>
    %79 = vector.shape_cast %78 : vector<8xf32> to vector<8x1xf32>
    %cst_27 = arith.constant 2.560000e+02 : f32
    %80 = vector.broadcast %cst_27 : f32 to vector<8x1xf32>
    %81 = arith.divf %79, %80 : vector<8x1xf32>
    %82 = vector.broadcast %81 : vector<8x1xf32> to vector<8x256xf32>
    %83 = arith.subf %77, %82 : vector<8x256xf32>
    %84 = arith.mulf %83, %83 : vector<8x256xf32>
    %cst_28 = arith.constant dense<0.000000e+00> : vector<8xf32>
    %85 = vector.multi_reduction <add>, %84, %cst_28 [1] : vector<8x256xf32> to vector<8xf32>
    %86 = vector.shape_cast %85 : vector<8xf32> to vector<8x1xf32>
    %cst_29 = arith.constant 2.560000e+02 : f32
    %87 = vector.broadcast %cst_29 : f32 to vector<8x1xf32>
    %88 = arith.divf %86, %87 : vector<8x1xf32>
    %89 = vector.broadcast %81 : vector<8x1xf32> to vector<8x256xf32>
    %90 = arith.subf %77, %89 : vector<8x256xf32>
    %cst_30 = arith.constant 9.99999974E-6 : f32
    %91 = vector.broadcast %cst_30 : f32 to vector<8x1xf32>
    %92 = arith.addf %88, %91 : vector<8x1xf32>
    %93 = math.rsqrt %92 : vector<8x1xf32>
    %94 = vector.broadcast %93 : vector<8x1xf32> to vector<8x256xf32>
    %95 = arith.mulf %90, %94 : vector<8x256xf32>
    %cst_31 = arith.constant 0.000000e+00 : f32
    %96 = vector.broadcast %cst_31 : f32 to vector<8x256xf32>
    %97 = arith.maximumf %95, %96 : vector<8x256xf32>
    %c0_32 = arith.constant 0 : index
    %c0_33 = arith.constant 0 : index
    %98 = vector.load %arg4[%c0_32, %c0_33] : memref<8x72xf32, #tpu.memory_space<vmem>>, vector<8x72xf32>
    %c0_34 = arith.constant 0 : index
    %c0_35 = arith.constant 0 : index
    %99 = vector.load %arg5[%c0_34, %c0_35] : memref<8x1xf32, #tpu.memory_space<vmem>>, vector<8x1xf32>
    %cst_36 = arith.constant 0.000000e+00 : f32
    %100 = vector.broadcast %cst_36 : f32 to vector<8x17xf32>
    %101 = vector.extract_strided_slice %97 {offsets = [0, 0], sizes = [8, 239], strides = [1, 1]} : vector<8x256xf32> to vector<8x239xf32>
    %102 = tpu.concatenate %100, %101 in 1 : vector<8x17xf32>, vector<8x239xf32> -> vector<8x256xf32>
    %cst_37 = arith.constant 0.000000e+00 : f32
    %103 = vector.shape_cast %18 : vector<1x256xi1> to vector<1x256xi1>
    %104 = vector.broadcast %103 : vector<1x256xi1> to vector<8x256xi1>
    %105 = vector.broadcast %cst_37 : f32 to vector<8x256xf32>
    %106 = arith.select %104, %102, %105 : vector<8x256xi1>, vector<8x256xf32>
    %cst_38 = arith.constant 0.000000e+00 : f32
    %107 = vector.broadcast %cst_38 : f32 to vector<8x16xf32>
    %108 = vector.extract_strided_slice %97 {offsets = [0, 0], sizes = [8, 240], strides = [1, 1]} : vector<8x256xf32> to vector<8x240xf32>
    %109 = tpu.concatenate %107, %108 in 1 : vector<8x16xf32>, vector<8x240xf32> -> vector<8x256xf32>
    %cst_39 = arith.constant 0.000000e+00 : f32
    %110 = vector.broadcast %cst_39 : f32 to vector<8x15xf32>
    %111 = vector.extract_strided_slice %97 {offsets = [0, 0], sizes = [8, 241], strides = [1, 1]} : vector<8x256xf32> to vector<8x241xf32>
    %112 = tpu.concatenate %110, %111 in 1 : vector<8x15xf32>, vector<8x241xf32> -> vector<8x256xf32>
    %cst_40 = arith.constant 0.000000e+00 : f32
    %113 = vector.shape_cast %20 : vector<1x256xi1> to vector<1x256xi1>
    %114 = vector.broadcast %113 : vector<1x256xi1> to vector<8x256xi1>
    %115 = vector.broadcast %cst_40 : f32 to vector<8x256xf32>
    %116 = arith.select %114, %112, %115 : vector<8x256xi1>, vector<8x256xf32>
    %cst_41 = arith.constant 0.000000e+00 : f32
    %117 = vector.broadcast %cst_41 : f32 to vector<8x1xf32>
    %118 = vector.extract_strided_slice %97 {offsets = [0, 0], sizes = [8, 255], strides = [1, 1]} : vector<8x256xf32> to vector<8x255xf32>
    %119 = tpu.concatenate %117, %118 in 1 : vector<8x1xf32>, vector<8x255xf32> -> vector<8x256xf32>
    %cst_42 = arith.constant 0.000000e+00 : f32
    %120 = vector.shape_cast %18 : vector<1x256xi1> to vector<1x256xi1>
    %121 = vector.broadcast %120 : vector<1x256xi1> to vector<8x256xi1>
    %122 = vector.broadcast %cst_42 : f32 to vector<8x256xf32>
    %123 = arith.select %121, %119, %122 : vector<8x256xi1>, vector<8x256xf32>
    %124 = vector.extract_strided_slice %97 {offsets = [0, 1], sizes = [8, 255], strides = [1, 1]} : vector<8x256xf32> to vector<8x255xf32>
    %cst_43 = arith.constant 0.000000e+00 : f32
    %125 = vector.broadcast %cst_43 : f32 to vector<8x1xf32>
    %126 = tpu.concatenate %124, %125 in 1 : vector<8x255xf32>, vector<8x1xf32> -> vector<8x256xf32>
    %cst_44 = arith.constant 0.000000e+00 : f32
    %127 = vector.shape_cast %20 : vector<1x256xi1> to vector<1x256xi1>
    %128 = vector.broadcast %127 : vector<1x256xi1> to vector<8x256xi1>
    %129 = vector.broadcast %cst_44 : f32 to vector<8x256xf32>
    %130 = arith.select %128, %126, %129 : vector<8x256xi1>, vector<8x256xf32>
    %131 = vector.extract_strided_slice %97 {offsets = [0, 15], sizes = [8, 241], strides = [1, 1]} : vector<8x256xf32> to vector<8x241xf32>
    %cst_45 = arith.constant 0.000000e+00 : f32
    %132 = vector.broadcast %cst_45 : f32 to vector<8x15xf32>
    %133 = tpu.concatenate %131, %132 in 1 : vector<8x241xf32>, vector<8x15xf32> -> vector<8x256xf32>
    %cst_46 = arith.constant 0.000000e+00 : f32
    %134 = vector.shape_cast %18 : vector<1x256xi1> to vector<1x256xi1>
    %135 = vector.broadcast %134 : vector<1x256xi1> to vector<8x256xi1>
    %136 = vector.broadcast %cst_46 : f32 to vector<8x256xf32>
    %137 = arith.select %135, %133, %136 : vector<8x256xi1>, vector<8x256xf32>
    %138 = vector.extract_strided_slice %97 {offsets = [0, 16], sizes = [8, 240], strides = [1, 1]} : vector<8x256xf32> to vector<8x240xf32>
    %cst_47 = arith.constant 0.000000e+00 : f32
    %139 = vector.broadcast %cst_47 : f32 to vector<8x16xf32>
    %140 = tpu.concatenate %138, %139 in 1 : vector<8x240xf32>, vector<8x16xf32> -> vector<8x256xf32>
    %141 = vector.extract_strided_slice %97 {offsets = [0, 17], sizes = [8, 239], strides = [1, 1]} : vector<8x256xf32> to vector<8x239xf32>
    %cst_48 = arith.constant 0.000000e+00 : f32
    %142 = vector.broadcast %cst_48 : f32 to vector<8x17xf32>
    %143 = tpu.concatenate %141, %142 in 1 : vector<8x239xf32>, vector<8x17xf32> -> vector<8x256xf32>
    %cst_49 = arith.constant 0.000000e+00 : f32
    %144 = vector.shape_cast %20 : vector<1x256xi1> to vector<1x256xi1>
    %145 = vector.broadcast %144 : vector<1x256xi1> to vector<8x256xi1>
    %146 = vector.broadcast %cst_49 : f32 to vector<8x256xf32>
    %147 = arith.select %145, %143, %146 : vector<8x256xi1>, vector<8x256xf32>
    %148 = tpu.concatenate %106, %109, %116, %123, %97, %130, %137, %140, %147 in 0 : vector<8x256xf32>, vector<8x256xf32>, vector<8x256xf32>, vector<8x256xf32>, vector<8x256xf32>, vector<8x256xf32>, vector<8x256xf32>, vector<8x256xf32>, vector<8x256xf32> -> vector<72x256xf32>
    %cst_50 = arith.constant dense<0.000000e+00> : vector<8x256xf32>
    %149 = tpu.matmul %98, %148, %cst_50 {dimension_numbers = #tpu.dot_dimension_numbers<[1], [0], [0], [1], [0, 0, 1, 1], [], []>} : vector<8x72xf32>, vector<72x256xf32>, vector<8x256xf32> -> vector<8x256xf32>
    %150 = vector.broadcast %99 : vector<8x1xf32> to vector<8x256xf32>
    %151 = arith.addf %149, %150 : vector<8x256xf32>
    %cst_51 = arith.constant dense<0.000000e+00> : vector<8xf32>
    %152 = vector.multi_reduction <add>, %151, %cst_51 [1] : vector<8x256xf32> to vector<8xf32>
    %153 = vector.shape_cast %152 : vector<8xf32> to vector<8x1xf32>
    %cst_52 = arith.constant 2.560000e+02 : f32
    %154 = vector.broadcast %cst_52 : f32 to vector<8x1xf32>
    %155 = arith.divf %153, %154 : vector<8x1xf32>
    %156 = vector.broadcast %155 : vector<8x1xf32> to vector<8x256xf32>
    %157 = arith.subf %151, %156 : vector<8x256xf32>
    %158 = arith.mulf %157, %157 : vector<8x256xf32>
    %cst_53 = arith.constant dense<0.000000e+00> : vector<8xf32>
    %159 = vector.multi_reduction <add>, %158, %cst_53 [1] : vector<8x256xf32> to vector<8xf32>
    %160 = vector.shape_cast %159 : vector<8xf32> to vector<8x1xf32>
    %cst_54 = arith.constant 2.560000e+02 : f32
    %161 = vector.broadcast %cst_54 : f32 to vector<8x1xf32>
    %162 = arith.divf %160, %161 : vector<8x1xf32>
    %163 = vector.broadcast %155 : vector<8x1xf32> to vector<8x256xf32>
    %164 = arith.subf %151, %163 : vector<8x256xf32>
    %cst_55 = arith.constant 9.99999974E-6 : f32
    %165 = vector.broadcast %cst_55 : f32 to vector<8x1xf32>
    %166 = arith.addf %162, %165 : vector<8x1xf32>
    %167 = math.rsqrt %166 : vector<8x1xf32>
    %168 = vector.broadcast %167 : vector<8x1xf32> to vector<8x256xf32>
    %169 = arith.mulf %164, %168 : vector<8x256xf32>
    %cst_56 = arith.constant 0.000000e+00 : f32
    %170 = vector.broadcast %cst_56 : f32 to vector<8x256xf32>
    %171 = arith.maximumf %169, %170 : vector<8x256xf32>
    %c0_57 = arith.constant 0 : index
    %c0_58 = arith.constant 0 : index
    %172 = vector.load %arg6[%c0_57, %c0_58] : memref<8x72xf32, #tpu.memory_space<vmem>>, vector<8x72xf32>
    %c0_59 = arith.constant 0 : index
    %c0_60 = arith.constant 0 : index
    %173 = vector.load %arg7[%c0_59, %c0_60] : memref<8x1xf32, #tpu.memory_space<vmem>>, vector<8x1xf32>
    %cst_61 = arith.constant 0.000000e+00 : f32
    %174 = vector.broadcast %cst_61 : f32 to vector<8x17xf32>
    %175 = vector.extract_strided_slice %171 {offsets = [0, 0], sizes = [8, 239], strides = [1, 1]} : vector<8x256xf32> to vector<8x239xf32>
    %176 = tpu.concatenate %174, %175 in 1 : vector<8x17xf32>, vector<8x239xf32> -> vector<8x256xf32>
    %cst_62 = arith.constant 0.000000e+00 : f32
    %177 = vector.shape_cast %18 : vector<1x256xi1> to vector<1x256xi1>
    %178 = vector.broadcast %177 : vector<1x256xi1> to vector<8x256xi1>
    %179 = vector.broadcast %cst_62 : f32 to vector<8x256xf32>
    %180 = arith.select %178, %176, %179 : vector<8x256xi1>, vector<8x256xf32>
    %cst_63 = arith.constant 0.000000e+00 : f32
    %181 = vector.broadcast %cst_63 : f32 to vector<8x16xf32>
    %182 = vector.extract_strided_slice %171 {offsets = [0, 0], sizes = [8, 240], strides = [1, 1]} : vector<8x256xf32> to vector<8x240xf32>
    %183 = tpu.concatenate %181, %182 in 1 : vector<8x16xf32>, vector<8x240xf32> -> vector<8x256xf32>
    %cst_64 = arith.constant 0.000000e+00 : f32
    %184 = vector.broadcast %cst_64 : f32 to vector<8x15xf32>
    %185 = vector.extract_strided_slice %171 {offsets = [0, 0], sizes = [8, 241], strides = [1, 1]} : vector<8x256xf32> to vector<8x241xf32>
    %186 = tpu.concatenate %184, %185 in 1 : vector<8x15xf32>, vector<8x241xf32> -> vector<8x256xf32>
    %cst_65 = arith.constant 0.000000e+00 : f32
    %187 = vector.shape_cast %20 : vector<1x256xi1> to vector<1x256xi1>
    %188 = vector.broadcast %187 : vector<1x256xi1> to vector<8x256xi1>
    %189 = vector.broadcast %cst_65 : f32 to vector<8x256xf32>
    %190 = arith.select %188, %186, %189 : vector<8x256xi1>, vector<8x256xf32>
    %cst_66 = arith.constant 0.000000e+00 : f32
    %191 = vector.broadcast %cst_66 : f32 to vector<8x1xf32>
    %192 = vector.extract_strided_slice %171 {offsets = [0, 0], sizes = [8, 255], strides = [1, 1]} : vector<8x256xf32> to vector<8x255xf32>
    %193 = tpu.concatenate %191, %192 in 1 : vector<8x1xf32>, vector<8x255xf32> -> vector<8x256xf32>
    %cst_67 = arith.constant 0.000000e+00 : f32
    %194 = vector.shape_cast %18 : vector<1x256xi1> to vector<1x256xi1>
    %195 = vector.broadcast %194 : vector<1x256xi1> to vector<8x256xi1>
    %196 = vector.broadcast %cst_67 : f32 to vector<8x256xf32>
    %197 = arith.select %195, %193, %196 : vector<8x256xi1>, vector<8x256xf32>
    %198 = vector.extract_strided_slice %171 {offsets = [0, 1], sizes = [8, 255], strides = [1, 1]} : vector<8x256xf32> to vector<8x255xf32>
    %cst_68 = arith.constant 0.000000e+00 : f32
    %199 = vector.broadcast %cst_68 : f32 to vector<8x1xf32>
    %200 = tpu.concatenate %198, %199 in 1 : vector<8x255xf32>, vector<8x1xf32> -> vector<8x256xf32>
    %cst_69 = arith.constant 0.000000e+00 : f32
    %201 = vector.shape_cast %20 : vector<1x256xi1> to vector<1x256xi1>
    %202 = vector.broadcast %201 : vector<1x256xi1> to vector<8x256xi1>
    %203 = vector.broadcast %cst_69 : f32 to vector<8x256xf32>
    %204 = arith.select %202, %200, %203 : vector<8x256xi1>, vector<8x256xf32>
    %205 = vector.extract_strided_slice %171 {offsets = [0, 15], sizes = [8, 241], strides = [1, 1]} : vector<8x256xf32> to vector<8x241xf32>
    %cst_70 = arith.constant 0.000000e+00 : f32
    %206 = vector.broadcast %cst_70 : f32 to vector<8x15xf32>
    %207 = tpu.concatenate %205, %206 in 1 : vector<8x241xf32>, vector<8x15xf32> -> vector<8x256xf32>
    %cst_71 = arith.constant 0.000000e+00 : f32
    %208 = vector.shape_cast %18 : vector<1x256xi1> to vector<1x256xi1>
    %209 = vector.broadcast %208 : vector<1x256xi1> to vector<8x256xi1>
    %210 = vector.broadcast %cst_71 : f32 to vector<8x256xf32>
    %211 = arith.select %209, %207, %210 : vector<8x256xi1>, vector<8x256xf32>
    %212 = vector.extract_strided_slice %171 {offsets = [0, 16], sizes = [8, 240], strides = [1, 1]} : vector<8x256xf32> to vector<8x240xf32>
    %cst_72 = arith.constant 0.000000e+00 : f32
    %213 = vector.broadcast %cst_72 : f32 to vector<8x16xf32>
    %214 = tpu.concatenate %212, %213 in 1 : vector<8x240xf32>, vector<8x16xf32> -> vector<8x256xf32>
    %215 = vector.extract_strided_slice %171 {offsets = [0, 17], sizes = [8, 239], strides = [1, 1]} : vector<8x256xf32> to vector<8x239xf32>
    %cst_73 = arith.constant 0.000000e+00 : f32
    %216 = vector.broadcast %cst_73 : f32 to vector<8x17xf32>
    %217 = tpu.concatenate %215, %216 in 1 : vector<8x239xf32>, vector<8x17xf32> -> vector<8x256xf32>
    %cst_74 = arith.constant 0.000000e+00 : f32
    %218 = vector.shape_cast %20 : vector<1x256xi1> to vector<1x256xi1>
    %219 = vector.broadcast %218 : vector<1x256xi1> to vector<8x256xi1>
    %220 = vector.broadcast %cst_74 : f32 to vector<8x256xf32>
    %221 = arith.select %219, %217, %220 : vector<8x256xi1>, vector<8x256xf32>
    %222 = tpu.concatenate %180, %183, %190, %197, %171, %204, %211, %214, %221 in 0 : vector<8x256xf32>, vector<8x256xf32>, vector<8x256xf32>, vector<8x256xf32>, vector<8x256xf32>, vector<8x256xf32>, vector<8x256xf32>, vector<8x256xf32>, vector<8x256xf32> -> vector<72x256xf32>
    %cst_75 = arith.constant dense<0.000000e+00> : vector<8x256xf32>
    %223 = tpu.matmul %172, %222, %cst_75 {dimension_numbers = #tpu.dot_dimension_numbers<[1], [0], [0], [1], [0, 0, 1, 1], [], []>} : vector<8x72xf32>, vector<72x256xf32>, vector<8x256xf32> -> vector<8x256xf32>
    %224 = vector.broadcast %173 : vector<8x1xf32> to vector<8x256xf32>
    %225 = arith.addf %223, %224 : vector<8x256xf32>
    %cst_76 = arith.constant dense<0.000000e+00> : vector<8xf32>
    %226 = vector.multi_reduction <add>, %225, %cst_76 [1] : vector<8x256xf32> to vector<8xf32>
    %227 = vector.shape_cast %226 : vector<8xf32> to vector<8x1xf32>
    %cst_77 = arith.constant 2.560000e+02 : f32
    %228 = vector.broadcast %cst_77 : f32 to vector<8x1xf32>
    %229 = arith.divf %227, %228 : vector<8x1xf32>
    %c0_78 = arith.constant 0 : index
    %c0_79 = arith.constant 0 : index
    %230 = vector.load %arg8[%c0_78, %c0_79] : memref<8x8xf32, #tpu.memory_space<vmem>>, vector<8x8xf32>
    %231 = vector.broadcast %229 : vector<8x1xf32> to vector<8x8xf32>
    %232 = arith.mulf %231, %230 : vector<8x8xf32>
    %cst_80 = arith.constant dense<0.000000e+00> : vector<8xf32>
    %233 = vector.multi_reduction <add>, %232, %cst_80 [0] : vector<8x8xf32> to vector<8xf32>
    %234 = vector.shape_cast %233 : vector<8xf32> to vector<1x8xf32>
    %c0_81 = arith.constant 0 : index
    %c0_82 = arith.constant 0 : index
    %235 = vector.load %arg9[%c0_81, %c0_82] : memref<1x8xf32, #tpu.memory_space<vmem>>, vector<1x8xf32>
    %236 = arith.addf %234, %235 : vector<1x8xf32>
    %cst_83 = arith.constant 0.000000e+00 : f32
    %237 = vector.broadcast %cst_83 : f32 to vector<1x8xf32>
    %238 = arith.maximumf %236, %237 : vector<1x8xf32>
    %c0_84 = arith.constant 0 : index
    %c0_85 = arith.constant 0 : index
    %239 = vector.load %arg10[%c0_84, %c0_85] : memref<8x8xf32, #tpu.memory_space<vmem>>, vector<8x8xf32>
    %240 = vector.broadcast %238 : vector<1x8xf32> to vector<8x8xf32>
    %241 = arith.mulf %239, %240 : vector<8x8xf32>
    %cst_86 = arith.constant dense<0.000000e+00> : vector<8xf32>
    %242 = vector.multi_reduction <add>, %241, %cst_86 [1] : vector<8x8xf32> to vector<8xf32>
    %243 = vector.shape_cast %242 : vector<8xf32> to vector<8x1xf32>
    %c0_87 = arith.constant 0 : index
    %c0_88 = arith.constant 0 : index
    %244 = vector.load %arg11[%c0_87, %c0_88] : memref<8x1xf32, #tpu.memory_space<vmem>>, vector<8x1xf32>
    %245 = arith.addf %243, %244 : vector<8x1xf32>
    %cst_89 = arith.constant 3.000000e+00 : f32
    %246 = vector.broadcast %cst_89 : f32 to vector<8x1xf32>
    %247 = arith.addf %245, %246 : vector<8x1xf32>
    %cst_90 = arith.constant 0.000000e+00 : f32
    %cst_91 = arith.constant 6.000000e+00 : f32
    %248 = vector.broadcast %cst_90 : f32 to vector<8x1xf32>
    %249 = arith.maximumf %248, %247 : vector<8x1xf32>
    %250 = vector.broadcast %cst_91 : f32 to vector<8x1xf32>
    %251 = arith.minimumf %250, %249 : vector<8x1xf32>
    %cst_92 = arith.constant 0.166666672 : f32
    %252 = vector.broadcast %cst_92 : f32 to vector<8x1xf32>
    %253 = arith.mulf %251, %252 : vector<8x1xf32>
    %254 = vector.broadcast %253 : vector<8x1xf32> to vector<8x256xf32>
    %255 = arith.mulf %225, %254 : vector<8x256xf32>
    %256 = arith.addf %77, %255 : vector<8x256xf32>
    %cst_93 = arith.constant dense<0.000000e+00> : vector<8xf32>
    %257 = vector.multi_reduction <add>, %256, %cst_93 [1] : vector<8x256xf32> to vector<8xf32>
    %258 = vector.shape_cast %257 : vector<8xf32> to vector<8x1xf32>
    %cst_94 = arith.constant 2.560000e+02 : f32
    %259 = vector.broadcast %cst_94 : f32 to vector<8x1xf32>
    %260 = arith.divf %258, %259 : vector<8x1xf32>
    %261 = vector.broadcast %260 : vector<8x1xf32> to vector<8x256xf32>
    %262 = arith.subf %256, %261 : vector<8x256xf32>
    %263 = arith.mulf %262, %262 : vector<8x256xf32>
    %cst_95 = arith.constant dense<0.000000e+00> : vector<8xf32>
    %264 = vector.multi_reduction <add>, %263, %cst_95 [1] : vector<8x256xf32> to vector<8xf32>
    %265 = vector.shape_cast %264 : vector<8xf32> to vector<8x1xf32>
    %cst_96 = arith.constant 2.560000e+02 : f32
    %266 = vector.broadcast %cst_96 : f32 to vector<8x1xf32>
    %267 = arith.divf %265, %266 : vector<8x1xf32>
    %268 = vector.broadcast %260 : vector<8x1xf32> to vector<8x256xf32>
    %269 = arith.subf %256, %268 : vector<8x256xf32>
    %cst_97 = arith.constant 9.99999974E-6 : f32
    %270 = vector.broadcast %cst_97 : f32 to vector<8x1xf32>
    %271 = arith.addf %267, %270 : vector<8x1xf32>
    %272 = math.rsqrt %271 : vector<8x1xf32>
    %273 = vector.broadcast %272 : vector<8x1xf32> to vector<8x256xf32>
    %274 = arith.mulf %269, %273 : vector<8x256xf32>
    %cst_98 = arith.constant 3.000000e+00 : f32
    %275 = vector.broadcast %cst_98 : f32 to vector<8x256xf32>
    %276 = arith.addf %274, %275 : vector<8x256xf32>
    %cst_99 = arith.constant 0.000000e+00 : f32
    %cst_100 = arith.constant 6.000000e+00 : f32
    %277 = vector.broadcast %cst_99 : f32 to vector<8x256xf32>
    %278 = arith.maximumf %277, %276 : vector<8x256xf32>
    %279 = vector.broadcast %cst_100 : f32 to vector<8x256xf32>
    %280 = arith.minimumf %279, %278 : vector<8x256xf32>
    %281 = arith.mulf %274, %280 : vector<8x256xf32>
    %cst_101 = arith.constant 0.166666672 : f32
    %282 = vector.broadcast %cst_101 : f32 to vector<8x256xf32>
    %283 = arith.mulf %281, %282 : vector<8x256xf32>
    %c0_102 = arith.constant 0 : index
    %c0_103 = arith.constant 0 : index
    %284 = vector.load %arg12[%c0_102, %c0_103] : memref<8x9xf32, #tpu.memory_space<vmem>>, vector<8x9xf32>
    %c0_104 = arith.constant 0 : index
    %c0_105 = arith.constant 0 : index
    %285 = vector.load %arg13[%c0_104, %c0_105] : memref<8x1xf32, #tpu.memory_space<vmem>>, vector<8x1xf32>
    %cst_106 = arith.constant 0.000000e+00 : f32
    %286 = vector.broadcast %cst_106 : f32 to vector<8x17xf32>
    %287 = vector.extract_strided_slice %283 {offsets = [0, 0], sizes = [8, 239], strides = [1, 1]} : vector<8x256xf32> to vector<8x239xf32>
    %288 = tpu.concatenate %286, %287 in 1 : vector<8x17xf32>, vector<8x239xf32> -> vector<8x256xf32>
    %cst_107 = arith.constant 0.000000e+00 : f32
    %289 = vector.shape_cast %18 : vector<1x256xi1> to vector<1x256xi1>
    %290 = vector.broadcast %289 : vector<1x256xi1> to vector<8x256xi1>
    %291 = vector.broadcast %cst_107 : f32 to vector<8x256xf32>
    %292 = arith.select %290, %288, %291 : vector<8x256xi1>, vector<8x256xf32>
    %cst_108 = arith.constant 0.000000e+00 : f32
    %293 = vector.broadcast %cst_108 : f32 to vector<8x16xf32>
    %294 = vector.extract_strided_slice %283 {offsets = [0, 0], sizes = [8, 240], strides = [1, 1]} : vector<8x256xf32> to vector<8x240xf32>
    %295 = tpu.concatenate %293, %294 in 1 : vector<8x16xf32>, vector<8x240xf32> -> vector<8x256xf32>
    %cst_109 = arith.constant 0.000000e+00 : f32
    %296 = vector.broadcast %cst_109 : f32 to vector<8x15xf32>
    %297 = vector.extract_strided_slice %283 {offsets = [0, 0], sizes = [8, 241], strides = [1, 1]} : vector<8x256xf32> to vector<8x241xf32>
    %298 = tpu.concatenate %296, %297 in 1 : vector<8x15xf32>, vector<8x241xf32> -> vector<8x256xf32>
    %cst_110 = arith.constant 0.000000e+00 : f32
    %299 = vector.shape_cast %20 : vector<1x256xi1> to vector<1x256xi1>
    %300 = vector.broadcast %299 : vector<1x256xi1> to vector<8x256xi1>
    %301 = vector.broadcast %cst_110 : f32 to vector<8x256xf32>
    %302 = arith.select %300, %298, %301 : vector<8x256xi1>, vector<8x256xf32>
    %cst_111 = arith.constant 0.000000e+00 : f32
    %303 = vector.broadcast %cst_111 : f32 to vector<8x1xf32>
    %304 = vector.extract_strided_slice %283 {offsets = [0, 0], sizes = [8, 255], strides = [1, 1]} : vector<8x256xf32> to vector<8x255xf32>
    %305 = tpu.concatenate %303, %304 in 1 : vector<8x1xf32>, vector<8x255xf32> -> vector<8x256xf32>
    %cst_112 = arith.constant 0.000000e+00 : f32
    %306 = vector.shape_cast %18 : vector<1x256xi1> to vector<1x256xi1>
    %307 = vector.broadcast %306 : vector<1x256xi1> to vector<8x256xi1>
    %308 = vector.broadcast %cst_112 : f32 to vector<8x256xf32>
    %309 = arith.select %307, %305, %308 : vector<8x256xi1>, vector<8x256xf32>
    %310 = vector.extract_strided_slice %283 {offsets = [0, 1], sizes = [8, 255], strides = [1, 1]} : vector<8x256xf32> to vector<8x255xf32>
    %cst_113 = arith.constant 0.000000e+00 : f32
    %311 = vector.broadcast %cst_113 : f32 to vector<8x1xf32>
    %312 = tpu.concatenate %310, %311 in 1 : vector<8x255xf32>, vector<8x1xf32> -> vector<8x256xf32>
    %cst_114 = arith.constant 0.000000e+00 : f32
    %313 = vector.shape_cast %20 : vector<1x256xi1> to vector<1x256xi1>
    %314 = vector.broadcast %313 : vector<1x256xi1> to vector<8x256xi1>
    %315 = vector.broadcast %cst_114 : f32 to vector<8x256xf32>
    %316 = arith.select %314, %312, %315 : vector<8x256xi1>, vector<8x256xf32>
    %317 = vector.extract_strided_slice %283 {offsets = [0, 15], sizes = [8, 241], strides = [1, 1]} : vector<8x256xf32> to vector<8x241xf32>
    %cst_115 = arith.constant 0.000000e+00 : f32
    %318 = vector.broadcast %cst_115 : f32 to vector<8x15xf32>
    %319 = tpu.concatenate %317, %318 in 1 : vector<8x241xf32>, vector<8x15xf32> -> vector<8x256xf32>
    %cst_116 = arith.constant 0.000000e+00 : f32
    %320 = vector.shape_cast %18 : vector<1x256xi1> to vector<1x256xi1>
    %321 = vector.broadcast %320 : vector<1x256xi1> to vector<8x256xi1>
    %322 = vector.broadcast %cst_116 : f32 to vector<8x256xf32>
    %323 = arith.select %321, %319, %322 : vector<8x256xi1>, vector<8x256xf32>
    %324 = vector.extract_strided_slice %283 {offsets = [0, 16], sizes = [8, 240], strides = [1, 1]} : vector<8x256xf32> to vector<8x240xf32>
    %cst_117 = arith.constant 0.000000e+00 : f32
    %325 = vector.broadcast %cst_117 : f32 to vector<8x16xf32>
    %326 = tpu.concatenate %324, %325 in 1 : vector<8x240xf32>, vector<8x16xf32> -> vector<8x256xf32>
    %327 = vector.extract_strided_slice %283 {offsets = [0, 17], sizes = [8, 239], strides = [1, 1]} : vector<8x256xf32> to vector<8x239xf32>
    %cst_118 = arith.constant 0.000000e+00 : f32
    %328 = vector.broadcast %cst_118 : f32 to vector<8x17xf32>
    %329 = tpu.concatenate %327, %328 in 1 : vector<8x239xf32>, vector<8x17xf32> -> vector<8x256xf32>
    %cst_119 = arith.constant 0.000000e+00 : f32
    %330 = vector.shape_cast %20 : vector<1x256xi1> to vector<1x256xi1>
    %331 = vector.broadcast %330 : vector<1x256xi1> to vector<8x256xi1>
    %332 = vector.broadcast %cst_119 : f32 to vector<8x256xf32>
    %333 = arith.select %331, %329, %332 : vector<8x256xi1>, vector<8x256xf32>
    %334 = vector.extract_strided_slice %284 {offsets = [0, 0], sizes = [8, 1], strides = [1, 1]} : vector<8x9xf32> to vector<8x1xf32>
    %335 = vector.broadcast %334 : vector<8x1xf32> to vector<8x256xf32>
    %336 = arith.mulf %335, %292 : vector<8x256xf32>
    %337 = vector.broadcast %285 : vector<8x1xf32> to vector<8x256xf32>
    %338 = arith.addf %337, %336 : vector<8x256xf32>
    %339 = vector.extract_strided_slice %284 {offsets = [0, 1], sizes = [8, 1], strides = [1, 1]} : vector<8x9xf32> to vector<8x1xf32>
    %340 = vector.broadcast %339 : vector<8x1xf32> to vector<8x256xf32>
    %341 = arith.mulf %340, %295 : vector<8x256xf32>
    %342 = arith.addf %338, %341 : vector<8x256xf32>
    %343 = vector.extract_strided_slice %284 {offsets = [0, 2], sizes = [8, 1], strides = [1, 1]} : vector<8x9xf32> to vector<8x1xf32>
    %344 = vector.broadcast %343 : vector<8x1xf32> to vector<8x256xf32>
    %345 = arith.mulf %344, %302 : vector<8x256xf32>
    %346 = arith.addf %342, %345 : vector<8x256xf32>
    %347 = vector.extract_strided_slice %284 {offsets = [0, 3], sizes = [8, 1], strides = [1, 1]} : vector<8x9xf32> to vector<8x1xf32>
    %348 = vector.broadcast %347 : vector<8x1xf32> to vector<8x256xf32>
    %349 = arith.mulf %348, %309 : vector<8x256xf32>
    %350 = arith.addf %346, %349 : vector<8x256xf32>
    %351 = vector.extract_strided_slice %284 {offsets = [0, 4], sizes = [8, 1], strides = [1, 1]} : vector<8x9xf32> to vector<8x1xf32>
    %352 = vector.broadcast %351 : vector<8x1xf32> to vector<8x256xf32>
    %353 = arith.mulf %352, %283 : vector<8x256xf32>
    %354 = arith.addf %350, %353 : vector<8x256xf32>
    %355 = vector.extract_strided_slice %284 {offsets = [0, 5], sizes = [8, 1], strides = [1, 1]} : vector<8x9xf32> to vector<8x1xf32>
    %356 = vector.broadcast %355 : vector<8x1xf32> to vector<8x256xf32>
    %357 = arith.mulf %356, %316 : vector<8x256xf32>
    %358 = arith.addf %354, %357 : vector<8x256xf32>
    %359 = vector.extract_strided_slice %284 {offsets = [0, 6], sizes = [8, 1], strides = [1, 1]} : vector<8x9xf32> to vector<8x1xf32>
    %360 = vector.broadcast %359 : vector<8x1xf32> to vector<8x256xf32>
    %361 = arith.mulf %360, %323 : vector<8x256xf32>
    %362 = arith.addf %358, %361 : vector<8x256xf32>
    %363 = vector.extract_strided_slice %284 {offsets = [0, 7], sizes = [8, 1], strides = [1, 1]} : vector<8x9xf32> to vector<8x1xf32>
    %364 = vector.broadcast %363 : vector<8x1xf32> to vector<8x256xf32>
    %365 = arith.mulf %364, %326 : vector<8x256xf32>
    %366 = arith.addf %362, %365 : vector<8x256xf32>
    %367 = vector.extract_strided_slice %284 {offsets = [0, 8], sizes = [8, 1], strides = [1, 1]} : vector<8x9xf32> to vector<8x1xf32>
    %368 = vector.broadcast %367 : vector<8x1xf32> to vector<8x256xf32>
    %369 = arith.mulf %368, %333 : vector<8x256xf32>
    %370 = arith.addf %366, %369 : vector<8x256xf32>
    %cst_120 = arith.constant dense<0.000000e+00> : vector<8xf32>
    %371 = vector.multi_reduction <add>, %370, %cst_120 [1] : vector<8x256xf32> to vector<8xf32>
    %372 = vector.shape_cast %371 : vector<8xf32> to vector<8x1xf32>
    %cst_121 = arith.constant 2.560000e+02 : f32
    %373 = vector.broadcast %cst_121 : f32 to vector<8x1xf32>
    %374 = arith.divf %372, %373 : vector<8x1xf32>
    %375 = vector.broadcast %374 : vector<8x1xf32> to vector<8x256xf32>
    %376 = arith.subf %370, %375 : vector<8x256xf32>
    %377 = arith.mulf %376, %376 : vector<8x256xf32>
    %cst_122 = arith.constant dense<0.000000e+00> : vector<8xf32>
    %378 = vector.multi_reduction <add>, %377, %cst_122 [1] : vector<8x256xf32> to vector<8xf32>
    %379 = vector.shape_cast %378 : vector<8xf32> to vector<8x1xf32>
    %cst_123 = arith.constant 2.560000e+02 : f32
    %380 = vector.broadcast %cst_123 : f32 to vector<8x1xf32>
    %381 = arith.divf %379, %380 : vector<8x1xf32>
    %382 = vector.broadcast %374 : vector<8x1xf32> to vector<8x256xf32>
    %383 = arith.subf %370, %382 : vector<8x256xf32>
    %cst_124 = arith.constant 9.99999974E-6 : f32
    %384 = vector.broadcast %cst_124 : f32 to vector<8x1xf32>
    %385 = arith.addf %381, %384 : vector<8x1xf32>
    %386 = math.rsqrt %385 : vector<8x1xf32>
    %387 = vector.broadcast %386 : vector<8x1xf32> to vector<8x256xf32>
    %388 = arith.mulf %383, %387 : vector<8x256xf32>
    %cst_125 = arith.constant 3.000000e+00 : f32
    %389 = vector.broadcast %cst_125 : f32 to vector<8x256xf32>
    %390 = arith.addf %388, %389 : vector<8x256xf32>
    %cst_126 = arith.constant 0.000000e+00 : f32
    %cst_127 = arith.constant 6.000000e+00 : f32
    %391 = vector.broadcast %cst_126 : f32 to vector<8x256xf32>
    %392 = arith.maximumf %391, %390 : vector<8x256xf32>
    %393 = vector.broadcast %cst_127 : f32 to vector<8x256xf32>
    %394 = arith.minimumf %393, %392 : vector<8x256xf32>
    %395 = arith.mulf %388, %394 : vector<8x256xf32>
    %cst_128 = arith.constant 0.166666672 : f32
    %396 = vector.broadcast %cst_128 : f32 to vector<8x256xf32>
    %397 = arith.mulf %395, %396 : vector<8x256xf32>
    %c0_129 = arith.constant 0 : index
    %c0_130 = arith.constant 0 : index
    %398 = vector.load %arg14[%c0_129, %c0_130] : memref<8x72xf32, #tpu.memory_space<vmem>>, vector<8x72xf32>
    %c0_131 = arith.constant 0 : index
    %c0_132 = arith.constant 0 : index
    %399 = vector.load %arg15[%c0_131, %c0_132] : memref<8x1xf32, #tpu.memory_space<vmem>>, vector<8x1xf32>
    %cst_133 = arith.constant 0.000000e+00 : f32
    %400 = vector.broadcast %cst_133 : f32 to vector<8x17xf32>
    %401 = vector.extract_strided_slice %397 {offsets = [0, 0], sizes = [8, 239], strides = [1, 1]} : vector<8x256xf32> to vector<8x239xf32>
    %402 = tpu.concatenate %400, %401 in 1 : vector<8x17xf32>, vector<8x239xf32> -> vector<8x256xf32>
    %cst_134 = arith.constant 0.000000e+00 : f32
    %403 = vector.shape_cast %18 : vector<1x256xi1> to vector<1x256xi1>
    %404 = vector.broadcast %403 : vector<1x256xi1> to vector<8x256xi1>
    %405 = vector.broadcast %cst_134 : f32 to vector<8x256xf32>
    %406 = arith.select %404, %402, %405 : vector<8x256xi1>, vector<8x256xf32>
    %cst_135 = arith.constant 0.000000e+00 : f32
    %407 = vector.broadcast %cst_135 : f32 to vector<8x16xf32>
    %408 = vector.extract_strided_slice %397 {offsets = [0, 0], sizes = [8, 240], strides = [1, 1]} : vector<8x256xf32> to vector<8x240xf32>
    %409 = tpu.concatenate %407, %408 in 1 : vector<8x16xf32>, vector<8x240xf32> -> vector<8x256xf32>
    %cst_136 = arith.constant 0.000000e+00 : f32
    %410 = vector.broadcast %cst_136 : f32 to vector<8x15xf32>
    %411 = vector.extract_strided_slice %397 {offsets = [0, 0], sizes = [8, 241], strides = [1, 1]} : vector<8x256xf32> to vector<8x241xf32>
    %412 = tpu.concatenate %410, %411 in 1 : vector<8x15xf32>, vector<8x241xf32> -> vector<8x256xf32>
    %cst_137 = arith.constant 0.000000e+00 : f32
    %413 = vector.shape_cast %20 : vector<1x256xi1> to vector<1x256xi1>
    %414 = vector.broadcast %413 : vector<1x256xi1> to vector<8x256xi1>
    %415 = vector.broadcast %cst_137 : f32 to vector<8x256xf32>
    %416 = arith.select %414, %412, %415 : vector<8x256xi1>, vector<8x256xf32>
    %cst_138 = arith.constant 0.000000e+00 : f32
    %417 = vector.broadcast %cst_138 : f32 to vector<8x1xf32>
    %418 = vector.extract_strided_slice %397 {offsets = [0, 0], sizes = [8, 255], strides = [1, 1]} : vector<8x256xf32> to vector<8x255xf32>
    %419 = tpu.concatenate %417, %418 in 1 : vector<8x1xf32>, vector<8x255xf32> -> vector<8x256xf32>
    %cst_139 = arith.constant 0.000000e+00 : f32
    %420 = vector.shape_cast %18 : vector<1x256xi1> to vector<1x256xi1>
    %421 = vector.broadcast %420 : vector<1x256xi1> to vector<8x256xi1>
    %422 = vector.broadcast %cst_139 : f32 to vector<8x256xf32>
    %423 = arith.select %421, %419, %422 : vector<8x256xi1>, vector<8x256xf32>
    %424 = vector.extract_strided_slice %397 {offsets = [0, 1], sizes = [8, 255], strides = [1, 1]} : vector<8x256xf32> to vector<8x255xf32>
    %cst_140 = arith.constant 0.000000e+00 : f32
    %425 = vector.broadcast %cst_140 : f32 to vector<8x1xf32>
    %426 = tpu.concatenate %424, %425 in 1 : vector<8x255xf32>, vector<8x1xf32> -> vector<8x256xf32>
    %cst_141 = arith.constant 0.000000e+00 : f32
    %427 = vector.shape_cast %20 : vector<1x256xi1> to vector<1x256xi1>
    %428 = vector.broadcast %427 : vector<1x256xi1> to vector<8x256xi1>
    %429 = vector.broadcast %cst_141 : f32 to vector<8x256xf32>
    %430 = arith.select %428, %426, %429 : vector<8x256xi1>, vector<8x256xf32>
    %431 = vector.extract_strided_slice %397 {offsets = [0, 15], sizes = [8, 241], strides = [1, 1]} : vector<8x256xf32> to vector<8x241xf32>
    %cst_142 = arith.constant 0.000000e+00 : f32
    %432 = vector.broadcast %cst_142 : f32 to vector<8x15xf32>
    %433 = tpu.concatenate %431, %432 in 1 : vector<8x241xf32>, vector<8x15xf32> -> vector<8x256xf32>
    %cst_143 = arith.constant 0.000000e+00 : f32
    %434 = vector.shape_cast %18 : vector<1x256xi1> to vector<1x256xi1>
    %435 = vector.broadcast %434 : vector<1x256xi1> to vector<8x256xi1>
    %436 = vector.broadcast %cst_143 : f32 to vector<8x256xf32>
    %437 = arith.select %435, %433, %436 : vector<8x256xi1>, vector<8x256xf32>
    %438 = vector.extract_strided_slice %397 {offsets = [0, 16], sizes = [8, 240], strides = [1, 1]} : vector<8x256xf32> to vector<8x240xf32>
    %cst_144 = arith.constant 0.000000e+00 : f32
    %439 = vector.broadcast %cst_144 : f32 to vector<8x16xf32>
    %440 = tpu.concatenate %438, %439 in 1 : vector<8x240xf32>, vector<8x16xf32> -> vector<8x256xf32>
    %441 = vector.extract_strided_slice %397 {offsets = [0, 17], sizes = [8, 239], strides = [1, 1]} : vector<8x256xf32> to vector<8x239xf32>
    %cst_145 = arith.constant 0.000000e+00 : f32
    %442 = vector.broadcast %cst_145 : f32 to vector<8x17xf32>
    %443 = tpu.concatenate %441, %442 in 1 : vector<8x239xf32>, vector<8x17xf32> -> vector<8x256xf32>
    %cst_146 = arith.constant 0.000000e+00 : f32
    %444 = vector.shape_cast %20 : vector<1x256xi1> to vector<1x256xi1>
    %445 = vector.broadcast %444 : vector<1x256xi1> to vector<8x256xi1>
    %446 = vector.broadcast %cst_146 : f32 to vector<8x256xf32>
    %447 = arith.select %445, %443, %446 : vector<8x256xi1>, vector<8x256xf32>
    %448 = tpu.concatenate %406, %409, %416, %423, %397, %430, %437, %440, %447 in 0 : vector<8x256xf32>, vector<8x256xf32>, vector<8x256xf32>, vector<8x256xf32>, vector<8x256xf32>, vector<8x256xf32>, vector<8x256xf32>, vector<8x256xf32>, vector<8x256xf32> -> vector<72x256xf32>
    %cst_147 = arith.constant dense<0.000000e+00> : vector<8x256xf32>
    %449 = tpu.matmul %398, %448, %cst_147 {dimension_numbers = #tpu.dot_dimension_numbers<[1], [0], [0], [1], [0, 0, 1, 1], [], []>} : vector<8x72xf32>, vector<72x256xf32>, vector<8x256xf32> -> vector<8x256xf32>
    %450 = vector.broadcast %399 : vector<8x1xf32> to vector<8x256xf32>
    %451 = arith.addf %449, %450 : vector<8x256xf32>
    %452 = arith.addf %256, %451 : vector<8x256xf32>
    %cst_148 = arith.constant dense<0.000000e+00> : vector<8xf32>
    %453 = vector.multi_reduction <add>, %452, %cst_148 [1] : vector<8x256xf32> to vector<8xf32>
    %454 = vector.shape_cast %453 : vector<8xf32> to vector<8x1xf32>
    %cst_149 = arith.constant 2.560000e+02 : f32
    %455 = vector.broadcast %cst_149 : f32 to vector<8x1xf32>
    %456 = arith.divf %454, %455 : vector<8x1xf32>
    %457 = vector.broadcast %456 : vector<8x1xf32> to vector<8x256xf32>
    %458 = arith.subf %452, %457 : vector<8x256xf32>
    %459 = arith.mulf %458, %458 : vector<8x256xf32>
    %cst_150 = arith.constant dense<0.000000e+00> : vector<8xf32>
    %460 = vector.multi_reduction <add>, %459, %cst_150 [1] : vector<8x256xf32> to vector<8xf32>
    %461 = vector.shape_cast %460 : vector<8xf32> to vector<8x1xf32>
    %cst_151 = arith.constant 2.560000e+02 : f32
    %462 = vector.broadcast %cst_151 : f32 to vector<8x1xf32>
    %463 = arith.divf %461, %462 : vector<8x1xf32>
    %464 = vector.broadcast %456 : vector<8x1xf32> to vector<8x256xf32>
    %465 = arith.subf %452, %464 : vector<8x256xf32>
    %cst_152 = arith.constant 9.99999974E-6 : f32
    %466 = vector.broadcast %cst_152 : f32 to vector<8x1xf32>
    %467 = arith.addf %463, %466 : vector<8x1xf32>
    %468 = math.rsqrt %467 : vector<8x1xf32>
    %469 = vector.broadcast %468 : vector<8x1xf32> to vector<8x256xf32>
    %470 = arith.mulf %465, %469 : vector<8x256xf32>
    %cst_153 = arith.constant 3.000000e+00 : f32
    %471 = vector.broadcast %cst_153 : f32 to vector<8x256xf32>
    %472 = arith.addf %470, %471 : vector<8x256xf32>
    %cst_154 = arith.constant 0.000000e+00 : f32
    %cst_155 = arith.constant 6.000000e+00 : f32
    %473 = vector.broadcast %cst_154 : f32 to vector<8x256xf32>
    %474 = arith.maximumf %473, %472 : vector<8x256xf32>
    %475 = vector.broadcast %cst_155 : f32 to vector<8x256xf32>
    %476 = arith.minimumf %475, %474 : vector<8x256xf32>
    %477 = arith.mulf %470, %476 : vector<8x256xf32>
    %cst_156 = arith.constant 0.166666672 : f32
    %478 = vector.broadcast %cst_156 : f32 to vector<8x256xf32>
    %479 = arith.mulf %477, %478 : vector<8x256xf32>
    %c0_157 = arith.constant 0 : index
    %c0_158 = arith.constant 0 : index
    %480 = vector.load %arg16[%c0_157, %c0_158] : memref<16x72xf32, #tpu.memory_space<vmem>>, vector<16x72xf32>
    %c0_159 = arith.constant 0 : index
    %c0_160 = arith.constant 0 : index
    %481 = vector.load %arg17[%c0_159, %c0_160] : memref<16x1xf32, #tpu.memory_space<vmem>>, vector<16x1xf32>
    %cst_161 = arith.constant 0.000000e+00 : f32
    %482 = vector.broadcast %cst_161 : f32 to vector<8x17xf32>
    %483 = vector.extract_strided_slice %479 {offsets = [0, 0], sizes = [8, 239], strides = [1, 1]} : vector<8x256xf32> to vector<8x239xf32>
    %484 = tpu.concatenate %482, %483 in 1 : vector<8x17xf32>, vector<8x239xf32> -> vector<8x256xf32>
    %cst_162 = arith.constant 0.000000e+00 : f32
    %485 = vector.shape_cast %18 : vector<1x256xi1> to vector<1x256xi1>
    %486 = vector.broadcast %485 : vector<1x256xi1> to vector<8x256xi1>
    %487 = vector.broadcast %cst_162 : f32 to vector<8x256xf32>
    %488 = arith.select %486, %484, %487 : vector<8x256xi1>, vector<8x256xf32>
    %cst_163 = arith.constant 0.000000e+00 : f32
    %489 = vector.broadcast %cst_163 : f32 to vector<8x16xf32>
    %490 = vector.extract_strided_slice %479 {offsets = [0, 0], sizes = [8, 240], strides = [1, 1]} : vector<8x256xf32> to vector<8x240xf32>
    %491 = tpu.concatenate %489, %490 in 1 : vector<8x16xf32>, vector<8x240xf32> -> vector<8x256xf32>
    %cst_164 = arith.constant 0.000000e+00 : f32
    %492 = vector.broadcast %cst_164 : f32 to vector<8x15xf32>
    %493 = vector.extract_strided_slice %479 {offsets = [0, 0], sizes = [8, 241], strides = [1, 1]} : vector<8x256xf32> to vector<8x241xf32>
    %494 = tpu.concatenate %492, %493 in 1 : vector<8x15xf32>, vector<8x241xf32> -> vector<8x256xf32>
    %cst_165 = arith.constant 0.000000e+00 : f32
    %495 = vector.shape_cast %20 : vector<1x256xi1> to vector<1x256xi1>
    %496 = vector.broadcast %495 : vector<1x256xi1> to vector<8x256xi1>
    %497 = vector.broadcast %cst_165 : f32 to vector<8x256xf32>
    %498 = arith.select %496, %494, %497 : vector<8x256xi1>, vector<8x256xf32>
    %cst_166 = arith.constant 0.000000e+00 : f32
    %499 = vector.broadcast %cst_166 : f32 to vector<8x1xf32>
    %500 = vector.extract_strided_slice %479 {offsets = [0, 0], sizes = [8, 255], strides = [1, 1]} : vector<8x256xf32> to vector<8x255xf32>
    %501 = tpu.concatenate %499, %500 in 1 : vector<8x1xf32>, vector<8x255xf32> -> vector<8x256xf32>
    %cst_167 = arith.constant 0.000000e+00 : f32
    %502 = vector.shape_cast %18 : vector<1x256xi1> to vector<1x256xi1>
    %503 = vector.broadcast %502 : vector<1x256xi1> to vector<8x256xi1>
    %504 = vector.broadcast %cst_167 : f32 to vector<8x256xf32>
    %505 = arith.select %503, %501, %504 : vector<8x256xi1>, vector<8x256xf32>
    %506 = vector.extract_strided_slice %479 {offsets = [0, 1], sizes = [8, 255], strides = [1, 1]} : vector<8x256xf32> to vector<8x255xf32>
    %cst_168 = arith.constant 0.000000e+00 : f32
    %507 = vector.broadcast %cst_168 : f32 to vector<8x1xf32>
    %508 = tpu.concatenate %506, %507 in 1 : vector<8x255xf32>, vector<8x1xf32> -> vector<8x256xf32>
    %cst_169 = arith.constant 0.000000e+00 : f32
    %509 = vector.shape_cast %20 : vector<1x256xi1> to vector<1x256xi1>
    %510 = vector.broadcast %509 : vector<1x256xi1> to vector<8x256xi1>
    %511 = vector.broadcast %cst_169 : f32 to vector<8x256xf32>
    %512 = arith.select %510, %508, %511 : vector<8x256xi1>, vector<8x256xf32>
    %513 = vector.extract_strided_slice %479 {offsets = [0, 15], sizes = [8, 241], strides = [1, 1]} : vector<8x256xf32> to vector<8x241xf32>
    %cst_170 = arith.constant 0.000000e+00 : f32
    %514 = vector.broadcast %cst_170 : f32 to vector<8x15xf32>
    %515 = tpu.concatenate %513, %514 in 1 : vector<8x241xf32>, vector<8x15xf32> -> vector<8x256xf32>
    %cst_171 = arith.constant 0.000000e+00 : f32
    %516 = vector.shape_cast %18 : vector<1x256xi1> to vector<1x256xi1>
    %517 = vector.broadcast %516 : vector<1x256xi1> to vector<8x256xi1>
    %518 = vector.broadcast %cst_171 : f32 to vector<8x256xf32>
    %519 = arith.select %517, %515, %518 : vector<8x256xi1>, vector<8x256xf32>
    %520 = vector.extract_strided_slice %479 {offsets = [0, 16], sizes = [8, 240], strides = [1, 1]} : vector<8x256xf32> to vector<8x240xf32>
    %cst_172 = arith.constant 0.000000e+00 : f32
    %521 = vector.broadcast %cst_172 : f32 to vector<8x16xf32>
    %522 = tpu.concatenate %520, %521 in 1 : vector<8x240xf32>, vector<8x16xf32> -> vector<8x256xf32>
    %523 = vector.extract_strided_slice %479 {offsets = [0, 17], sizes = [8, 239], strides = [1, 1]} : vector<8x256xf32> to vector<8x239xf32>
    %cst_173 = arith.constant 0.000000e+00 : f32
    %524 = vector.broadcast %cst_173 : f32 to vector<8x17xf32>
    %525 = tpu.concatenate %523, %524 in 1 : vector<8x239xf32>, vector<8x17xf32> -> vector<8x256xf32>
    %cst_174 = arith.constant 0.000000e+00 : f32
    %526 = vector.shape_cast %20 : vector<1x256xi1> to vector<1x256xi1>
    %527 = vector.broadcast %526 : vector<1x256xi1> to vector<8x256xi1>
    %528 = vector.broadcast %cst_174 : f32 to vector<8x256xf32>
    %529 = arith.select %527, %525, %528 : vector<8x256xi1>, vector<8x256xf32>
    %530 = tpu.concatenate %488, %491, %498, %505, %479, %512, %519, %522, %529 in 0 : vector<8x256xf32>, vector<8x256xf32>, vector<8x256xf32>, vector<8x256xf32>, vector<8x256xf32>, vector<8x256xf32>, vector<8x256xf32>, vector<8x256xf32>, vector<8x256xf32> -> vector<72x256xf32>
    %cst_175 = arith.constant dense<0.000000e+00> : vector<16x256xf32>
    %531 = tpu.matmul %480, %530, %cst_175 {dimension_numbers = #tpu.dot_dimension_numbers<[1], [0], [0], [1], [0, 0, 1, 1], [], []>} : vector<16x72xf32>, vector<72x256xf32>, vector<16x256xf32> -> vector<16x256xf32>
    %532 = vector.broadcast %481 : vector<16x1xf32> to vector<16x256xf32>
    %533 = arith.addf %531, %532 : vector<16x256xf32>
    %c0_176 = arith.constant 0 : index
    %c0_177 = arith.constant 0 : index
    %534 = vector.load %arg18[%c0_176, %c0_177] : memref<16x8xf32, #tpu.memory_space<vmem>>, vector<16x8xf32>
    %cst_178 = arith.constant dense<0.000000e+00> : vector<16x256xf32>
    %535 = tpu.matmul %534, %452, %cst_178 {dimension_numbers = #tpu.dot_dimension_numbers<[1], [0], [0], [1], [0, 0, 1, 1], [], []>} : vector<16x8xf32>, vector<8x256xf32>, vector<16x256xf32> -> vector<16x256xf32>
    %c0_179 = arith.constant 0 : index
    %c0_180 = arith.constant 0 : index
    %536 = vector.load %arg19[%c0_179, %c0_180] : memref<16x1xf32, #tpu.memory_space<vmem>>, vector<16x1xf32>
    %537 = vector.broadcast %536 : vector<16x1xf32> to vector<16x256xf32>
    %538 = arith.addf %535, %537 : vector<16x256xf32>
    %539 = arith.addf %533, %538 : vector<16x256xf32>
    %cst_181 = arith.constant dense<0.000000e+00> : vector<16x64xf32>
    %540 = tpu.matmul %539, %21, %cst_181 {dimension_numbers = #tpu.dot_dimension_numbers<[1], [0], [0], [1], [0, 0, 1, 1], [], []>} : vector<16x256xf32>, vector<256x64xf32>, vector<16x64xf32> -> vector<16x64xf32>
    %cst_182 = arith.constant dense<0.000000e+00> : vector<16xf32>
    %541 = vector.multi_reduction <add>, %540, %cst_182 [1] : vector<16x64xf32> to vector<16xf32>
    %542 = vector.shape_cast %541 : vector<16xf32> to vector<16x1xf32>
    %cst_183 = arith.constant 6.400000e+01 : f32
    %543 = vector.broadcast %cst_183 : f32 to vector<16x1xf32>
    %544 = arith.divf %542, %543 : vector<16x1xf32>
    %c1 = arith.constant 1 : index
    %c0_184 = arith.constant 0 : index
    %c0_185 = arith.constant 0 : index
    %545 = vector.load %arg0[%c1, %c0_184, %c0_185] : memref<2x8x256xf32, #tpu.memory_space<vmem>>, vector<1x8x256xf32>
    %546 = vector.shape_cast %545 : vector<1x8x256xf32> to vector<8x256xf32>
    %c0_186 = arith.constant 0 : index
    %c0_187 = arith.constant 0 : index
    %547 = vector.load %arg2[%c0_186, %c0_187] : memref<8x72xf32, #tpu.memory_space<vmem>>, vector<8x72xf32>
    %c0_188 = arith.constant 0 : index
    %c0_189 = arith.constant 0 : index
    %548 = vector.load %arg3[%c0_188, %c0_189] : memref<8x1xf32, #tpu.memory_space<vmem>>, vector<8x1xf32>
    %cst_190 = arith.constant 0.000000e+00 : f32
    %549 = vector.broadcast %cst_190 : f32 to vector<8x17xf32>
    %550 = vector.extract_strided_slice %546 {offsets = [0, 0], sizes = [8, 239], strides = [1, 1]} : vector<8x256xf32> to vector<8x239xf32>
    %551 = tpu.concatenate %549, %550 in 1 : vector<8x17xf32>, vector<8x239xf32> -> vector<8x256xf32>
    %cst_191 = arith.constant 0.000000e+00 : f32
    %552 = vector.shape_cast %18 : vector<1x256xi1> to vector<1x256xi1>
    %553 = vector.broadcast %552 : vector<1x256xi1> to vector<8x256xi1>
    %554 = vector.broadcast %cst_191 : f32 to vector<8x256xf32>
    %555 = arith.select %553, %551, %554 : vector<8x256xi1>, vector<8x256xf32>
    %cst_192 = arith.constant 0.000000e+00 : f32
    %556 = vector.broadcast %cst_192 : f32 to vector<8x16xf32>
    %557 = vector.extract_strided_slice %546 {offsets = [0, 0], sizes = [8, 240], strides = [1, 1]} : vector<8x256xf32> to vector<8x240xf32>
    %558 = tpu.concatenate %556, %557 in 1 : vector<8x16xf32>, vector<8x240xf32> -> vector<8x256xf32>
    %cst_193 = arith.constant 0.000000e+00 : f32
    %559 = vector.broadcast %cst_193 : f32 to vector<8x15xf32>
    %560 = vector.extract_strided_slice %546 {offsets = [0, 0], sizes = [8, 241], strides = [1, 1]} : vector<8x256xf32> to vector<8x241xf32>
    %561 = tpu.concatenate %559, %560 in 1 : vector<8x15xf32>, vector<8x241xf32> -> vector<8x256xf32>
    %cst_194 = arith.constant 0.000000e+00 : f32
    %562 = vector.shape_cast %20 : vector<1x256xi1> to vector<1x256xi1>
    %563 = vector.broadcast %562 : vector<1x256xi1> to vector<8x256xi1>
    %564 = vector.broadcast %cst_194 : f32 to vector<8x256xf32>
    %565 = arith.select %563, %561, %564 : vector<8x256xi1>, vector<8x256xf32>
    %cst_195 = arith.constant 0.000000e+00 : f32
    %566 = vector.broadcast %cst_195 : f32 to vector<8x1xf32>
    %567 = vector.extract_strided_slice %546 {offsets = [0, 0], sizes = [8, 255], strides = [1, 1]} : vector<8x256xf32> to vector<8x255xf32>
    %568 = tpu.concatenate %566, %567 in 1 : vector<8x1xf32>, vector<8x255xf32> -> vector<8x256xf32>
    %cst_196 = arith.constant 0.000000e+00 : f32
    %569 = vector.shape_cast %18 : vector<1x256xi1> to vector<1x256xi1>
    %570 = vector.broadcast %569 : vector<1x256xi1> to vector<8x256xi1>
    %571 = vector.broadcast %cst_196 : f32 to vector<8x256xf32>
    %572 = arith.select %570, %568, %571 : vector<8x256xi1>, vector<8x256xf32>
    %573 = vector.extract_strided_slice %546 {offsets = [0, 1], sizes = [8, 255], strides = [1, 1]} : vector<8x256xf32> to vector<8x255xf32>
    %cst_197 = arith.constant 0.000000e+00 : f32
    %574 = vector.broadcast %cst_197 : f32 to vector<8x1xf32>
    %575 = tpu.concatenate %573, %574 in 1 : vector<8x255xf32>, vector<8x1xf32> -> vector<8x256xf32>
    %cst_198 = arith.constant 0.000000e+00 : f32
    %576 = vector.shape_cast %20 : vector<1x256xi1> to vector<1x256xi1>
    %577 = vector.broadcast %576 : vector<1x256xi1> to vector<8x256xi1>
    %578 = vector.broadcast %cst_198 : f32 to vector<8x256xf32>
    %579 = arith.select %577, %575, %578 : vector<8x256xi1>, vector<8x256xf32>
    %580 = vector.extract_strided_slice %546 {offsets = [0, 15], sizes = [8, 241], strides = [1, 1]} : vector<8x256xf32> to vector<8x241xf32>
    %cst_199 = arith.constant 0.000000e+00 : f32
    %581 = vector.broadcast %cst_199 : f32 to vector<8x15xf32>
    %582 = tpu.concatenate %580, %581 in 1 : vector<8x241xf32>, vector<8x15xf32> -> vector<8x256xf32>
    %cst_200 = arith.constant 0.000000e+00 : f32
    %583 = vector.shape_cast %18 : vector<1x256xi1> to vector<1x256xi1>
    %584 = vector.broadcast %583 : vector<1x256xi1> to vector<8x256xi1>
    %585 = vector.broadcast %cst_200 : f32 to vector<8x256xf32>
    %586 = arith.select %584, %582, %585 : vector<8x256xi1>, vector<8x256xf32>
    %587 = vector.extract_strided_slice %546 {offsets = [0, 16], sizes = [8, 240], strides = [1, 1]} : vector<8x256xf32> to vector<8x240xf32>
    %cst_201 = arith.constant 0.000000e+00 : f32
    %588 = vector.broadcast %cst_201 : f32 to vector<8x16xf32>
    %589 = tpu.concatenate %587, %588 in 1 : vector<8x240xf32>, vector<8x16xf32> -> vector<8x256xf32>
    %590 = vector.extract_strided_slice %546 {offsets = [0, 17], sizes = [8, 239], strides = [1, 1]} : vector<8x256xf32> to vector<8x239xf32>
    %cst_202 = arith.constant 0.000000e+00 : f32
    %591 = vector.broadcast %cst_202 : f32 to vector<8x17xf32>
    %592 = tpu.concatenate %590, %591 in 1 : vector<8x239xf32>, vector<8x17xf32> -> vector<8x256xf32>
    %cst_203 = arith.constant 0.000000e+00 : f32
    %593 = vector.shape_cast %20 : vector<1x256xi1> to vector<1x256xi1>
    %594 = vector.broadcast %593 : vector<1x256xi1> to vector<8x256xi1>
    %595 = vector.broadcast %cst_203 : f32 to vector<8x256xf32>
    %596 = arith.select %594, %592, %595 : vector<8x256xi1>, vector<8x256xf32>
    %597 = tpu.concatenate %555, %558, %565, %572, %546, %579, %586, %589, %596 in 0 : vector<8x256xf32>, vector<8x256xf32>, vector<8x256xf32>, vector<8x256xf32>, vector<8x256xf32>, vector<8x256xf32>, vector<8x256xf32>, vector<8x256xf32>, vector<8x256xf32> -> vector<72x256xf32>
    %cst_204 = arith.constant dense<0.000000e+00> : vector<8x256xf32>
    %598 = tpu.matmul %547, %597, %cst_204 {dimension_numbers = #tpu.dot_dimension_numbers<[1], [0], [0], [1], [0, 0, 1, 1], [], []>} : vector<8x72xf32>, vector<72x256xf32>, vector<8x256xf32> -> vector<8x256xf32>
    %599 = vector.broadcast %548 : vector<8x1xf32> to vector<8x256xf32>
    %600 = arith.addf %598, %599 : vector<8x256xf32>
    %cst_205 = arith.constant dense<0.000000e+00> : vector<8xf32>
    %601 = vector.multi_reduction <add>, %600, %cst_205 [1] : vector<8x256xf32> to vector<8xf32>
    %602 = vector.shape_cast %601 : vector<8xf32> to vector<8x1xf32>
    %cst_206 = arith.constant 2.560000e+02 : f32
    %603 = vector.broadcast %cst_206 : f32 to vector<8x1xf32>
    %604 = arith.divf %602, %603 : vector<8x1xf32>
    %605 = vector.broadcast %604 : vector<8x1xf32> to vector<8x256xf32>
    %606 = arith.subf %600, %605 : vector<8x256xf32>
    %607 = arith.mulf %606, %606 : vector<8x256xf32>
    %cst_207 = arith.constant dense<0.000000e+00> : vector<8xf32>
    %608 = vector.multi_reduction <add>, %607, %cst_207 [1] : vector<8x256xf32> to vector<8xf32>
    %609 = vector.shape_cast %608 : vector<8xf32> to vector<8x1xf32>
    %cst_208 = arith.constant 2.560000e+02 : f32
    %610 = vector.broadcast %cst_208 : f32 to vector<8x1xf32>
    %611 = arith.divf %609, %610 : vector<8x1xf32>
    %612 = vector.broadcast %604 : vector<8x1xf32> to vector<8x256xf32>
    %613 = arith.subf %600, %612 : vector<8x256xf32>
    %cst_209 = arith.constant 9.99999974E-6 : f32
    %614 = vector.broadcast %cst_209 : f32 to vector<8x1xf32>
    %615 = arith.addf %611, %614 : vector<8x1xf32>
    %616 = math.rsqrt %615 : vector<8x1xf32>
    %617 = vector.broadcast %616 : vector<8x1xf32> to vector<8x256xf32>
    %618 = arith.mulf %613, %617 : vector<8x256xf32>
    %cst_210 = arith.constant 0.000000e+00 : f32
    %619 = vector.broadcast %cst_210 : f32 to vector<8x256xf32>
    %620 = arith.maximumf %618, %619 : vector<8x256xf32>
    %c0_211 = arith.constant 0 : index
    %c0_212 = arith.constant 0 : index
    %621 = vector.load %arg4[%c0_211, %c0_212] : memref<8x72xf32, #tpu.memory_space<vmem>>, vector<8x72xf32>
    %c0_213 = arith.constant 0 : index
    %c0_214 = arith.constant 0 : index
    %622 = vector.load %arg5[%c0_213, %c0_214] : memref<8x1xf32, #tpu.memory_space<vmem>>, vector<8x1xf32>
    %cst_215 = arith.constant 0.000000e+00 : f32
    %623 = vector.broadcast %cst_215 : f32 to vector<8x17xf32>
    %624 = vector.extract_strided_slice %620 {offsets = [0, 0], sizes = [8, 239], strides = [1, 1]} : vector<8x256xf32> to vector<8x239xf32>
    %625 = tpu.concatenate %623, %624 in 1 : vector<8x17xf32>, vector<8x239xf32> -> vector<8x256xf32>
    %cst_216 = arith.constant 0.000000e+00 : f32
    %626 = vector.shape_cast %18 : vector<1x256xi1> to vector<1x256xi1>
    %627 = vector.broadcast %626 : vector<1x256xi1> to vector<8x256xi1>
    %628 = vector.broadcast %cst_216 : f32 to vector<8x256xf32>
    %629 = arith.select %627, %625, %628 : vector<8x256xi1>, vector<8x256xf32>
    %cst_217 = arith.constant 0.000000e+00 : f32
    %630 = vector.broadcast %cst_217 : f32 to vector<8x16xf32>
    %631 = vector.extract_strided_slice %620 {offsets = [0, 0], sizes = [8, 240], strides = [1, 1]} : vector<8x256xf32> to vector<8x240xf32>
    %632 = tpu.concatenate %630, %631 in 1 : vector<8x16xf32>, vector<8x240xf32> -> vector<8x256xf32>
    %cst_218 = arith.constant 0.000000e+00 : f32
    %633 = vector.broadcast %cst_218 : f32 to vector<8x15xf32>
    %634 = vector.extract_strided_slice %620 {offsets = [0, 0], sizes = [8, 241], strides = [1, 1]} : vector<8x256xf32> to vector<8x241xf32>
    %635 = tpu.concatenate %633, %634 in 1 : vector<8x15xf32>, vector<8x241xf32> -> vector<8x256xf32>
    %cst_219 = arith.constant 0.000000e+00 : f32
    %636 = vector.shape_cast %20 : vector<1x256xi1> to vector<1x256xi1>
    %637 = vector.broadcast %636 : vector<1x256xi1> to vector<8x256xi1>
    %638 = vector.broadcast %cst_219 : f32 to vector<8x256xf32>
    %639 = arith.select %637, %635, %638 : vector<8x256xi1>, vector<8x256xf32>
    %cst_220 = arith.constant 0.000000e+00 : f32
    %640 = vector.broadcast %cst_220 : f32 to vector<8x1xf32>
    %641 = vector.extract_strided_slice %620 {offsets = [0, 0], sizes = [8, 255], strides = [1, 1]} : vector<8x256xf32> to vector<8x255xf32>
    %642 = tpu.concatenate %640, %641 in 1 : vector<8x1xf32>, vector<8x255xf32> -> vector<8x256xf32>
    %cst_221 = arith.constant 0.000000e+00 : f32
    %643 = vector.shape_cast %18 : vector<1x256xi1> to vector<1x256xi1>
    %644 = vector.broadcast %643 : vector<1x256xi1> to vector<8x256xi1>
    %645 = vector.broadcast %cst_221 : f32 to vector<8x256xf32>
    %646 = arith.select %644, %642, %645 : vector<8x256xi1>, vector<8x256xf32>
    %647 = vector.extract_strided_slice %620 {offsets = [0, 1], sizes = [8, 255], strides = [1, 1]} : vector<8x256xf32> to vector<8x255xf32>
    %cst_222 = arith.constant 0.000000e+00 : f32
    %648 = vector.broadcast %cst_222 : f32 to vector<8x1xf32>
    %649 = tpu.concatenate %647, %648 in 1 : vector<8x255xf32>, vector<8x1xf32> -> vector<8x256xf32>
    %cst_223 = arith.constant 0.000000e+00 : f32
    %650 = vector.shape_cast %20 : vector<1x256xi1> to vector<1x256xi1>
    %651 = vector.broadcast %650 : vector<1x256xi1> to vector<8x256xi1>
    %652 = vector.broadcast %cst_223 : f32 to vector<8x256xf32>
    %653 = arith.select %651, %649, %652 : vector<8x256xi1>, vector<8x256xf32>
    %654 = vector.extract_strided_slice %620 {offsets = [0, 15], sizes = [8, 241], strides = [1, 1]} : vector<8x256xf32> to vector<8x241xf32>
    %cst_224 = arith.constant 0.000000e+00 : f32
    %655 = vector.broadcast %cst_224 : f32 to vector<8x15xf32>
    %656 = tpu.concatenate %654, %655 in 1 : vector<8x241xf32>, vector<8x15xf32> -> vector<8x256xf32>
    %cst_225 = arith.constant 0.000000e+00 : f32
    %657 = vector.shape_cast %18 : vector<1x256xi1> to vector<1x256xi1>
    %658 = vector.broadcast %657 : vector<1x256xi1> to vector<8x256xi1>
    %659 = vector.broadcast %cst_225 : f32 to vector<8x256xf32>
    %660 = arith.select %658, %656, %659 : vector<8x256xi1>, vector<8x256xf32>
    %661 = vector.extract_strided_slice %620 {offsets = [0, 16], sizes = [8, 240], strides = [1, 1]} : vector<8x256xf32> to vector<8x240xf32>
    %cst_226 = arith.constant 0.000000e+00 : f32
    %662 = vector.broadcast %cst_226 : f32 to vector<8x16xf32>
    %663 = tpu.concatenate %661, %662 in 1 : vector<8x240xf32>, vector<8x16xf32> -> vector<8x256xf32>
    %664 = vector.extract_strided_slice %620 {offsets = [0, 17], sizes = [8, 239], strides = [1, 1]} : vector<8x256xf32> to vector<8x239xf32>
    %cst_227 = arith.constant 0.000000e+00 : f32
    %665 = vector.broadcast %cst_227 : f32 to vector<8x17xf32>
    %666 = tpu.concatenate %664, %665 in 1 : vector<8x239xf32>, vector<8x17xf32> -> vector<8x256xf32>
    %cst_228 = arith.constant 0.000000e+00 : f32
    %667 = vector.shape_cast %20 : vector<1x256xi1> to vector<1x256xi1>
    %668 = vector.broadcast %667 : vector<1x256xi1> to vector<8x256xi1>
    %669 = vector.broadcast %cst_228 : f32 to vector<8x256xf32>
    %670 = arith.select %668, %666, %669 : vector<8x256xi1>, vector<8x256xf32>
    %671 = tpu.concatenate %629, %632, %639, %646, %620, %653, %660, %663, %670 in 0 : vector<8x256xf32>, vector<8x256xf32>, vector<8x256xf32>, vector<8x256xf32>, vector<8x256xf32>, vector<8x256xf32>, vector<8x256xf32>, vector<8x256xf32>, vector<8x256xf32> -> vector<72x256xf32>
    %cst_229 = arith.constant dense<0.000000e+00> : vector<8x256xf32>
    %672 = tpu.matmul %621, %671, %cst_229 {dimension_numbers = #tpu.dot_dimension_numbers<[1], [0], [0], [1], [0, 0, 1, 1], [], []>} : vector<8x72xf32>, vector<72x256xf32>, vector<8x256xf32> -> vector<8x256xf32>
    %673 = vector.broadcast %622 : vector<8x1xf32> to vector<8x256xf32>
    %674 = arith.addf %672, %673 : vector<8x256xf32>
    %cst_230 = arith.constant dense<0.000000e+00> : vector<8xf32>
    %675 = vector.multi_reduction <add>, %674, %cst_230 [1] : vector<8x256xf32> to vector<8xf32>
    %676 = vector.shape_cast %675 : vector<8xf32> to vector<8x1xf32>
    %cst_231 = arith.constant 2.560000e+02 : f32
    %677 = vector.broadcast %cst_231 : f32 to vector<8x1xf32>
    %678 = arith.divf %676, %677 : vector<8x1xf32>
    %679 = vector.broadcast %678 : vector<8x1xf32> to vector<8x256xf32>
    %680 = arith.subf %674, %679 : vector<8x256xf32>
    %681 = arith.mulf %680, %680 : vector<8x256xf32>
    %cst_232 = arith.constant dense<0.000000e+00> : vector<8xf32>
    %682 = vector.multi_reduction <add>, %681, %cst_232 [1] : vector<8x256xf32> to vector<8xf32>
    %683 = vector.shape_cast %682 : vector<8xf32> to vector<8x1xf32>
    %cst_233 = arith.constant 2.560000e+02 : f32
    %684 = vector.broadcast %cst_233 : f32 to vector<8x1xf32>
    %685 = arith.divf %683, %684 : vector<8x1xf32>
    %686 = vector.broadcast %678 : vector<8x1xf32> to vector<8x256xf32>
    %687 = arith.subf %674, %686 : vector<8x256xf32>
    %cst_234 = arith.constant 9.99999974E-6 : f32
    %688 = vector.broadcast %cst_234 : f32 to vector<8x1xf32>
    %689 = arith.addf %685, %688 : vector<8x1xf32>
    %690 = math.rsqrt %689 : vector<8x1xf32>
    %691 = vector.broadcast %690 : vector<8x1xf32> to vector<8x256xf32>
    %692 = arith.mulf %687, %691 : vector<8x256xf32>
    %cst_235 = arith.constant 0.000000e+00 : f32
    %693 = vector.broadcast %cst_235 : f32 to vector<8x256xf32>
    %694 = arith.maximumf %692, %693 : vector<8x256xf32>
    %c0_236 = arith.constant 0 : index
    %c0_237 = arith.constant 0 : index
    %695 = vector.load %arg6[%c0_236, %c0_237] : memref<8x72xf32, #tpu.memory_space<vmem>>, vector<8x72xf32>
    %c0_238 = arith.constant 0 : index
    %c0_239 = arith.constant 0 : index
    %696 = vector.load %arg7[%c0_238, %c0_239] : memref<8x1xf32, #tpu.memory_space<vmem>>, vector<8x1xf32>
    %cst_240 = arith.constant 0.000000e+00 : f32
    %697 = vector.broadcast %cst_240 : f32 to vector<8x17xf32>
    %698 = vector.extract_strided_slice %694 {offsets = [0, 0], sizes = [8, 239], strides = [1, 1]} : vector<8x256xf32> to vector<8x239xf32>
    %699 = tpu.concatenate %697, %698 in 1 : vector<8x17xf32>, vector<8x239xf32> -> vector<8x256xf32>
    %cst_241 = arith.constant 0.000000e+00 : f32
    %700 = vector.shape_cast %18 : vector<1x256xi1> to vector<1x256xi1>
    %701 = vector.broadcast %700 : vector<1x256xi1> to vector<8x256xi1>
    %702 = vector.broadcast %cst_241 : f32 to vector<8x256xf32>
    %703 = arith.select %701, %699, %702 : vector<8x256xi1>, vector<8x256xf32>
    %cst_242 = arith.constant 0.000000e+00 : f32
    %704 = vector.broadcast %cst_242 : f32 to vector<8x16xf32>
    %705 = vector.extract_strided_slice %694 {offsets = [0, 0], sizes = [8, 240], strides = [1, 1]} : vector<8x256xf32> to vector<8x240xf32>
    %706 = tpu.concatenate %704, %705 in 1 : vector<8x16xf32>, vector<8x240xf32> -> vector<8x256xf32>
    %cst_243 = arith.constant 0.000000e+00 : f32
    %707 = vector.broadcast %cst_243 : f32 to vector<8x15xf32>
    %708 = vector.extract_strided_slice %694 {offsets = [0, 0], sizes = [8, 241], strides = [1, 1]} : vector<8x256xf32> to vector<8x241xf32>
    %709 = tpu.concatenate %707, %708 in 1 : vector<8x15xf32>, vector<8x241xf32> -> vector<8x256xf32>
    %cst_244 = arith.constant 0.000000e+00 : f32
    %710 = vector.shape_cast %20 : vector<1x256xi1> to vector<1x256xi1>
    %711 = vector.broadcast %710 : vector<1x256xi1> to vector<8x256xi1>
    %712 = vector.broadcast %cst_244 : f32 to vector<8x256xf32>
    %713 = arith.select %711, %709, %712 : vector<8x256xi1>, vector<8x256xf32>
    %cst_245 = arith.constant 0.000000e+00 : f32
    %714 = vector.broadcast %cst_245 : f32 to vector<8x1xf32>
    %715 = vector.extract_strided_slice %694 {offsets = [0, 0], sizes = [8, 255], strides = [1, 1]} : vector<8x256xf32> to vector<8x255xf32>
    %716 = tpu.concatenate %714, %715 in 1 : vector<8x1xf32>, vector<8x255xf32> -> vector<8x256xf32>
    %cst_246 = arith.constant 0.000000e+00 : f32
    %717 = vector.shape_cast %18 : vector<1x256xi1> to vector<1x256xi1>
    %718 = vector.broadcast %717 : vector<1x256xi1> to vector<8x256xi1>
    %719 = vector.broadcast %cst_246 : f32 to vector<8x256xf32>
    %720 = arith.select %718, %716, %719 : vector<8x256xi1>, vector<8x256xf32>
    %721 = vector.extract_strided_slice %694 {offsets = [0, 1], sizes = [8, 255], strides = [1, 1]} : vector<8x256xf32> to vector<8x255xf32>
    %cst_247 = arith.constant 0.000000e+00 : f32
    %722 = vector.broadcast %cst_247 : f32 to vector<8x1xf32>
    %723 = tpu.concatenate %721, %722 in 1 : vector<8x255xf32>, vector<8x1xf32> -> vector<8x256xf32>
    %cst_248 = arith.constant 0.000000e+00 : f32
    %724 = vector.shape_cast %20 : vector<1x256xi1> to vector<1x256xi1>
    %725 = vector.broadcast %724 : vector<1x256xi1> to vector<8x256xi1>
    %726 = vector.broadcast %cst_248 : f32 to vector<8x256xf32>
    %727 = arith.select %725, %723, %726 : vector<8x256xi1>, vector<8x256xf32>
    %728 = vector.extract_strided_slice %694 {offsets = [0, 15], sizes = [8, 241], strides = [1, 1]} : vector<8x256xf32> to vector<8x241xf32>
    %cst_249 = arith.constant 0.000000e+00 : f32
    %729 = vector.broadcast %cst_249 : f32 to vector<8x15xf32>
    %730 = tpu.concatenate %728, %729 in 1 : vector<8x241xf32>, vector<8x15xf32> -> vector<8x256xf32>
    %cst_250 = arith.constant 0.000000e+00 : f32
    %731 = vector.shape_cast %18 : vector<1x256xi1> to vector<1x256xi1>
    %732 = vector.broadcast %731 : vector<1x256xi1> to vector<8x256xi1>
    %733 = vector.broadcast %cst_250 : f32 to vector<8x256xf32>
    %734 = arith.select %732, %730, %733 : vector<8x256xi1>, vector<8x256xf32>
    %735 = vector.extract_strided_slice %694 {offsets = [0, 16], sizes = [8, 240], strides = [1, 1]} : vector<8x256xf32> to vector<8x240xf32>
    %cst_251 = arith.constant 0.000000e+00 : f32
    %736 = vector.broadcast %cst_251 : f32 to vector<8x16xf32>
    %737 = tpu.concatenate %735, %736 in 1 : vector<8x240xf32>, vector<8x16xf32> -> vector<8x256xf32>
    %738 = vector.extract_strided_slice %694 {offsets = [0, 17], sizes = [8, 239], strides = [1, 1]} : vector<8x256xf32> to vector<8x239xf32>
    %cst_252 = arith.constant 0.000000e+00 : f32
    %739 = vector.broadcast %cst_252 : f32 to vector<8x17xf32>
    %740 = tpu.concatenate %738, %739 in 1 : vector<8x239xf32>, vector<8x17xf32> -> vector<8x256xf32>
    %cst_253 = arith.constant 0.000000e+00 : f32
    %741 = vector.shape_cast %20 : vector<1x256xi1> to vector<1x256xi1>
    %742 = vector.broadcast %741 : vector<1x256xi1> to vector<8x256xi1>
    %743 = vector.broadcast %cst_253 : f32 to vector<8x256xf32>
    %744 = arith.select %742, %740, %743 : vector<8x256xi1>, vector<8x256xf32>
    %745 = tpu.concatenate %703, %706, %713, %720, %694, %727, %734, %737, %744 in 0 : vector<8x256xf32>, vector<8x256xf32>, vector<8x256xf32>, vector<8x256xf32>, vector<8x256xf32>, vector<8x256xf32>, vector<8x256xf32>, vector<8x256xf32>, vector<8x256xf32> -> vector<72x256xf32>
    %cst_254 = arith.constant dense<0.000000e+00> : vector<8x256xf32>
    %746 = tpu.matmul %695, %745, %cst_254 {dimension_numbers = #tpu.dot_dimension_numbers<[1], [0], [0], [1], [0, 0, 1, 1], [], []>} : vector<8x72xf32>, vector<72x256xf32>, vector<8x256xf32> -> vector<8x256xf32>
    %747 = vector.broadcast %696 : vector<8x1xf32> to vector<8x256xf32>
    %748 = arith.addf %746, %747 : vector<8x256xf32>
    %cst_255 = arith.constant dense<0.000000e+00> : vector<8xf32>
    %749 = vector.multi_reduction <add>, %748, %cst_255 [1] : vector<8x256xf32> to vector<8xf32>
    %750 = vector.shape_cast %749 : vector<8xf32> to vector<8x1xf32>
    %cst_256 = arith.constant 2.560000e+02 : f32
    %751 = vector.broadcast %cst_256 : f32 to vector<8x1xf32>
    %752 = arith.divf %750, %751 : vector<8x1xf32>
    %c0_257 = arith.constant 0 : index
    %c0_258 = arith.constant 0 : index
    %753 = vector.load %arg8[%c0_257, %c0_258] : memref<8x8xf32, #tpu.memory_space<vmem>>, vector<8x8xf32>
    %754 = vector.broadcast %752 : vector<8x1xf32> to vector<8x8xf32>
    %755 = arith.mulf %754, %753 : vector<8x8xf32>
    %cst_259 = arith.constant dense<0.000000e+00> : vector<8xf32>
    %756 = vector.multi_reduction <add>, %755, %cst_259 [0] : vector<8x8xf32> to vector<8xf32>
    %757 = vector.shape_cast %756 : vector<8xf32> to vector<1x8xf32>
    %c0_260 = arith.constant 0 : index
    %c0_261 = arith.constant 0 : index
    %758 = vector.load %arg9[%c0_260, %c0_261] : memref<1x8xf32, #tpu.memory_space<vmem>>, vector<1x8xf32>
    %759 = arith.addf %757, %758 : vector<1x8xf32>
    %cst_262 = arith.constant 0.000000e+00 : f32
    %760 = vector.broadcast %cst_262 : f32 to vector<1x8xf32>
    %761 = arith.maximumf %759, %760 : vector<1x8xf32>
    %c0_263 = arith.constant 0 : index
    %c0_264 = arith.constant 0 : index
    %762 = vector.load %arg10[%c0_263, %c0_264] : memref<8x8xf32, #tpu.memory_space<vmem>>, vector<8x8xf32>
    %763 = vector.broadcast %761 : vector<1x8xf32> to vector<8x8xf32>
    %764 = arith.mulf %762, %763 : vector<8x8xf32>
    %cst_265 = arith.constant dense<0.000000e+00> : vector<8xf32>
    %765 = vector.multi_reduction <add>, %764, %cst_265 [1] : vector<8x8xf32> to vector<8xf32>
    %766 = vector.shape_cast %765 : vector<8xf32> to vector<8x1xf32>
    %c0_266 = arith.constant 0 : index
    %c0_267 = arith.constant 0 : index
    %767 = vector.load %arg11[%c0_266, %c0_267] : memref<8x1xf32, #tpu.memory_space<vmem>>, vector<8x1xf32>
    %768 = arith.addf %766, %767 : vector<8x1xf32>
    %cst_268 = arith.constant 3.000000e+00 : f32
    %769 = vector.broadcast %cst_268 : f32 to vector<8x1xf32>
    %770 = arith.addf %768, %769 : vector<8x1xf32>
    %cst_269 = arith.constant 0.000000e+00 : f32
    %cst_270 = arith.constant 6.000000e+00 : f32
    %771 = vector.broadcast %cst_269 : f32 to vector<8x1xf32>
    %772 = arith.maximumf %771, %770 : vector<8x1xf32>
    %773 = vector.broadcast %cst_270 : f32 to vector<8x1xf32>
    %774 = arith.minimumf %773, %772 : vector<8x1xf32>
    %cst_271 = arith.constant 0.166666672 : f32
    %775 = vector.broadcast %cst_271 : f32 to vector<8x1xf32>
    %776 = arith.mulf %774, %775 : vector<8x1xf32>
    %777 = vector.broadcast %776 : vector<8x1xf32> to vector<8x256xf32>
    %778 = arith.mulf %748, %777 : vector<8x256xf32>
    %779 = arith.addf %600, %778 : vector<8x256xf32>
    %cst_272 = arith.constant dense<0.000000e+00> : vector<8xf32>
    %780 = vector.multi_reduction <add>, %779, %cst_272 [1] : vector<8x256xf32> to vector<8xf32>
    %781 = vector.shape_cast %780 : vector<8xf32> to vector<8x1xf32>
    %cst_273 = arith.constant 2.560000e+02 : f32
    %782 = vector.broadcast %cst_273 : f32 to vector<8x1xf32>
    %783 = arith.divf %781, %782 : vector<8x1xf32>
    %784 = vector.broadcast %783 : vector<8x1xf32> to vector<8x256xf32>
    %785 = arith.subf %779, %784 : vector<8x256xf32>
    %786 = arith.mulf %785, %785 : vector<8x256xf32>
    %cst_274 = arith.constant dense<0.000000e+00> : vector<8xf32>
    %787 = vector.multi_reduction <add>, %786, %cst_274 [1] : vector<8x256xf32> to vector<8xf32>
    %788 = vector.shape_cast %787 : vector<8xf32> to vector<8x1xf32>
    %cst_275 = arith.constant 2.560000e+02 : f32
    %789 = vector.broadcast %cst_275 : f32 to vector<8x1xf32>
    %790 = arith.divf %788, %789 : vector<8x1xf32>
    %791 = vector.broadcast %783 : vector<8x1xf32> to vector<8x256xf32>
    %792 = arith.subf %779, %791 : vector<8x256xf32>
    %cst_276 = arith.constant 9.99999974E-6 : f32
    %793 = vector.broadcast %cst_276 : f32 to vector<8x1xf32>
    %794 = arith.addf %790, %793 : vector<8x1xf32>
    %795 = math.rsqrt %794 : vector<8x1xf32>
    %796 = vector.broadcast %795 : vector<8x1xf32> to vector<8x256xf32>
    %797 = arith.mulf %792, %796 : vector<8x256xf32>
    %cst_277 = arith.constant 3.000000e+00 : f32
    %798 = vector.broadcast %cst_277 : f32 to vector<8x256xf32>
    %799 = arith.addf %797, %798 : vector<8x256xf32>
    %cst_278 = arith.constant 0.000000e+00 : f32
    %cst_279 = arith.constant 6.000000e+00 : f32
    %800 = vector.broadcast %cst_278 : f32 to vector<8x256xf32>
    %801 = arith.maximumf %800, %799 : vector<8x256xf32>
    %802 = vector.broadcast %cst_279 : f32 to vector<8x256xf32>
    %803 = arith.minimumf %802, %801 : vector<8x256xf32>
    %804 = arith.mulf %797, %803 : vector<8x256xf32>
    %cst_280 = arith.constant 0.166666672 : f32
    %805 = vector.broadcast %cst_280 : f32 to vector<8x256xf32>
    %806 = arith.mulf %804, %805 : vector<8x256xf32>
    %c0_281 = arith.constant 0 : index
    %c0_282 = arith.constant 0 : index
    %807 = vector.load %arg12[%c0_281, %c0_282] : memref<8x9xf32, #tpu.memory_space<vmem>>, vector<8x9xf32>
    %c0_283 = arith.constant 0 : index
    %c0_284 = arith.constant 0 : index
    %808 = vector.load %arg13[%c0_283, %c0_284] : memref<8x1xf32, #tpu.memory_space<vmem>>, vector<8x1xf32>
    %cst_285 = arith.constant 0.000000e+00 : f32
    %809 = vector.broadcast %cst_285 : f32 to vector<8x17xf32>
    %810 = vector.extract_strided_slice %806 {offsets = [0, 0], sizes = [8, 239], strides = [1, 1]} : vector<8x256xf32> to vector<8x239xf32>
    %811 = tpu.concatenate %809, %810 in 1 : vector<8x17xf32>, vector<8x239xf32> -> vector<8x256xf32>
    %cst_286 = arith.constant 0.000000e+00 : f32
    %812 = vector.shape_cast %18 : vector<1x256xi1> to vector<1x256xi1>
    %813 = vector.broadcast %812 : vector<1x256xi1> to vector<8x256xi1>
    %814 = vector.broadcast %cst_286 : f32 to vector<8x256xf32>
    %815 = arith.select %813, %811, %814 : vector<8x256xi1>, vector<8x256xf32>
    %cst_287 = arith.constant 0.000000e+00 : f32
    %816 = vector.broadcast %cst_287 : f32 to vector<8x16xf32>
    %817 = vector.extract_strided_slice %806 {offsets = [0, 0], sizes = [8, 240], strides = [1, 1]} : vector<8x256xf32> to vector<8x240xf32>
    %818 = tpu.concatenate %816, %817 in 1 : vector<8x16xf32>, vector<8x240xf32> -> vector<8x256xf32>
    %cst_288 = arith.constant 0.000000e+00 : f32
    %819 = vector.broadcast %cst_288 : f32 to vector<8x15xf32>
    %820 = vector.extract_strided_slice %806 {offsets = [0, 0], sizes = [8, 241], strides = [1, 1]} : vector<8x256xf32> to vector<8x241xf32>
    %821 = tpu.concatenate %819, %820 in 1 : vector<8x15xf32>, vector<8x241xf32> -> vector<8x256xf32>
    %cst_289 = arith.constant 0.000000e+00 : f32
    %822 = vector.shape_cast %20 : vector<1x256xi1> to vector<1x256xi1>
    %823 = vector.broadcast %822 : vector<1x256xi1> to vector<8x256xi1>
    %824 = vector.broadcast %cst_289 : f32 to vector<8x256xf32>
    %825 = arith.select %823, %821, %824 : vector<8x256xi1>, vector<8x256xf32>
    %cst_290 = arith.constant 0.000000e+00 : f32
    %826 = vector.broadcast %cst_290 : f32 to vector<8x1xf32>
    %827 = vector.extract_strided_slice %806 {offsets = [0, 0], sizes = [8, 255], strides = [1, 1]} : vector<8x256xf32> to vector<8x255xf32>
    %828 = tpu.concatenate %826, %827 in 1 : vector<8x1xf32>, vector<8x255xf32> -> vector<8x256xf32>
    %cst_291 = arith.constant 0.000000e+00 : f32
    %829 = vector.shape_cast %18 : vector<1x256xi1> to vector<1x256xi1>
    %830 = vector.broadcast %829 : vector<1x256xi1> to vector<8x256xi1>
    %831 = vector.broadcast %cst_291 : f32 to vector<8x256xf32>
    %832 = arith.select %830, %828, %831 : vector<8x256xi1>, vector<8x256xf32>
    %833 = vector.extract_strided_slice %806 {offsets = [0, 1], sizes = [8, 255], strides = [1, 1]} : vector<8x256xf32> to vector<8x255xf32>
    %cst_292 = arith.constant 0.000000e+00 : f32
    %834 = vector.broadcast %cst_292 : f32 to vector<8x1xf32>
    %835 = tpu.concatenate %833, %834 in 1 : vector<8x255xf32>, vector<8x1xf32> -> vector<8x256xf32>
    %cst_293 = arith.constant 0.000000e+00 : f32
    %836 = vector.shape_cast %20 : vector<1x256xi1> to vector<1x256xi1>
    %837 = vector.broadcast %836 : vector<1x256xi1> to vector<8x256xi1>
    %838 = vector.broadcast %cst_293 : f32 to vector<8x256xf32>
    %839 = arith.select %837, %835, %838 : vector<8x256xi1>, vector<8x256xf32>
    %840 = vector.extract_strided_slice %806 {offsets = [0, 15], sizes = [8, 241], strides = [1, 1]} : vector<8x256xf32> to vector<8x241xf32>
    %cst_294 = arith.constant 0.000000e+00 : f32
    %841 = vector.broadcast %cst_294 : f32 to vector<8x15xf32>
    %842 = tpu.concatenate %840, %841 in 1 : vector<8x241xf32>, vector<8x15xf32> -> vector<8x256xf32>
    %cst_295 = arith.constant 0.000000e+00 : f32
    %843 = vector.shape_cast %18 : vector<1x256xi1> to vector<1x256xi1>
    %844 = vector.broadcast %843 : vector<1x256xi1> to vector<8x256xi1>
    %845 = vector.broadcast %cst_295 : f32 to vector<8x256xf32>
    %846 = arith.select %844, %842, %845 : vector<8x256xi1>, vector<8x256xf32>
    %847 = vector.extract_strided_slice %806 {offsets = [0, 16], sizes = [8, 240], strides = [1, 1]} : vector<8x256xf32> to vector<8x240xf32>
    %cst_296 = arith.constant 0.000000e+00 : f32
    %848 = vector.broadcast %cst_296 : f32 to vector<8x16xf32>
    %849 = tpu.concatenate %847, %848 in 1 : vector<8x240xf32>, vector<8x16xf32> -> vector<8x256xf32>
    %850 = vector.extract_strided_slice %806 {offsets = [0, 17], sizes = [8, 239], strides = [1, 1]} : vector<8x256xf32> to vector<8x239xf32>
    %cst_297 = arith.constant 0.000000e+00 : f32
    %851 = vector.broadcast %cst_297 : f32 to vector<8x17xf32>
    %852 = tpu.concatenate %850, %851 in 1 : vector<8x239xf32>, vector<8x17xf32> -> vector<8x256xf32>
    %cst_298 = arith.constant 0.000000e+00 : f32
    %853 = vector.shape_cast %20 : vector<1x256xi1> to vector<1x256xi1>
    %854 = vector.broadcast %853 : vector<1x256xi1> to vector<8x256xi1>
    %855 = vector.broadcast %cst_298 : f32 to vector<8x256xf32>
    %856 = arith.select %854, %852, %855 : vector<8x256xi1>, vector<8x256xf32>
    %857 = vector.extract_strided_slice %807 {offsets = [0, 0], sizes = [8, 1], strides = [1, 1]} : vector<8x9xf32> to vector<8x1xf32>
    %858 = vector.broadcast %857 : vector<8x1xf32> to vector<8x256xf32>
    %859 = arith.mulf %858, %815 : vector<8x256xf32>
    %860 = vector.broadcast %808 : vector<8x1xf32> to vector<8x256xf32>
    %861 = arith.addf %860, %859 : vector<8x256xf32>
    %862 = vector.extract_strided_slice %807 {offsets = [0, 1], sizes = [8, 1], strides = [1, 1]} : vector<8x9xf32> to vector<8x1xf32>
    %863 = vector.broadcast %862 : vector<8x1xf32> to vector<8x256xf32>
    %864 = arith.mulf %863, %818 : vector<8x256xf32>
    %865 = arith.addf %861, %864 : vector<8x256xf32>
    %866 = vector.extract_strided_slice %807 {offsets = [0, 2], sizes = [8, 1], strides = [1, 1]} : vector<8x9xf32> to vector<8x1xf32>
    %867 = vector.broadcast %866 : vector<8x1xf32> to vector<8x256xf32>
    %868 = arith.mulf %867, %825 : vector<8x256xf32>
    %869 = arith.addf %865, %868 : vector<8x256xf32>
    %870 = vector.extract_strided_slice %807 {offsets = [0, 3], sizes = [8, 1], strides = [1, 1]} : vector<8x9xf32> to vector<8x1xf32>
    %871 = vector.broadcast %870 : vector<8x1xf32> to vector<8x256xf32>
    %872 = arith.mulf %871, %832 : vector<8x256xf32>
    %873 = arith.addf %869, %872 : vector<8x256xf32>
    %874 = vector.extract_strided_slice %807 {offsets = [0, 4], sizes = [8, 1], strides = [1, 1]} : vector<8x9xf32> to vector<8x1xf32>
    %875 = vector.broadcast %874 : vector<8x1xf32> to vector<8x256xf32>
    %876 = arith.mulf %875, %806 : vector<8x256xf32>
    %877 = arith.addf %873, %876 : vector<8x256xf32>
    %878 = vector.extract_strided_slice %807 {offsets = [0, 5], sizes = [8, 1], strides = [1, 1]} : vector<8x9xf32> to vector<8x1xf32>
    %879 = vector.broadcast %878 : vector<8x1xf32> to vector<8x256xf32>
    %880 = arith.mulf %879, %839 : vector<8x256xf32>
    %881 = arith.addf %877, %880 : vector<8x256xf32>
    %882 = vector.extract_strided_slice %807 {offsets = [0, 6], sizes = [8, 1], strides = [1, 1]} : vector<8x9xf32> to vector<8x1xf32>
    %883 = vector.broadcast %882 : vector<8x1xf32> to vector<8x256xf32>
    %884 = arith.mulf %883, %846 : vector<8x256xf32>
    %885 = arith.addf %881, %884 : vector<8x256xf32>
    %886 = vector.extract_strided_slice %807 {offsets = [0, 7], sizes = [8, 1], strides = [1, 1]} : vector<8x9xf32> to vector<8x1xf32>
    %887 = vector.broadcast %886 : vector<8x1xf32> to vector<8x256xf32>
    %888 = arith.mulf %887, %849 : vector<8x256xf32>
    %889 = arith.addf %885, %888 : vector<8x256xf32>
    %890 = vector.extract_strided_slice %807 {offsets = [0, 8], sizes = [8, 1], strides = [1, 1]} : vector<8x9xf32> to vector<8x1xf32>
    %891 = vector.broadcast %890 : vector<8x1xf32> to vector<8x256xf32>
    %892 = arith.mulf %891, %856 : vector<8x256xf32>
    %893 = arith.addf %889, %892 : vector<8x256xf32>
    %cst_299 = arith.constant dense<0.000000e+00> : vector<8xf32>
    %894 = vector.multi_reduction <add>, %893, %cst_299 [1] : vector<8x256xf32> to vector<8xf32>
    %895 = vector.shape_cast %894 : vector<8xf32> to vector<8x1xf32>
    %cst_300 = arith.constant 2.560000e+02 : f32
    %896 = vector.broadcast %cst_300 : f32 to vector<8x1xf32>
    %897 = arith.divf %895, %896 : vector<8x1xf32>
    %898 = vector.broadcast %897 : vector<8x1xf32> to vector<8x256xf32>
    %899 = arith.subf %893, %898 : vector<8x256xf32>
    %900 = arith.mulf %899, %899 : vector<8x256xf32>
    %cst_301 = arith.constant dense<0.000000e+00> : vector<8xf32>
    %901 = vector.multi_reduction <add>, %900, %cst_301 [1] : vector<8x256xf32> to vector<8xf32>
    %902 = vector.shape_cast %901 : vector<8xf32> to vector<8x1xf32>
    %cst_302 = arith.constant 2.560000e+02 : f32
    %903 = vector.broadcast %cst_302 : f32 to vector<8x1xf32>
    %904 = arith.divf %902, %903 : vector<8x1xf32>
    %905 = vector.broadcast %897 : vector<8x1xf32> to vector<8x256xf32>
    %906 = arith.subf %893, %905 : vector<8x256xf32>
    %cst_303 = arith.constant 9.99999974E-6 : f32
    %907 = vector.broadcast %cst_303 : f32 to vector<8x1xf32>
    %908 = arith.addf %904, %907 : vector<8x1xf32>
    %909 = math.rsqrt %908 : vector<8x1xf32>
    %910 = vector.broadcast %909 : vector<8x1xf32> to vector<8x256xf32>
    %911 = arith.mulf %906, %910 : vector<8x256xf32>
    %cst_304 = arith.constant 3.000000e+00 : f32
    %912 = vector.broadcast %cst_304 : f32 to vector<8x256xf32>
    %913 = arith.addf %911, %912 : vector<8x256xf32>
    %cst_305 = arith.constant 0.000000e+00 : f32
    %cst_306 = arith.constant 6.000000e+00 : f32
    %914 = vector.broadcast %cst_305 : f32 to vector<8x256xf32>
    %915 = arith.maximumf %914, %913 : vector<8x256xf32>
    %916 = vector.broadcast %cst_306 : f32 to vector<8x256xf32>
    %917 = arith.minimumf %916, %915 : vector<8x256xf32>
    %918 = arith.mulf %911, %917 : vector<8x256xf32>
    %cst_307 = arith.constant 0.166666672 : f32
    %919 = vector.broadcast %cst_307 : f32 to vector<8x256xf32>
    %920 = arith.mulf %918, %919 : vector<8x256xf32>
    %c0_308 = arith.constant 0 : index
    %c0_309 = arith.constant 0 : index
    %921 = vector.load %arg14[%c0_308, %c0_309] : memref<8x72xf32, #tpu.memory_space<vmem>>, vector<8x72xf32>
    %c0_310 = arith.constant 0 : index
    %c0_311 = arith.constant 0 : index
    %922 = vector.load %arg15[%c0_310, %c0_311] : memref<8x1xf32, #tpu.memory_space<vmem>>, vector<8x1xf32>
    %cst_312 = arith.constant 0.000000e+00 : f32
    %923 = vector.broadcast %cst_312 : f32 to vector<8x17xf32>
    %924 = vector.extract_strided_slice %920 {offsets = [0, 0], sizes = [8, 239], strides = [1, 1]} : vector<8x256xf32> to vector<8x239xf32>
    %925 = tpu.concatenate %923, %924 in 1 : vector<8x17xf32>, vector<8x239xf32> -> vector<8x256xf32>
    %cst_313 = arith.constant 0.000000e+00 : f32
    %926 = vector.shape_cast %18 : vector<1x256xi1> to vector<1x256xi1>
    %927 = vector.broadcast %926 : vector<1x256xi1> to vector<8x256xi1>
    %928 = vector.broadcast %cst_313 : f32 to vector<8x256xf32>
    %929 = arith.select %927, %925, %928 : vector<8x256xi1>, vector<8x256xf32>
    %cst_314 = arith.constant 0.000000e+00 : f32
    %930 = vector.broadcast %cst_314 : f32 to vector<8x16xf32>
    %931 = vector.extract_strided_slice %920 {offsets = [0, 0], sizes = [8, 240], strides = [1, 1]} : vector<8x256xf32> to vector<8x240xf32>
    %932 = tpu.concatenate %930, %931 in 1 : vector<8x16xf32>, vector<8x240xf32> -> vector<8x256xf32>
    %cst_315 = arith.constant 0.000000e+00 : f32
    %933 = vector.broadcast %cst_315 : f32 to vector<8x15xf32>
    %934 = vector.extract_strided_slice %920 {offsets = [0, 0], sizes = [8, 241], strides = [1, 1]} : vector<8x256xf32> to vector<8x241xf32>
    %935 = tpu.concatenate %933, %934 in 1 : vector<8x15xf32>, vector<8x241xf32> -> vector<8x256xf32>
    %cst_316 = arith.constant 0.000000e+00 : f32
    %936 = vector.shape_cast %20 : vector<1x256xi1> to vector<1x256xi1>
    %937 = vector.broadcast %936 : vector<1x256xi1> to vector<8x256xi1>
    %938 = vector.broadcast %cst_316 : f32 to vector<8x256xf32>
    %939 = arith.select %937, %935, %938 : vector<8x256xi1>, vector<8x256xf32>
    %cst_317 = arith.constant 0.000000e+00 : f32
    %940 = vector.broadcast %cst_317 : f32 to vector<8x1xf32>
    %941 = vector.extract_strided_slice %920 {offsets = [0, 0], sizes = [8, 255], strides = [1, 1]} : vector<8x256xf32> to vector<8x255xf32>
    %942 = tpu.concatenate %940, %941 in 1 : vector<8x1xf32>, vector<8x255xf32> -> vector<8x256xf32>
    %cst_318 = arith.constant 0.000000e+00 : f32
    %943 = vector.shape_cast %18 : vector<1x256xi1> to vector<1x256xi1>
    %944 = vector.broadcast %943 : vector<1x256xi1> to vector<8x256xi1>
    %945 = vector.broadcast %cst_318 : f32 to vector<8x256xf32>
    %946 = arith.select %944, %942, %945 : vector<8x256xi1>, vector<8x256xf32>
    %947 = vector.extract_strided_slice %920 {offsets = [0, 1], sizes = [8, 255], strides = [1, 1]} : vector<8x256xf32> to vector<8x255xf32>
    %cst_319 = arith.constant 0.000000e+00 : f32
    %948 = vector.broadcast %cst_319 : f32 to vector<8x1xf32>
    %949 = tpu.concatenate %947, %948 in 1 : vector<8x255xf32>, vector<8x1xf32> -> vector<8x256xf32>
    %cst_320 = arith.constant 0.000000e+00 : f32
    %950 = vector.shape_cast %20 : vector<1x256xi1> to vector<1x256xi1>
    %951 = vector.broadcast %950 : vector<1x256xi1> to vector<8x256xi1>
    %952 = vector.broadcast %cst_320 : f32 to vector<8x256xf32>
    %953 = arith.select %951, %949, %952 : vector<8x256xi1>, vector<8x256xf32>
    %954 = vector.extract_strided_slice %920 {offsets = [0, 15], sizes = [8, 241], strides = [1, 1]} : vector<8x256xf32> to vector<8x241xf32>
    %cst_321 = arith.constant 0.000000e+00 : f32
    %955 = vector.broadcast %cst_321 : f32 to vector<8x15xf32>
    %956 = tpu.concatenate %954, %955 in 1 : vector<8x241xf32>, vector<8x15xf32> -> vector<8x256xf32>
    %cst_322 = arith.constant 0.000000e+00 : f32
    %957 = vector.shape_cast %18 : vector<1x256xi1> to vector<1x256xi1>
    %958 = vector.broadcast %957 : vector<1x256xi1> to vector<8x256xi1>
    %959 = vector.broadcast %cst_322 : f32 to vector<8x256xf32>
    %960 = arith.select %958, %956, %959 : vector<8x256xi1>, vector<8x256xf32>
    %961 = vector.extract_strided_slice %920 {offsets = [0, 16], sizes = [8, 240], strides = [1, 1]} : vector<8x256xf32> to vector<8x240xf32>
    %cst_323 = arith.constant 0.000000e+00 : f32
    %962 = vector.broadcast %cst_323 : f32 to vector<8x16xf32>
    %963 = tpu.concatenate %961, %962 in 1 : vector<8x240xf32>, vector<8x16xf32> -> vector<8x256xf32>
    %964 = vector.extract_strided_slice %920 {offsets = [0, 17], sizes = [8, 239], strides = [1, 1]} : vector<8x256xf32> to vector<8x239xf32>
    %cst_324 = arith.constant 0.000000e+00 : f32
    %965 = vector.broadcast %cst_324 : f32 to vector<8x17xf32>
    %966 = tpu.concatenate %964, %965 in 1 : vector<8x239xf32>, vector<8x17xf32> -> vector<8x256xf32>
    %cst_325 = arith.constant 0.000000e+00 : f32
    %967 = vector.shape_cast %20 : vector<1x256xi1> to vector<1x256xi1>
    %968 = vector.broadcast %967 : vector<1x256xi1> to vector<8x256xi1>
    %969 = vector.broadcast %cst_325 : f32 to vector<8x256xf32>
    %970 = arith.select %968, %966, %969 : vector<8x256xi1>, vector<8x256xf32>
    %971 = tpu.concatenate %929, %932, %939, %946, %920, %953, %960, %963, %970 in 0 : vector<8x256xf32>, vector<8x256xf32>, vector<8x256xf32>, vector<8x256xf32>, vector<8x256xf32>, vector<8x256xf32>, vector<8x256xf32>, vector<8x256xf32>, vector<8x256xf32> -> vector<72x256xf32>
    %cst_326 = arith.constant dense<0.000000e+00> : vector<8x256xf32>
    %972 = tpu.matmul %921, %971, %cst_326 {dimension_numbers = #tpu.dot_dimension_numbers<[1], [0], [0], [1], [0, 0, 1, 1], [], []>} : vector<8x72xf32>, vector<72x256xf32>, vector<8x256xf32> -> vector<8x256xf32>
    %973 = vector.broadcast %922 : vector<8x1xf32> to vector<8x256xf32>
    %974 = arith.addf %972, %973 : vector<8x256xf32>
    %975 = arith.addf %779, %974 : vector<8x256xf32>
    %cst_327 = arith.constant dense<0.000000e+00> : vector<8xf32>
    %976 = vector.multi_reduction <add>, %975, %cst_327 [1] : vector<8x256xf32> to vector<8xf32>
    %977 = vector.shape_cast %976 : vector<8xf32> to vector<8x1xf32>
    %cst_328 = arith.constant 2.560000e+02 : f32
    %978 = vector.broadcast %cst_328 : f32 to vector<8x1xf32>
    %979 = arith.divf %977, %978 : vector<8x1xf32>
    %980 = vector.broadcast %979 : vector<8x1xf32> to vector<8x256xf32>
    %981 = arith.subf %975, %980 : vector<8x256xf32>
    %982 = arith.mulf %981, %981 : vector<8x256xf32>
    %cst_329 = arith.constant dense<0.000000e+00> : vector<8xf32>
    %983 = vector.multi_reduction <add>, %982, %cst_329 [1] : vector<8x256xf32> to vector<8xf32>
    %984 = vector.shape_cast %983 : vector<8xf32> to vector<8x1xf32>
    %cst_330 = arith.constant 2.560000e+02 : f32
    %985 = vector.broadcast %cst_330 : f32 to vector<8x1xf32>
    %986 = arith.divf %984, %985 : vector<8x1xf32>
    %987 = vector.broadcast %979 : vector<8x1xf32> to vector<8x256xf32>
    %988 = arith.subf %975, %987 : vector<8x256xf32>
    %cst_331 = arith.constant 9.99999974E-6 : f32
    %989 = vector.broadcast %cst_331 : f32 to vector<8x1xf32>
    %990 = arith.addf %986, %989 : vector<8x1xf32>
    %991 = math.rsqrt %990 : vector<8x1xf32>
    %992 = vector.broadcast %991 : vector<8x1xf32> to vector<8x256xf32>
    %993 = arith.mulf %988, %992 : vector<8x256xf32>
    %cst_332 = arith.constant 3.000000e+00 : f32
    %994 = vector.broadcast %cst_332 : f32 to vector<8x256xf32>
    %995 = arith.addf %993, %994 : vector<8x256xf32>
    %cst_333 = arith.constant 0.000000e+00 : f32
    %cst_334 = arith.constant 6.000000e+00 : f32
    %996 = vector.broadcast %cst_333 : f32 to vector<8x256xf32>
    %997 = arith.maximumf %996, %995 : vector<8x256xf32>
    %998 = vector.broadcast %cst_334 : f32 to vector<8x256xf32>
    %999 = arith.minimumf %998, %997 : vector<8x256xf32>
    %1000 = arith.mulf %993, %999 : vector<8x256xf32>
    %cst_335 = arith.constant 0.166666672 : f32
    %1001 = vector.broadcast %cst_335 : f32 to vector<8x256xf32>
    %1002 = arith.mulf %1000, %1001 : vector<8x256xf32>
    %c0_336 = arith.constant 0 : index
    %c0_337 = arith.constant 0 : index
    %1003 = vector.load %arg16[%c0_336, %c0_337] : memref<16x72xf32, #tpu.memory_space<vmem>>, vector<16x72xf32>
    %c0_338 = arith.constant 0 : index
    %c0_339 = arith.constant 0 : index
    %1004 = vector.load %arg17[%c0_338, %c0_339] : memref<16x1xf32, #tpu.memory_space<vmem>>, vector<16x1xf32>
    %cst_340 = arith.constant 0.000000e+00 : f32
    %1005 = vector.broadcast %cst_340 : f32 to vector<8x17xf32>
    %1006 = vector.extract_strided_slice %1002 {offsets = [0, 0], sizes = [8, 239], strides = [1, 1]} : vector<8x256xf32> to vector<8x239xf32>
    %1007 = tpu.concatenate %1005, %1006 in 1 : vector<8x17xf32>, vector<8x239xf32> -> vector<8x256xf32>
    %cst_341 = arith.constant 0.000000e+00 : f32
    %1008 = vector.shape_cast %18 : vector<1x256xi1> to vector<1x256xi1>
    %1009 = vector.broadcast %1008 : vector<1x256xi1> to vector<8x256xi1>
    %1010 = vector.broadcast %cst_341 : f32 to vector<8x256xf32>
    %1011 = arith.select %1009, %1007, %1010 : vector<8x256xi1>, vector<8x256xf32>
    %cst_342 = arith.constant 0.000000e+00 : f32
    %1012 = vector.broadcast %cst_342 : f32 to vector<8x16xf32>
    %1013 = vector.extract_strided_slice %1002 {offsets = [0, 0], sizes = [8, 240], strides = [1, 1]} : vector<8x256xf32> to vector<8x240xf32>
    %1014 = tpu.concatenate %1012, %1013 in 1 : vector<8x16xf32>, vector<8x240xf32> -> vector<8x256xf32>
    %cst_343 = arith.constant 0.000000e+00 : f32
    %1015 = vector.broadcast %cst_343 : f32 to vector<8x15xf32>
    %1016 = vector.extract_strided_slice %1002 {offsets = [0, 0], sizes = [8, 241], strides = [1, 1]} : vector<8x256xf32> to vector<8x241xf32>
    %1017 = tpu.concatenate %1015, %1016 in 1 : vector<8x15xf32>, vector<8x241xf32> -> vector<8x256xf32>
    %cst_344 = arith.constant 0.000000e+00 : f32
    %1018 = vector.shape_cast %20 : vector<1x256xi1> to vector<1x256xi1>
    %1019 = vector.broadcast %1018 : vector<1x256xi1> to vector<8x256xi1>
    %1020 = vector.broadcast %cst_344 : f32 to vector<8x256xf32>
    %1021 = arith.select %1019, %1017, %1020 : vector<8x256xi1>, vector<8x256xf32>
    %cst_345 = arith.constant 0.000000e+00 : f32
    %1022 = vector.broadcast %cst_345 : f32 to vector<8x1xf32>
    %1023 = vector.extract_strided_slice %1002 {offsets = [0, 0], sizes = [8, 255], strides = [1, 1]} : vector<8x256xf32> to vector<8x255xf32>
    %1024 = tpu.concatenate %1022, %1023 in 1 : vector<8x1xf32>, vector<8x255xf32> -> vector<8x256xf32>
    %cst_346 = arith.constant 0.000000e+00 : f32
    %1025 = vector.shape_cast %18 : vector<1x256xi1> to vector<1x256xi1>
    %1026 = vector.broadcast %1025 : vector<1x256xi1> to vector<8x256xi1>
    %1027 = vector.broadcast %cst_346 : f32 to vector<8x256xf32>
    %1028 = arith.select %1026, %1024, %1027 : vector<8x256xi1>, vector<8x256xf32>
    %1029 = vector.extract_strided_slice %1002 {offsets = [0, 1], sizes = [8, 255], strides = [1, 1]} : vector<8x256xf32> to vector<8x255xf32>
    %cst_347 = arith.constant 0.000000e+00 : f32
    %1030 = vector.broadcast %cst_347 : f32 to vector<8x1xf32>
    %1031 = tpu.concatenate %1029, %1030 in 1 : vector<8x255xf32>, vector<8x1xf32> -> vector<8x256xf32>
    %cst_348 = arith.constant 0.000000e+00 : f32
    %1032 = vector.shape_cast %20 : vector<1x256xi1> to vector<1x256xi1>
    %1033 = vector.broadcast %1032 : vector<1x256xi1> to vector<8x256xi1>
    %1034 = vector.broadcast %cst_348 : f32 to vector<8x256xf32>
    %1035 = arith.select %1033, %1031, %1034 : vector<8x256xi1>, vector<8x256xf32>
    %1036 = vector.extract_strided_slice %1002 {offsets = [0, 15], sizes = [8, 241], strides = [1, 1]} : vector<8x256xf32> to vector<8x241xf32>
    %cst_349 = arith.constant 0.000000e+00 : f32
    %1037 = vector.broadcast %cst_349 : f32 to vector<8x15xf32>
    %1038 = tpu.concatenate %1036, %1037 in 1 : vector<8x241xf32>, vector<8x15xf32> -> vector<8x256xf32>
    %cst_350 = arith.constant 0.000000e+00 : f32
    %1039 = vector.shape_cast %18 : vector<1x256xi1> to vector<1x256xi1>
    %1040 = vector.broadcast %1039 : vector<1x256xi1> to vector<8x256xi1>
    %1041 = vector.broadcast %cst_350 : f32 to vector<8x256xf32>
    %1042 = arith.select %1040, %1038, %1041 : vector<8x256xi1>, vector<8x256xf32>
    %1043 = vector.extract_strided_slice %1002 {offsets = [0, 16], sizes = [8, 240], strides = [1, 1]} : vector<8x256xf32> to vector<8x240xf32>
    %cst_351 = arith.constant 0.000000e+00 : f32
    %1044 = vector.broadcast %cst_351 : f32 to vector<8x16xf32>
    %1045 = tpu.concatenate %1043, %1044 in 1 : vector<8x240xf32>, vector<8x16xf32> -> vector<8x256xf32>
    %1046 = vector.extract_strided_slice %1002 {offsets = [0, 17], sizes = [8, 239], strides = [1, 1]} : vector<8x256xf32> to vector<8x239xf32>
    %cst_352 = arith.constant 0.000000e+00 : f32
    %1047 = vector.broadcast %cst_352 : f32 to vector<8x17xf32>
    %1048 = tpu.concatenate %1046, %1047 in 1 : vector<8x239xf32>, vector<8x17xf32> -> vector<8x256xf32>
    %cst_353 = arith.constant 0.000000e+00 : f32
    %1049 = vector.shape_cast %20 : vector<1x256xi1> to vector<1x256xi1>
    %1050 = vector.broadcast %1049 : vector<1x256xi1> to vector<8x256xi1>
    %1051 = vector.broadcast %cst_353 : f32 to vector<8x256xf32>
    %1052 = arith.select %1050, %1048, %1051 : vector<8x256xi1>, vector<8x256xf32>
    %1053 = tpu.concatenate %1011, %1014, %1021, %1028, %1002, %1035, %1042, %1045, %1052 in 0 : vector<8x256xf32>, vector<8x256xf32>, vector<8x256xf32>, vector<8x256xf32>, vector<8x256xf32>, vector<8x256xf32>, vector<8x256xf32>, vector<8x256xf32>, vector<8x256xf32> -> vector<72x256xf32>
    %cst_354 = arith.constant dense<0.000000e+00> : vector<16x256xf32>
    %1054 = tpu.matmul %1003, %1053, %cst_354 {dimension_numbers = #tpu.dot_dimension_numbers<[1], [0], [0], [1], [0, 0, 1, 1], [], []>} : vector<16x72xf32>, vector<72x256xf32>, vector<16x256xf32> -> vector<16x256xf32>
    %1055 = vector.broadcast %1004 : vector<16x1xf32> to vector<16x256xf32>
    %1056 = arith.addf %1054, %1055 : vector<16x256xf32>
    %c0_355 = arith.constant 0 : index
    %c0_356 = arith.constant 0 : index
    %1057 = vector.load %arg18[%c0_355, %c0_356] : memref<16x8xf32, #tpu.memory_space<vmem>>, vector<16x8xf32>
    %cst_357 = arith.constant dense<0.000000e+00> : vector<16x256xf32>
    %1058 = tpu.matmul %1057, %975, %cst_357 {dimension_numbers = #tpu.dot_dimension_numbers<[1], [0], [0], [1], [0, 0, 1, 1], [], []>} : vector<16x8xf32>, vector<8x256xf32>, vector<16x256xf32> -> vector<16x256xf32>
    %c0_358 = arith.constant 0 : index
    %c0_359 = arith.constant 0 : index
    %1059 = vector.load %arg19[%c0_358, %c0_359] : memref<16x1xf32, #tpu.memory_space<vmem>>, vector<16x1xf32>
    %1060 = vector.broadcast %1059 : vector<16x1xf32> to vector<16x256xf32>
    %1061 = arith.addf %1058, %1060 : vector<16x256xf32>
    %1062 = arith.addf %1056, %1061 : vector<16x256xf32>
    %cst_360 = arith.constant dense<0.000000e+00> : vector<16x64xf32>
    %1063 = tpu.matmul %1062, %21, %cst_360 {dimension_numbers = #tpu.dot_dimension_numbers<[1], [0], [0], [1], [0, 0, 1, 1], [], []>} : vector<16x256xf32>, vector<256x64xf32>, vector<16x64xf32> -> vector<16x64xf32>
    %cst_361 = arith.constant dense<0.000000e+00> : vector<16xf32>
    %1064 = vector.multi_reduction <add>, %1063, %cst_361 [1] : vector<16x64xf32> to vector<16xf32>
    %1065 = vector.shape_cast %1064 : vector<16xf32> to vector<16x1xf32>
    %cst_362 = arith.constant 6.400000e+01 : f32
    %1066 = vector.broadcast %cst_362 : f32 to vector<16x1xf32>
    %1067 = arith.divf %1065, %1066 : vector<16x1xf32>
    %1068 = tpu.concatenate %544, %1067 in 1 : vector<16x1xf32>, vector<16x1xf32> -> vector<16x2xf32>
    %c0_363 = arith.constant 0 : index
    %c0_364 = arith.constant 0 : index
    %1069 = vector.load %arg20[%c0_363, %c0_364] : memref<32x16xf32, #tpu.memory_space<vmem>>, vector<32x16xf32>
    %cst_365 = arith.constant dense<0.000000e+00> : vector<32x2xf32>
    %1070 = tpu.matmul %1069, %1068, %cst_365 {dimension_numbers = #tpu.dot_dimension_numbers<[1], [0], [0], [1], [0, 0, 1, 1], [], []>} : vector<32x16xf32>, vector<16x2xf32>, vector<32x2xf32> -> vector<32x2xf32>
    %c0_366 = arith.constant 0 : index
    %c0_367 = arith.constant 0 : index
    %1071 = vector.load %arg21[%c0_366, %c0_367] : memref<32x1xf32, #tpu.memory_space<vmem>>, vector<32x1xf32>
    %1072 = vector.broadcast %1071 : vector<32x1xf32> to vector<32x2xf32>
    %1073 = arith.addf %1070, %1072 : vector<32x2xf32>
    %c0_368 = arith.constant 0 : index
    %c0_369 = arith.constant 0 : index
    %1074 = vector.load %arg22[%c0_368, %c0_369] : memref<32x2xf32, #tpu.memory_space<vmem>>, vector<32x2xf32>
    tpu.vector_store %arg22[%c0_368, %c0_369], %1073 {strides = array<i32>} : memref<32x2xf32, #tpu.memory_space<vmem>>, vector<32x2xf32>,
    return
  }
}

</mosaic_0001>

<llo_original>
// kernel: modelparse_forward.1
$region0: #{modelparse_forward.1}
  #allocation0 [shape = 'u32[]', space=smem, size = 0x4, offset = 0x4, fixed_abs, tag = 'smem constant byte address 0x4 - core index']
  #allocation1 [shape = 'u32[144,128]{1,0:T(1,128)}', space=vmem, size = 0x12000, scoped, tag = 'internal scratch']
  %s0 = inlined_call_operand.vmem [shape: f32[2,8,256], index: 0, kind: input, shape index: {}]
  %s1 = inlined_call_operand.vmem [shape: f32[256,64], index: 1, kind: input, shape index: {}]
  %s2 = inlined_call_operand.vmem [shape: f32[8,72], index: 2, kind: input, shape index: {}]
  %s3 = inlined_call_operand.vmem [shape: f32[8,1], index: 3, kind: input, shape index: {}]
  %s4 = inlined_call_operand.vmem [shape: f32[8,72], index: 4, kind: input, shape index: {}]
  %s5 = inlined_call_operand.vmem [shape: f32[8,1], index: 5, kind: input, shape index: {}]
  %s6 = inlined_call_operand.vmem [shape: f32[8,72], index: 6, kind: input, shape index: {}]
  %s7 = inlined_call_operand.vmem [shape: f32[8,1], index: 7, kind: input, shape index: {}]
  %s8 = inlined_call_operand.vmem [shape: f32[8,8], index: 8, kind: input, shape index: {}]
  %s9 = inlined_call_operand.vmem [shape: f32[1,8], index: 9, kind: input, shape index: {}]
  %s10 = inlined_call_operand.vmem [shape: f32[8,8], index: 10, kind: input, shape index: {}]
  %s11 = inlined_call_operand.vmem [shape: f32[8,1], index: 11, kind: input, shape index: {}]
  %s12 = inlined_call_operand.vmem [shape: f32[8,9], index: 12, kind: input, shape index: {}]
  %s13 = inlined_call_operand.vmem [shape: f32[8,1], index: 13, kind: input, shape index: {}]
  %s14 = inlined_call_operand.vmem [shape: f32[8,72], index: 14, kind: input, shape index: {}]
  %s15 = inlined_call_operand.vmem [shape: f32[8,1], index: 15, kind: input, shape index: {}]
  %s16 = inlined_call_operand.vmem [shape: f32[16,72], index: 16, kind: input, shape index: {}]
  %s17 = inlined_call_operand.vmem [shape: f32[16,1], index: 17, kind: input, shape index: {}]
  %s18 = inlined_call_operand.vmem [shape: f32[16,8], index: 18, kind: input, shape index: {}]
  %s19 = inlined_call_operand.vmem [shape: f32[16,1], index: 19, kind: input, shape index: {}]
  %s20 = inlined_call_operand.vmem [shape: f32[32,16], index: 20, kind: input, shape index: {}]
  %s21 = inlined_call_operand.vmem [shape: f32[32,1], index: 21, kind: input, shape index: {}]
  %s22 = inlined_call_operand.vmem [shape: f32[32,2], index: 22, kind: output, shape index: {}]
  %s23 = sld [smem:[#allocation0]]
  $region98: #{modelparse_forward.1} parent=0
    _
  %s25 = ssub.s32 1, %s23
  %s26 = scalar_select 0, %s25, %s23
  // Predicated region
  $region2: #{modelparse_forward.1} parent=0 // pred_check
    _
  $region3: #{modelparse_forward.1} parent=0 // pred_check_branch
    %28 = sbr.rel (0) target = $region5
  $region4: #{modelparse_forward.1} parent=0 // pred_region
    _
  $region5: #{modelparse_forward.1} parent=0 // pred_fallthru
    _
  // Predicated region
  $region6: #{modelparse_forward.1} parent=0 // pred_check
    _
  $region7: #{modelparse_forward.1} parent=0 // pred_check_branch
    %30 = sbr.rel (0) target = $region9
  $region8: #{modelparse_forward.1} parent=0 // pred_region
    _
  $region9: #{modelparse_forward.1} parent=0 // pred_fallthru
    _
  // Predicated region
  $region10: #{modelparse_forward.1} parent=0 // pred_check
    _
  $region11: #{modelparse_forward.1} parent=0 // pred_check_branch
    %32 = sbr.rel (0) target = $region13
  $region12: #{modelparse_forward.1} parent=0 // pred_region
    _
  $region13: #{modelparse_forward.1} parent=0 // pred_fallthru
    _
  // Predicated region
  $region14: #{modelparse_forward.1} parent=0 // pred_check
    _
  $region15: #{modelparse_forward.1} parent=0 // pred_check_branch
    %34 = sbr.rel (0) target = $region17
  $region16: #{modelparse_forward.1} parent=0 // pred_region
    _
  $region17: #{modelparse_forward.1} parent=0 // pred_fallthru
    _
  // Predicated region
  $region18: #{modelparse_forward.1} parent=0 // pred_check
    _
  $region19: #{modelparse_forward.1} parent=0 // pred_check_branch
    %36 = sbr.rel (0) target = $region21
  $region20: #{modelparse_forward.1} parent=0 // pred_region
    _
  $region21: #{modelparse_forward.1} parent=0 // pred_fallthru
    _
  // Predicated region
  $region22: #{modelparse_forward.1} parent=0 // pred_check
    _
  $region23: #{modelparse_forward.1} parent=0 // pred_check_branch
    %38 = sbr.rel (0) target = $region25
  $region24: #{modelparse_forward.1} parent=0 // pred_region
    _
  $region25: #{modelparse_forward.1} parent=0 // pred_fallthru
    _
  // Predicated region
  $region26: #{modelparse_forward.1} parent=0 // pred_check
    _
  $region27: #{modelparse_forward.1} parent=0 // pred_check_branch
    %40 = sbr.rel (0) target = $region29
  $region28: #{modelparse_forward.1} parent=0 // pred_region
    _
  $region29: #{modelparse_forward.1} parent=0 // pred_fallthru
    _
  // Predicated region
  $region30: #{modelparse_forward.1} parent=0 // pred_check
    _
  $region31: #{modelparse_forward.1} parent=0 // pred_check_branch
    %42 = sbr.rel (0) target = $region33
  $region32: #{modelparse_forward.1} parent=0 // pred_region
    _
  $region33: #{modelparse_forward.1} parent=0 // pred_fallthru
    _
  // Predicated region
  $region34: #{modelparse_forward.1} parent=0 // pred_check
    _
  $region35: #{modelparse_forward.1} parent=0 // pred_check_branch
    %44 = sbr.rel (0) target = $region37
  $region36: #{modelparse_forward.1} parent=0 // pred_region
    _
  $region37: #{modelparse_forward.1} parent=0 // pred_fallthru
    _
  // Predicated region
  $region38: #{modelparse_forward.1} parent=0 // pred_check
    _
  $region39: #{modelparse_forward.1} parent=0 // pred_check_branch
    %46 = sbr.rel (0) target = $region41
  $region40: #{modelparse_forward.1} parent=0 // pred_region
    _
  $region41: #{modelparse_forward.1} parent=0 // pred_fallthru
    _
  // Predicated region
  $region42: #{modelparse_forward.1} parent=0 // pred_check
    _
  $region43: #{modelparse_forward.1} parent=0 // pred_check_branch
    %48 = sbr.rel (0) target = $region45
  $region44: #{modelparse_forward.1} parent=0 // pred_region
    _
  $region45: #{modelparse_forward.1} parent=0 // pred_fallthru
    _
  // Predicated region
  $region46: #{modelparse_forward.1} parent=0 // pred_check
    _
  $region47: #{modelparse_forward.1} parent=0 // pred_check_branch
    %50 = sbr.rel (0) target = $region49
  $region48: #{modelparse_forward.1} parent=0 // pred_region
    _
  $region49: #{modelparse_forward.1} parent=0 // pred_fallthru
    _
  // Predicated region
  $region50: #{modelparse_forward.1} parent=0 // pred_check
    _
  $region51: #{modelparse_forward.1} parent=0 // pred_check_branch
    %52 = sbr.rel (0) target = $region53
  $region52: #{modelparse_forward.1} parent=0 // pred_region
    _
  $region53: #{modelparse_forward.1} parent=0 // pred_fallthru
    _
  // Predicated region
  $region54: #{modelparse_forward.1} parent=0 // pred_check
    _
  $region55: #{modelparse_forward.1} parent=0 // pred_check_branch
    %54 = sbr.rel (0) target = $region57
  $region56: #{modelparse_forward.1} parent=0 // pred_region
    _
  $region57: #{modelparse_forward.1} parent=0 // pred_fallthru
    _
  // Predicated region
  $region58: #{modelparse_forward.1} parent=0 // pred_check
    _
  $region59: #{modelparse_forward.1} parent=0 // pred_check_branch
    %56 = sbr.rel (0) target = $region61
  $region60: #{modelparse_forward.1} parent=0 // pred_region
    _
  $region61: #{modelparse_forward.1} parent=0 // pred_fallthru
    _
  // Predicated region
  $region62: #{modelparse_forward.1} parent=0 // pred_check
    _
  $region63: #{modelparse_forward.1} parent=0 // pred_check_branch
    %58 = sbr.rel (0) target = $region65
  $region64: #{modelparse_forward.1} parent=0 // pred_region
    _
  $region65: #{modelparse_forward.1} parent=0 // pred_fallthru
    _
  // Predicated region
  $region66: #{modelparse_forward.1} parent=0 // pred_check
    _
  $region67: #{modelparse_forward.1} parent=0 // pred_check_branch
    %60 = sbr.rel (0) target = $region69
  $region68: #{modelparse_forward.1} parent=0 // pred_region
    _
  $region69: #{modelparse_forward.1} parent=0 // pred_fallthru
    _
  // Predicated region
  $region70: #{modelparse_forward.1} parent=0 // pred_check
    _
  $region71: #{modelparse_forward.1} parent=0 // pred_check_branch
    %62 = sbr.rel (0) target = $region73
  $region72: #{modelparse_forward.1} parent=0 // pred_region
    _
  $region73: #{modelparse_forward.1} parent=0 // pred_fallthru
    _
  // Predicated region
  $region74: #{modelparse_forward.1} parent=0 // pred_check
    _
  $region75: #{modelparse_forward.1} parent=0 // pred_check_branch
    %64 = sbr.rel (0) target = $region77
  $region76: #{modelparse_forward.1} parent=0 // pred_region
    _
  $region77: #{modelparse_forward.1} parent=0 // pred_fallthru
    _
  // Predicated region
  $region78: #{modelparse_forward.1} parent=0 // pred_check
    _
  $region79: #{modelparse_forward.1} parent=0 // pred_check_branch
    %66 = sbr.rel (0) target = $region81
  $region80: #{modelparse_forward.1} parent=0 // pred_region
    _
  $region81: #{modelparse_forward.1} parent=0 // pred_fallthru
    _
  // Predicated region
  $region82: #{modelparse_forward.1} parent=0 // pred_check
    _
  $region83: #{modelparse_forward.1} parent=0 // pred_check_branch
    %68 = sbr.rel (0) target = $region85
  $region84: #{modelparse_forward.1} parent=0 // pred_region
    _
  $region85: #{modelparse_forward.1} parent=0 // pred_fallthru
    _
  // Predicated region
  $region86: #{modelparse_forward.1} parent=0 // pred_check
    _
  $region87: #{modelparse_forward.1} parent=0 // pred_check_branch
    %70 = sbr.rel (0) target = $region89
  $region88: #{modelparse_forward.1} parent=0 // pred_region
    _
  $region89: #{modelparse_forward.1} parent=0 // pred_fallthru
    _
  %v71 = vlaneseq
  %v72 = vand.u32 %v71, 127
  %v73 = vadd.s32 %v72, 128
  %vm74 = vcmp.lt.s32.totalorder %v72, 0
  %v75 = vsub.s32 0, %v72
  %v76 = vsel %vm74, %v75, %v72
  %v77 = vshrl.u32 %v76, 4
  %v78 = vand.u32 %v76, 15
  %v79 = vsub.s32 0, %v78
  %v80 = vsel %vm74, %v79, %v78
  %vm81 = vcmp.lt.s32.totalorder %v73, 0
  %v82 = vsub.s32 0, %v73
  %v83 = vsel %vm81, %v82, %v73
  %v84 = vshrl.u32 %v83, 4
  %v85 = vand.u32 %v83, 15
  %v86 = vsub.s32 0, %v85
  %v87 = vsel %vm81, %v86, %v85
  %vm88 = vcmp.ne.s32.totalorder %v80, 0
  %vm89 = vcmp.ne.s32.totalorder %v87, 0
  %vm90 = vcmp.lt.s32.totalorder %v80, 0
  %vm91 = vcmp.lt.s32.totalorder %v87, 0
  %vm92 = vmand %vm90, %vm88
  %vm93 = vmand %vm91, %vm89
  %v94 = vadd.s32 %v80, 16
  %v95 = vadd.s32 %v87, 16
  %v96 = vsel %vm92, %v94, %v80
  %v97 = vsel %vm93, %v95, %v87
  %vm98 = vcmp.ge.s32.totalorder %v96, 1
  %vm99 = vcmp.ge.s32.totalorder %v97, 1
  %vm100 = vcmp.le.s32.totalorder %v96, 14
  %vm101 = vcmp.le.s32.totalorder %v97, 14
  %v102 = vld [vmem:[%s1] sm:$0xff]
  %v103 = vld [vmem:[%s1 + $0x8] sm:$0xff]
  %v104 = vld [vmem:[%s1 + $0x10] sm:$0xff]
  %v105 = vld [vmem:[%s1 + $0x18] sm:$0xff]
  %v106 = vld [vmem:[%s1 + $0x20] sm:$0xff]
  %v107 = vld [vmem:[%s1 + $0x28] sm:$0xff]
  %v108 = vld [vmem:[%s1 + $0x30] sm:$0xff]
  %v109 = vld [vmem:[%s1 + $0x38] sm:$0xff]
  %v110 = vld [vmem:[%s1 + $0x40] sm:$0xff]
  %v111 = vld [vmem:[%s1 + $0x48] sm:$0xff]
  %v112 = vld [vmem:[%s1 + $0x50] sm:$0xff]
  %v113 = vld [vmem:[%s1 + $0x58] sm:$0xff]
  %v114 = vld [vmem:[%s1 + $0x60] sm:$0xff]
  %v115 = vld [vmem:[%s1 + $0x68] sm:$0xff]
  %v116 = vld [vmem:[%s1 + $0x70] sm:$0xff]
  %v117 = vld [vmem:[%s1 + $0x78] sm:$0xff]
  %v118 = vld [vmem:[%s1 + $0x80] sm:$0xff]
  %v119 = vld [vmem:[%s1 + $0x88] sm:$0xff]
  %v120 = vld [vmem:[%s1 + $0x90] sm:$0xff]
  %v121 = vld [vmem:[%s1 + $0x98] sm:$0xff]
  %v122 = vld [vmem:[%s1 + $0xa0] sm:$0xff]
  %v123 = vld [vmem:[%s1 + $0xa8] sm:$0xff]
  %v124 = vld [vmem:[%s1 + $0xb0] sm:$0xff]
  %v125 = vld [vmem:[%s1 + $0xb8] sm:$0xff]
  %v126 = vld [vmem:[%s1 + $0xc0] sm:$0xff]
  %v127 = vld [vmem:[%s1 + $0xc8] sm:$0xff]
  %v128 = vld [vmem:[%s1 + $0xd0] sm:$0xff]
  %v129 = vld [vmem:[%s1 + $0xd8] sm:$0xff]
  %v130 = vld [vmem:[%s1 + $0xe0] sm:$0xff]
  %v131 = vld [vmem:[%s1 + $0xe8] sm:$0xff]
  %v132 = vld [vmem:[%s1 + $0xf0] sm:$0xff]
  %v133 = vld [vmem:[%s1 + $0xf8] sm:$0xff]
  %v134 = vld [vmem:[%s0] sm:$0xff]
  %v135 = vld [vmem:[%s0 + $0x8] sm:$0xff]
  %v136 = vld [vmem:[%s2] sm:$0xff]
  %v137 = vld [vmem:[%s3] sm:$0xff]
  %140 = vrot.lane.b32.xlu0 %v134, 17
  %v141 = vpop.permute.xlu0 %140
  %142 = vrot.lane.b32.xlu0 %v135, 17
  %v143 = vpop.permute.xlu0 %142
  %vm144 = vcmask 138240
  %v145 = vsel %vm144, %v141, %v143
  %v148 = vsel %vm144, 0.0, %v141
  %v149 = vsel %vm98, 1, 0
  %v150 = vsel %vm99, 1, 0
  %vm151 = vcmp.eq.s32.totalorder %v149, 1
  %vm152 = vcmp.eq.s32.totalorder %v150, 1
  %v153 = vsel %vm151, %v148, 0.0
  %v154 = vsel %vm152, %v145, 0.0
  %155 = vrot.lane.b32.xlu0 %v134, 16
  %v156 = vpop.permute.xlu0 %155
  %157 = vrot.lane.b32.xlu0 %v135, 16
  %v158 = vpop.permute.xlu0 %157
  %vm159 = vcmask 130048
  %v160 = vsel %vm159, %v156, %v158
  %v163 = vsel %vm159, 0.0, %v156
  %164 = vrot.lane.b32.xlu0 %v134, 15
  %v165 = vpop.permute.xlu0 %164
  %166 = vrot.lane.b32.xlu0 %v135, 15
  %v167 = vpop.permute.xlu0 %166
  %vm168 = vcmask 121856
  %v169 = vsel %vm168, %v165, %v167
  %v172 = vsel %vm168, 0.0, %v165
  %v173 = vsel %vm100, 1, 0
  %v174 = vsel %vm101, 1, 0
  %vm175 = vcmp.eq.s32.totalorder %v173, 1
  %vm176 = vcmp.eq.s32.totalorder %v174, 1
  %v177 = vsel %vm175, %v172, 0.0
  %v178 = vsel %vm176, %v169, 0.0
  %179 = vrot.lane.b32.xlu0 %v134, 1
  %v180 = vpop.permute.xlu0 %179
  %181 = vrot.lane.b32.xlu0 %v135, 1
  %v182 = vpop.permute.xlu0 %181
  %vm183 = vcmask 7168
  %v184 = vsel %vm183, %v180, %v182
  %v187 = vsel %vm183, 0.0, %v180
  %v188 = vsel %vm151, %v187, 0.0
  %v189 = vsel %vm152, %v184, 0.0
  %190 = vrot.lane.b32.xlu0 %v134, 127
  %v191 = vpop.permute.xlu0 %190
  %192 = vrot.lane.b32.xlu0 %v135, 127
  %v193 = vpop.permute.xlu0 %192
  %vm194 = vcmask 1039360
  %v195 = vsel %vm194, %v191, %v193
  %v198 = vsel %vm194, %v193, 0.0
  %v199 = vsel %vm175, %v195, 0.0
  %v200 = vsel %vm176, %v198, 0.0
  %201 = vrot.lane.b32.xlu0 %v134, 113
  %v202 = vpop.permute.xlu0 %201
  %203 = vrot.lane.b32.xlu0 %v135, 113
  %v204 = vpop.permute.xlu0 %203
  %vm205 = vcmask 924672
  %v206 = vsel %vm205, %v202, %v204
  %v209 = vsel %vm205, %v204, 0.0
  %v210 = vsel %vm151, %v206, 0.0
  %v211 = vsel %vm152, %v209, 0.0
  %212 = vrot.lane.b32.xlu0 %v134, 112
  %v213 = vpop.permute.xlu0 %212
  %214 = vrot.lane.b32.xlu0 %v135, 112
  %v215 = vpop.permute.xlu0 %214
  %vm216 = vcmask 916480
  %v217 = vsel %vm216, %v213, %v215
  %v220 = vsel %vm216, %v215, 0.0
  %221 = vrot.lane.b32.xlu0 %v134, 111
  %v222 = vpop.permute.xlu0 %221
  %223 = vrot.lane.b32.xlu0 %v135, 111
  %v224 = vpop.permute.xlu0 %223
  %vm225 = vcmask 908288
  %v226 = vsel %vm225, %v222, %v224
  %v229 = vsel %vm225, %v224, 0.0
  %v230 = vsel %vm175, %v226, 0.0
  %v231 = vsel %vm176, %v229, 0.0
  %233 = vset.pattern.permute.xlu0 0
  %234 = vperm.xlu0 %233, %v137
  %v235 = vpop.permute.xlu0 %234
  %vm237 = vcmask 588800
  %v239 = vsel %vm237, %v136, 0
  %241 = vmatprep.subr.mxu0 0.0
  %242 = vmatpush1.msra.mxu0 0.0
  %243 = vmatprep.subr.mxu0 0.0
  %244 = vmatpush1.msra.mxu0 0.0
  %245 = vmatprep.subr.mxu0 0.0
  %246 = vmatpush1.msra.mxu0 0.0
  %247 = vmatprep.subr.mxu0 0.0
  %248 = vmatpush1.msra.mxu0 0.0
  %249 = vmatprep.subr.mxu0 0.0
  %250 = vmatpush1.msra.mxu0 0.0
  %251 = vmatprep.subr.mxu0 0.0
  %252 = vmatpush1.msra.mxu0 0.0
  %253 = vmatprep.subr.mxu0 0.0
  %254 = vmatpush1.msra.mxu0 0.0
  %255 = vmatprep.subr.mxu0 %v231
  %256 = vmatpush1.msra.mxu0 %v230
  %257 = vmatprep.subr.mxu0 %v220
  %258 = vmatpush1.msra.mxu0 %v217
  %259 = vmatprep.subr.mxu0 %v211
  %260 = vmatpush1.msra.mxu0 %v210
  %261 = vmatprep.subr.mxu0 %v200
  %262 = vmatpush1.msra.mxu0 %v199
  %263 = vmatprep.subr.mxu0 %v135
  %264 = vmatpush1.msra.mxu0 %v134
  %265 = vmatprep.subr.mxu0 %v189
  %266 = vmatpush1.msra.mxu0 %v188
  %267 = vmatprep.subr.mxu0 %v178
  %268 = vmatpush1.msra.mxu0 %v177
  %269 = vmatprep.subr.mxu0 %v160
  %270 = vmatpush1.msra.mxu0 %v163
  %271 = vmatprep.subr.mxu0 %v154
  %272 = vmatpush1.msra.mxu0 %v153
  %273 = vmatprep.subr.mxu0 0.0
  %274 = vmatpush2.msra.mxu0 0.0
  %275 = vmatprep.subr.mxu0 0.0
  %276 = vmatpush2.msra.mxu0 0.0
  %277 = vmatprep.subr.mxu0 0.0
  %278 = vmatpush2.msra.mxu0 0.0
  %279 = vmatprep.subr.mxu0 0.0
  %280 = vmatpush2.msra.mxu0 0.0
  %281 = vmatprep.subr.mxu0 0.0
  %282 = vmatpush2.msra.mxu0 0.0
  %283 = vmatprep.subr.mxu0 0.0
  %284 = vmatpush2.msra.mxu0 0.0
  %285 = vmatprep.subr.mxu0 0.0
  %286 = vmatpush2.msra.mxu0 0.0
  %287 = vmatprep.subr.mxu0 0.0
  %288 = vmatpush2.msra.mxu0 0.0
  %289 = vmatprep.subr.mxu0 0.0
  %290 = vmatpush2.msra.mxu0 0.0
  %291 = vmatprep.subr.mxu0 0.0
  %292 = vmatpush2.msra.mxu0 0.0
  %293 = vmatprep.subr.mxu0 0.0
  %294 = vmatpush2.msra.mxu0 0.0
  %295 = vmatprep.subr.mxu0 0.0
  %296 = vmatpush2.msra.mxu0 0.0
  %297 = vmatprep.subr.mxu0 0.0
  %298 = vmatpush2.msra.mxu0 0.0
  %299 = vmatprep.subr.mxu0 0.0
  %300 = vmatpush2.msra.mxu0 0.0
  %301 = vmatprep.subr.mxu0 0.0
  %302 = vmatpush2.msra.mxu0 0.0
  %303 = vmatprep.subr.mxu0 0.0
  %304 = vmatpush2.msra.mxu0 0.0
  %305 = vmatprep.mubr.f32.mxu0 0.0
  %306 = vmatmul.mubr.f32.gmra.mxu0 %v239
  %v307 = vpop.f32.mrf.mxu0
  %v308 = vadd.f32 %v235, %v307
  %v309 = vpop.f32.mrf.mxu0
  %v310 = vadd.f32 %v235, %v309
  %311 = vdwg.mxu0
  %v312 = vadd.f32 %v308, %v310
  %313 = vadd.xlane.f32.xlu0 %v312
  %v314 = vpop.xlane.xlu0 %313
  %v315 = vrcp.pop 256.0
  %v316 = vmul.f32 %v314, %v315
  %v317 = vsub.f32 %v308, %v316
  %v318 = vsub.f32 %v310, %v316
  %v319 = vmul.f32 %v317, %v317
  %v320 = vmul.f32 %v318, %v318
  %v321 = vadd.f32 %v319, %v320
  %322 = vadd.xlane.f32.xlu0 %v321
  %v323 = vpop.xlane.xlu0 %322
  %v324 = vmul.f32 %v323, %v315
  %v325 = vadd.f32 %v324, 1e-05
  %v326 = vrsqrt.pop %v325
  %v327 = vmul.f32 %v317, %v326
  %v328 = vmul.f32 %v318, %v326
  %v329 = vmax.f32 %v327, 0.0
  %v330 = vmax.f32 %v328, 0.0
  %v331 = vld [vmem:[%s4] sm:$0xff]
  %v332 = vld [vmem:[%s5] sm:$0xff]
  %335 = vrot.lane.b32.xlu0 %v329, 17
  %v336 = vpop.permute.xlu0 %335
  %337 = vrot.lane.b32.xlu0 %v330, 17
  %v338 = vpop.permute.xlu0 %337
  %v339 = vsel %vm144, %v336, %v338
  %v342 = vsel %vm144, 0.0, %v336
  %v343 = vsel %vm151, %v342, 0.0
  %v344 = vsel %vm152, %v339, 0.0
  %345 = vrot.lane.b32.xlu0 %v329, 16
  %v346 = vpop.permute.xlu0 %345
  %347 = vrot.lane.b32.xlu0 %v330, 16
  %v348 = vpop.permute.xlu0 %347
  %v349 = vsel %vm159, %v346, %v348
  %v352 = vsel %vm159, 0.0, %v346
  %353 = vrot.lane.b32.xlu0 %v329, 15
  %v354 = vpop.permute.xlu0 %353
  %355 = vrot.lane.b32.xlu0 %v330, 15
  %v356 = vpop.permute.xlu0 %355
  %v357 = vsel %vm168, %v354, %v356
  %v360 = vsel %vm168, 0.0, %v354
  %v361 = vsel %vm175, %v360, 0.0
  %v362 = vsel %vm176, %v357, 0.0
  %363 = vrot.lane.b32.xlu0 %v329, 1
  %v364 = vpop.permute.xlu0 %363
  %365 = vrot.lane.b32.xlu0 %v330, 1
  %v366 = vpop.permute.xlu0 %365
  %v367 = vsel %vm183, %v364, %v366
  %v370 = vsel %vm183, 0.0, %v364
  %v371 = vsel %vm151, %v370, 0.0
  %v372 = vsel %vm152, %v367, 0.0
  %373 = vrot.lane.b32.xlu0 %v329, 127
  %v374 = vpop.permute.xlu0 %373
  %375 = vrot.lane.b32.xlu0 %v330, 127
  %v376 = vpop.permute.xlu0 %375
  %v377 = vsel %vm194, %v374, %v376
  %v380 = vsel %vm194, %v376, 0.0
  %v381 = vsel %vm175, %v377, 0.0
  %v382 = vsel %vm176, %v380, 0.0
  %383 = vrot.lane.b32.xlu0 %v329, 113
  %v384 = vpop.permute.xlu0 %383
  %385 = vrot.lane.b32.xlu0 %v330, 113
  %v386 = vpop.permute.xlu0 %385
  %v387 = vsel %vm205, %v384, %v386
  %v390 = vsel %vm205, %v386, 0.0
  %v391 = vsel %vm151, %v387, 0.0
  %v392 = vsel %vm152, %v390, 0.0
  %393 = vrot.lane.b32.xlu0 %v329, 112
  %v394 = vpop.permute.xlu0 %393
  %395 = vrot.lane.b32.xlu0 %v330, 112
  %v396 = vpop.permute.xlu0 %395
  %v397 = vsel %vm216, %v394, %v396
  %v400 = vsel %vm216, %v396, 0.0
  %401 = vrot.lane.b32.xlu0 %v329, 111
  %v402 = vpop.permute.xlu0 %401
  %403 = vrot.lane.b32.xlu0 %v330, 111
  %v404 = vpop.permute.xlu0 %403
  %v405 = vsel %vm225, %v402, %v404
  %v408 = vsel %vm225, %v404, 0.0
  %v409 = vsel %vm175, %v405, 0.0
  %v410 = vsel %vm176, %v408, 0.0
  %412 = vset.pattern.permute.xlu0 0
  %413 = vperm.xlu0 %412, %v332
  %v414 = vpop.permute.xlu0 %413
  %v417 = vsel %vm237, %v331, 0
  %419 = vmatprep.subr.mxu0 0.0
  %420 = vmatpush1.msra.mxu0 0.0
  %421 = vmatprep.subr.mxu0 0.0
  %422 = vmatpush1.msra.mxu0 0.0
  %423 = vmatprep.subr.mxu0 0.0
  %424 = vmatpush1.msra.mxu0 0.0
  %425 = vmatprep.subr.mxu0 0.0
  %426 = vmatpush1.msra.mxu0 0.0
  %427 = vmatprep.subr.mxu0 0.0
  %428 = vmatpush1.msra.mxu0 0.0
  %429 = vmatprep.subr.mxu0 0.0
  %430 = vmatpush1.msra.mxu0 0.0
  %431 = vmatprep.subr.mxu0 0.0
  %432 = vmatpush1.msra.mxu0 0.0
  %433 = vmatprep.subr.mxu0 %v410
  %434 = vmatpush1.msra.mxu0 %v409
  %435 = vmatprep.subr.mxu0 %v400
  %436 = vmatpush1.msra.mxu0 %v397
  %437 = vmatprep.subr.mxu0 %v392
  %438 = vmatpush1.msra.mxu0 %v391
  %439 = vmatprep.subr.mxu0 %v382
  %440 = vmatpush1.msra.mxu0 %v381
  %441 = vmatprep.subr.mxu0 %v330
  %442 = vmatpush1.msra.mxu0 %v329
  %443 = vmatprep.subr.mxu0 %v372
  %444 = vmatpush1.msra.mxu0 %v371
  %445 = vmatprep.subr.mxu0 %v362
  %446 = vmatpush1.msra.mxu0 %v361
  %447 = vmatprep.subr.mxu0 %v349
  %448 = vmatpush1.msra.mxu0 %v352
  %449 = vmatprep.subr.mxu0 %v344
  %450 = vmatpush1.msra.mxu0 %v343
  %451 = vmatprep.subr.mxu0 0.0
  %452 = vmatpush2.msra.mxu0 0.0
  %453 = vmatprep.subr.mxu0 0.0
  %454 = vmatpush2.msra.mxu0 0.0
  %455 = vmatprep.subr.mxu0 0.0
  %456 = vmatpush2.msra.mxu0 0.0
  %457 = vmatprep.subr.mxu0 0.0
  %458 = vmatpush2.msra.mxu0 0.0
  %459 = vmatprep.subr.mxu0 0.0
  %460 = vmatpush2.msra.mxu0 0.0
  %461 = vmatprep.subr.mxu0 0.0
  %462 = vmatpush2.msra.mxu0 0.0
  %463 = vmatprep.subr.mxu0 0.0
  %464 = vmatpush2.msra.mxu0 0.0
  %465 = vmatprep.subr.mxu0 0.0
  %466 = vmatpush2.msra.mxu0 0.0
  %467 = vmatprep.subr.mxu0 0.0
  %468 = vmatpush2.msra.mxu0 0.0
  %469 = vmatprep.subr.mxu0 0.0
  %470 = vmatpush2.msra.mxu0 0.0
  %471 = vmatprep.subr.mxu0 0.0
  %472 = vmatpush2.msra.mxu0 0.0
  %473 = vmatprep.subr.mxu0 0.0
  %474 = vmatpush2.msra.mxu0 0.0
  %475 = vmatprep.subr.mxu0 0.0
  %476 = vmatpush2.msra.mxu0 0.0
  %477 = vmatprep.subr.mxu0 0.0
  %478 = vmatpush2.msra.mxu0 0.0
  %479 = vmatprep.subr.mxu0 0.0
  %480 = vmatpush2.msra.mxu0 0.0
  %481 = vmatprep.subr.mxu0 0.0
  %482 = vmatpush2.msra.mxu0 0.0
  %483 = vmatprep.mubr.f32.mxu0 0.0
  %484 = vmatmul.mubr.f32.gmra.mxu0 %v417
  %v485 = vpop.f32.mrf.mxu0
  %v486 = vadd.f32 %v414, %v485
  %v487 = vpop.f32.mrf.mxu0
  %v488 = vadd.f32 %v414, %v487
  %489 = vdwg.mxu0
  %v490 = vadd.f32 %v486, %v488
  %491 = vadd.xlane.f32.xlu0 %v490
  %v492 = vpop.xlane.xlu0 %491
  %v493 = vmul.f32 %v492, %v315
  %v494 = vsub.f32 %v486, %v493
  %v495 = vsub.f32 %v488, %v493
  %v496 = vmul.f32 %v494, %v494
  %v497 = vmul.f32 %v495, %v495
  %v498 = vadd.f32 %v496, %v497
  %499 = vadd.xlane.f32.xlu0 %v498
  %v500 = vpop.xlane.xlu0 %499
  %v501 = vmul.f32 %v500, %v315
  %v502 = vadd.f32 %v501, 1e-05
  %v503 = vrsqrt.pop %v502
  %v504 = vmul.f32 %v494, %v503
  %v505 = vmul.f32 %v495, %v503
  %v506 = vmax.f32 %v504, 0.0
  %v507 = vmax.f32 %v505, 0.0
  %v508 = vld [vmem:[%s6] sm:$0xff]
  %v509 = vld [vmem:[%s7] sm:$0xff]
  %512 = vrot.lane.b32.xlu0 %v506, 17
  %v513 = vpop.permute.xlu0 %512
  %514 = vrot.lane.b32.xlu0 %v507, 17
  %v515 = vpop.permute.xlu0 %514
  %v516 = vsel %vm144, %v513, %v515
  %v519 = vsel %vm144, 0.0, %v513
  %v520 = vsel %vm151, %v519, 0.0
  %v521 = vsel %vm152, %v516, 0.0
  %522 = vrot.lane.b32.xlu0 %v506, 16
  %v523 = vpop.permute.xlu0 %522
  %524 = vrot.lane.b32.xlu0 %v507, 16
  %v525 = vpop.permute.xlu0 %524
  %v526 = vsel %vm159, %v523, %v525
  %v529 = vsel %vm159, 0.0, %v523
  %530 = vrot.lane.b32.xlu0 %v506, 15
  %v531 = vpop.permute.xlu0 %530
  %532 = vrot.lane.b32.xlu0 %v507, 15
  %v533 = vpop.permute.xlu0 %532
  %v534 = vsel %vm168, %v531, %v533
  %v537 = vsel %vm168, 0.0, %v531
  %v538 = vsel %vm175, %v537, 0.0
  %v539 = vsel %vm176, %v534, 0.0
  %540 = vrot.lane.b32.xlu0 %v506, 1
  %v541 = vpop.permute.xlu0 %540
  %542 = vrot.lane.b32.xlu0 %v507, 1
  %v543 = vpop.permute.xlu0 %542
  %v544 = vsel %vm183, %v541, %v543
  %v547 = vsel %vm183, 0.0, %v541
  %v548 = vsel %vm151, %v547, 0.0
  %v549 = vsel %vm152, %v544, 0.0
  %550 = vrot.lane.b32.xlu0 %v506, 127
  %v551 = vpop.permute.xlu0 %550
  %552 = vrot.lane.b32.xlu0 %v507, 127
  %v553 = vpop.permute.xlu0 %552
  %v554 = vsel %vm194, %v551, %v553
  %v557 = vsel %vm194, %v553, 0.0
  %v558 = vsel %vm175, %v554, 0.0
  %v559 = vsel %vm176, %v557, 0.0
  %560 = vrot.lane.b32.xlu0 %v506, 113
  %v561 = vpop.permute.xlu0 %560
  %562 = vrot.lane.b32.xlu0 %v507, 113
  %v563 = vpop.permute.xlu0 %562
  %v564 = vsel %vm205, %v561, %v563
  %v567 = vsel %vm205, %v563, 0.0
  %v568 = vsel %vm151, %v564, 0.0
  %v569 = vsel %vm152, %v567, 0.0
  %570 = vrot.lane.b32.xlu0 %v506, 112
  %v571 = vpop.permute.xlu0 %570
  %572 = vrot.lane.b32.xlu0 %v507, 112
  %v573 = vpop.permute.xlu0 %572
  %v574 = vsel %vm216, %v571, %v573
  %v577 = vsel %vm216, %v573, 0.0
  %578 = vrot.lane.b32.xlu0 %v506, 111
  %v579 = vpop.permute.xlu0 %578
  %580 = vrot.lane.b32.xlu0 %v507, 111
  %v581 = vpop.permute.xlu0 %580
  %v582 = vsel %vm225, %v579, %v581
  %v585 = vsel %vm225, %v581, 0.0
  %v586 = vsel %vm175, %v582, 0.0
  %v587 = vsel %vm176, %v585, 0.0
  %589 = vset.pattern.permute.xlu0 0
  %590 = vperm.xlu0 %589, %v509
  %v591 = vpop.permute.xlu0 %590
  %v594 = vsel %vm237, %v508, 0
  %596 = vmatprep.subr.mxu0 0.0
  %597 = vmatpush1.msra.mxu0 0.0
  %598 = vmatprep.subr.mxu0 0.0
  %599 = vmatpush1.msra.mxu0 0.0
  %600 = vmatprep.subr.mxu0 0.0
  %601 = vmatpush1.msra.mxu0 0.0
  %602 = vmatprep.subr.mxu0 0.0
  %603 = vmatpush1.msra.mxu0 0.0
  %604 = vmatprep.subr.mxu0 0.0
  %605 = vmatpush1.msra.mxu0 0.0
  %606 = vmatprep.subr.mxu0 0.0
  %607 = vmatpush1.msra.mxu0 0.0
  %608 = vmatprep.subr.mxu0 0.0
  %609 = vmatpush1.msra.mxu0 0.0
  %610 = vmatprep.subr.mxu0 %v587
  %611 = vmatpush1.msra.mxu0 %v586
  %612 = vmatprep.subr.mxu0 %v577
  %613 = vmatpush1.msra.mxu0 %v574
  %614 = vmatprep.subr.mxu0 %v569
  %615 = vmatpush1.msra.mxu0 %v568
  %616 = vmatprep.subr.mxu0 %v559
  %617 = vmatpush1.msra.mxu0 %v558
  %618 = vmatprep.subr.mxu0 %v507
  %619 = vmatpush1.msra.mxu0 %v506
  %620 = vmatprep.subr.mxu0 %v549
  %621 = vmatpush1.msra.mxu0 %v548
  %622 = vmatprep.subr.mxu0 %v539
  %623 = vmatpush1.msra.mxu0 %v538
  %624 = vmatprep.subr.mxu0 %v526
  %625 = vmatpush1.msra.mxu0 %v529
  %626 = vmatprep.subr.mxu0 %v521
  %627 = vmatpush1.msra.mxu0 %v520
  %628 = vmatprep.subr.mxu0 0.0
  %629 = vmatpush2.msra.mxu0 0.0
  %630 = vmatprep.subr.mxu0 0.0
  %631 = vmatpush2.msra.mxu0 0.0
  %632 = vmatprep.subr.mxu0 0.0
  %633 = vmatpush2.msra.mxu0 0.0
  %634 = vmatprep.subr.mxu0 0.0
  %635 = vmatpush2.msra.mxu0 0.0
  %636 = vmatprep.subr.mxu0 0.0
  %637 = vmatpush2.msra.mxu0 0.0
  %638 = vmatprep.subr.mxu0 0.0
  %639 = vmatpush2.msra.mxu0 0.0
  %640 = vmatprep.subr.mxu0 0.0
  %641 = vmatpush2.msra.mxu0 0.0
  %642 = vmatprep.subr.mxu0 0.0
  %643 = vmatpush2.msra.mxu0 0.0
  %644 = vmatprep.subr.mxu0 0.0
  %645 = vmatpush2.msra.mxu0 0.0
  %646 = vmatprep.subr.mxu0 0.0
  %647 = vmatpush2.msra.mxu0 0.0
  %648 = vmatprep.subr.mxu0 0.0
  %649 = vmatpush2.msra.mxu0 0.0
  %650 = vmatprep.subr.mxu0 0.0
  %651 = vmatpush2.msra.mxu0 0.0
  %652 = vmatprep.subr.mxu0 0.0
  %653 = vmatpush2.msra.mxu0 0.0
  %654 = vmatprep.subr.mxu0 0.0
  %655 = vmatpush2.msra.mxu0 0.0
  %656 = vmatprep.subr.mxu0 0.0
  %657 = vmatpush2.msra.mxu0 0.0
  %658 = vmatprep.subr.mxu0 0.0
  %659 = vmatpush2.msra.mxu0 0.0
  %660 = vmatprep.mubr.f32.mxu0 0.0
  %661 = vmatmul.mubr.f32.gmra.mxu0 %v594
  %v662 = vpop.f32.mrf.mxu0
  %v663 = vadd.f32 %v591, %v662
  %v664 = vpop.f32.mrf.mxu0
  %v665 = vadd.f32 %v591, %v664
  %666 = vdwg.mxu0
  %v667 = vadd.f32 %v663, %v665
  %668 = vadd.xlane.f32.xlu0 %v667
  %v669 = vpop.xlane.xlu0 %668
  %v670 = vmul.f32 %v669, %v315
  %v671 = vld [vmem:[%s8] sm:$0xff]
  %v672 = vmul.f32 %v670, %v671
  %vm673 = vcmask 64512
  %v674 = vsel %vm673, %v672, 0.0
  %v675 = vrot.slane %v674, 4
  %v676 = vadd.f32 %v674, %v675
  %v677 = vrot.slane %v676, 2
  %v678 = vadd.f32 %v676, %v677
  %v679 = vrot.slane %v678, 1
  %v680 = vadd.f32 %v678, %v679
  %v681 = vld [vmem:[%s9] sm:$0x1]
  %v682 = vadd.f32 %v680, %v681
  %v683 = vmax.f32 %v682, 0.0
  %v684 = vld [vmem:[%s10] sm:$0xff]
  %v685 = vlaneseq
  %v686 = vshrl.u32 %v685, 7
  %v687 = vsub.s32 0, %v686
  %v688 = vrot.slane %v683, %v687
  %v689 = vmul.f32 %v684, %v688
  %v690 = vsel %vm673, %v689, 0.0
  %691 = vadd.xlane.f32.xlu0 %v690
  %v692 = vpop.xlane.xlu0 %691
  %v693 = vld [vmem:[%s11] sm:$0xff]
  %v694 = vadd.f32 %v692, %v693
  %v695 = vadd.f32 %v694, 3.0
  %v696 = vmax.f32 %v695, 0.0
  %v697 = vmin.f32 %v696, 6.0
  %v698 = vmul.f32 %v697, 0.16666667
  %700 = vset.pattern.permute.xlu0 0
  %701 = vperm.xlu0 %700, %v698
  %v702 = vpop.permute.xlu0 %701
  %v704 = vmul.f32 %v663, %v702
  %v705 = vmul.f32 %v665, %v702
  %v706 = vadd.f32 %v308, %v704
  %v707 = vadd.f32 %v310, %v705
  %v708 = vadd.f32 %v706, %v707
  %709 = vadd.xlane.f32.xlu0 %v708
  %v710 = vpop.xlane.xlu0 %709
  %v711 = vmul.f32 %v710, %v315
  %v712 = vsub.f32 %v706, %v711
  %v713 = vsub.f32 %v707, %v711
  %v714 = vmul.f32 %v712, %v712
  %v715 = vmul.f32 %v713, %v713
  %v716 = vadd.f32 %v714, %v715
  %717 = vadd.xlane.f32.xlu0 %v716
  %v718 = vpop.xlane.xlu0 %717
  %v719 = vmul.f32 %v718, %v315
  %v720 = vadd.f32 %v719, 1e-05
  %v721 = vrsqrt.pop %v720
  %v722 = vmul.f32 %v712, %v721
  %v723 = vmul.f32 %v713, %v721
  %v724 = vadd.f32 %v722, 3.0
  %v725 = vadd.f32 %v723, 3.0
  %v726 = vmax.f32 %v724, 0.0
  %v727 = vmax.f32 %v725, 0.0
  %v728 = vmin.f32 %v726, 6.0
  %v729 = vmin.f32 %v727, 6.0
  %v730 = vmul.f32 %v722, %v728
  %v731 = vmul.f32 %v723, %v729
  %v732 = vmul.f32 %v730, 0.16666667
  %v733 = vmul.f32 %v731, 0.16666667
  %v734 = vld [vmem:[%s12] sm:$0xff]
  %v735 = vld [vmem:[%s13] sm:$0xff]
  %738 = vrot.lane.b32.xlu0 %v732, 17
  %v739 = vpop.permute.xlu0 %738
  %740 = vrot.lane.b32.xlu0 %v733, 17
  %v741 = vpop.permute.xlu0 %740
  %v742 = vsel %vm144, %v739, %v741
  %v745 = vsel %vm144, 0.0, %v739
  %v746 = vsel %vm151, %v745, 0.0
  %v747 = vsel %vm152, %v742, 0.0
  %748 = vrot.lane.b32.xlu0 %v732, 16
  %v749 = vpop.permute.xlu0 %748
  %750 = vrot.lane.b32.xlu0 %v733, 16
  %v751 = vpop.permute.xlu0 %750
  %v752 = vsel %vm159, %v749, %v751
  %v755 = vsel %vm159, 0.0, %v749
  %756 = vrot.lane.b32.xlu0 %v732, 15
  %v757 = vpop.permute.xlu0 %756
  %758 = vrot.lane.b32.xlu0 %v733, 15
  %v759 = vpop.permute.xlu0 %758
  %v760 = vsel %vm168, %v757, %v759
  %v763 = vsel %vm168, 0.0, %v757
  %v764 = vsel %vm175, %v763, 0.0
  %v765 = vsel %vm176, %v760, 0.0
  %766 = vrot.lane.b32.xlu0 %v732, 1
  %v767 = vpop.permute.xlu0 %766
  %768 = vrot.lane.b32.xlu0 %v733, 1
  %v769 = vpop.permute.xlu0 %768
  %v770 = vsel %vm183, %v767, %v769
  %v773 = vsel %vm183, 0.0, %v767
  %v774 = vsel %vm151, %v773, 0.0
  %v775 = vsel %vm152, %v770, 0.0
  %776 = vrot.lane.b32.xlu0 %v732, 127
  %v777 = vpop.permute.xlu0 %776
  %778 = vrot.lane.b32.xlu0 %v733, 127
  %v779 = vpop.permute.xlu0 %778
  %v780 = vsel %vm194, %v777, %v779
  %v783 = vsel %vm194, %v779, 0.0
  %v784 = vsel %vm175, %v780, 0.0
  %v785 = vsel %vm176, %v783, 0.0
  %786 = vrot.lane.b32.xlu0 %v732, 113
  %v787 = vpop.permute.xlu0 %786
  %788 = vrot.lane.b32.xlu0 %v733, 113
  %v789 = vpop.permute.xlu0 %788
  %v790 = vsel %vm205, %v787, %v789
  %v793 = vsel %vm205, %v789, 0.0
  %v794 = vsel %vm151, %v790, 0.0
  %v795 = vsel %vm152, %v793, 0.0
  %796 = vrot.lane.b32.xlu0 %v732, 112
  %v797 = vpop.permute.xlu0 %796
  %798 = vrot.lane.b32.xlu0 %v733, 112
  %v799 = vpop.permute.xlu0 %798
  %v800 = vsel %vm216, %v797, %v799
  %v803 = vsel %vm216, %v799, 0.0
  %804 = vrot.lane.b32.xlu0 %v732, 111
  %v805 = vpop.permute.xlu0 %804
  %806 = vrot.lane.b32.xlu0 %v733, 111
  %v807 = vpop.permute.xlu0 %806
  %v808 = vsel %vm225, %v805, %v807
  %v811 = vsel %vm225, %v807, 0.0
  %v812 = vsel %vm175, %v808, 0.0
  %v813 = vsel %vm176, %v811, 0.0
  %815 = vset.pattern.permute.xlu0 0
  %816 = vperm.xlu0 %815, %v734
  %v817 = vpop.permute.xlu0 %816
  %v819 = vmul.f32 %v817, %v746
  %v820 = vmul.f32 %v817, %v747
  %822 = vset.pattern.permute.xlu0 0
  %823 = vperm.xlu0 %822, %v735
  %v824 = vpop.permute.xlu0 %823
  %v826 = vadd.f32 %v824, %v819
  %v827 = vadd.f32 %v824, %v820
  %828 = vset.pattern.permute.xlu0 1
  %829 = vperm.xlu0 %828, %v734
  %v830 = vpop.permute.xlu0 %829
  %v832 = vmul.f32 %v830, %v755
  %v833 = vmul.f32 %v830, %v752
  %v834 = vadd.f32 %v826, %v832
  %v835 = vadd.f32 %v827, %v833
  %836 = vset.pattern.permute.xlu0 2
  %837 = vperm.xlu0 %836, %v734
  %v838 = vpop.permute.xlu0 %837
  %v840 = vmul.f32 %v838, %v764
  %v841 = vmul.f32 %v838, %v765
  %v842 = vadd.f32 %v834, %v840
  %v843 = vadd.f32 %v835, %v841
  %844 = vset.pattern.permute.xlu0 3
  %845 = vperm.xlu0 %844, %v734
  %v846 = vpop.permute.xlu0 %845
  %v848 = vmul.f32 %v846, %v774
  %v849 = vmul.f32 %v846, %v775
  %v850 = vadd.f32 %v842, %v848
  %v851 = vadd.f32 %v843, %v849
  %852 = vset.pattern.permute.xlu0 4
  %853 = vperm.xlu0 %852, %v734
  %v854 = vpop.permute.xlu0 %853
  %v856 = vmul.f32 %v854, %v732
  %v857 = vmul.f32 %v854, %v733
  %v858 = vadd.f32 %v850, %v856
  %v859 = vadd.f32 %v851, %v857
  %860 = vset.pattern.permute.xlu0 5
  %861 = vperm.xlu0 %860, %v734
  %v862 = vpop.permute.xlu0 %861
  %v864 = vmul.f32 %v862, %v784
  %v865 = vmul.f32 %v862, %v785
  %v866 = vadd.f32 %v858, %v864
  %v867 = vadd.f32 %v859, %v865
  %868 = vset.pattern.permute.xlu0 6
  %869 = vperm.xlu0 %868, %v734
  %v870 = vpop.permute.xlu0 %869
  %v872 = vmul.f32 %v870, %v794
  %v873 = vmul.f32 %v870, %v795
  %v874 = vadd.f32 %v866, %v872
  %v875 = vadd.f32 %v867, %v873
  %876 = vset.pattern.permute.xlu0 7
  %877 = vperm.xlu0 %876, %v734
  %v878 = vpop.permute.xlu0 %877
  %v880 = vmul.f32 %v878, %v800
  %v881 = vmul.f32 %v878, %v803
  %v882 = vadd.f32 %v874, %v880
  %v883 = vadd.f32 %v875, %v881
  %884 = vset.pattern.permute.xlu0 8
  %885 = vperm.xlu0 %884, %v734
  %v886 = vpop.permute.xlu0 %885
  %v888 = vmul.f32 %v886, %v812
  %v889 = vmul.f32 %v886, %v813
  %v890 = vadd.f32 %v882, %v888
  %v891 = vadd.f32 %v883, %v889
  %v892 = vadd.f32 %v890, %v891
  %893 = vadd.xlane.f32.xlu0 %v892
  %v894 = vpop.xlane.xlu0 %893
  %v895 = vmul.f32 %v894, %v315
  %v896 = vsub.f32 %v890, %v895
  %v897 = vsub.f32 %v891, %v895
  %v898 = vmul.f32 %v896, %v896
  %v899 = vmul.f32 %v897, %v897
  %v900 = vadd.f32 %v898, %v899
  %901 = vadd.xlane.f32.xlu0 %v900
  %v902 = vpop.xlane.xlu0 %901
  %v903 = vmul.f32 %v902, %v315
  %v904 = vadd.f32 %v903, 1e-05
  %v905 = vrsqrt.pop %v904
  %v906 = vmul.f32 %v896, %v905
  %v907 = vmul.f32 %v897, %v905
  %v908 = vadd.f32 %v906, 3.0
  %v909 = vadd.f32 %v907, 3.0
  %v910 = vmax.f32 %v908, 0.0
  %v911 = vmax.f32 %v909, 0.0
  %v912 = vmin.f32 %v910, 6.0
  %v913 = vmin.f32 %v911, 6.0
  %v914 = vmul.f32 %v906, %v912
  %v915 = vmul.f32 %v907, %v913
  %v916 = vmul.f32 %v914, 0.16666667
  %v917 = vmul.f32 %v915, 0.16666667
  %v918 = vld [vmem:[%s14] sm:$0xff]
  %v919 = vld [vmem:[%s15] sm:$0xff]
  %922 = vrot.lane.b32.xlu0 %v916, 17
  %v923 = vpop.permute.xlu0 %922
  %924 = vrot.lane.b32.xlu0 %v917, 17
  %v925 = vpop.permute.xlu0 %924
  %v926 = vsel %vm144, %v923, %v925
  %v929 = vsel %vm144, 0.0, %v923
  %v930 = vsel %vm151, %v929, 0.0
  %v931 = vsel %vm152, %v926, 0.0
  %932 = vrot.lane.b32.xlu0 %v916, 16
  %v933 = vpop.permute.xlu0 %932
  %934 = vrot.lane.b32.xlu0 %v917, 16
  %v935 = vpop.permute.xlu0 %934
  %v936 = vsel %vm159, %v933, %v935
  %v939 = vsel %vm159, 0.0, %v933
  %940 = vrot.lane.b32.xlu0 %v916, 15
  %v941 = vpop.permute.xlu0 %940
  %942 = vrot.lane.b32.xlu0 %v917, 15
  %v943 = vpop.permute.xlu0 %942
  %v944 = vsel %vm168, %v941, %v943
  %v947 = vsel %vm168, 0.0, %v941
  %v948 = vsel %vm175, %v947, 0.0
  %v949 = vsel %vm176, %v944, 0.0
  %950 = vrot.lane.b32.xlu0 %v916, 1
  %v951 = vpop.permute.xlu0 %950
  %952 = vrot.lane.b32.xlu0 %v917, 1
  %v953 = vpop.permute.xlu0 %952
  %v954 = vsel %vm183, %v951, %v953
  %v957 = vsel %vm183, 0.0, %v951
  %v958 = vsel %vm151, %v957, 0.0
  %v959 = vsel %vm152, %v954, 0.0
  %960 = vrot.lane.b32.xlu0 %v916, 127
  %v961 = vpop.permute.xlu0 %960
  %962 = vrot.lane.b32.xlu0 %v917, 127
  %v963 = vpop.permute.xlu0 %962
  %v964 = vsel %vm194, %v961, %v963
  %v967 = vsel %vm194, %v963, 0.0
  %v968 = vsel %vm175, %v964, 0.0
  %v969 = vsel %vm176, %v967, 0.0
  %970 = vrot.lane.b32.xlu0 %v916, 113
  %v971 = vpop.permute.xlu0 %970
  %972 = vrot.lane.b32.xlu0 %v917, 113
  %v973 = vpop.permute.xlu0 %972
  %v974 = vsel %vm205, %v971, %v973
  %v977 = vsel %vm205, %v973, 0.0
  %v978 = vsel %vm151, %v974, 0.0
  %v979 = vsel %vm152, %v977, 0.0
  %980 = vrot.lane.b32.xlu0 %v916, 112
  %v981 = vpop.permute.xlu0 %980
  %982 = vrot.lane.b32.xlu0 %v917, 112
  %v983 = vpop.permute.xlu0 %982
  %v984 = vsel %vm216, %v981, %v983
  %v987 = vsel %vm216, %v983, 0.0
  %988 = vrot.lane.b32.xlu0 %v916, 111
  %v989 = vpop.permute.xlu0 %988
  %990 = vrot.lane.b32.xlu0 %v917, 111
  %v991 = vpop.permute.xlu0 %990
  %v992 = vsel %vm225, %v989, %v991
  %v995 = vsel %vm225, %v991, 0.0
  %v996 = vsel %vm175, %v992, 0.0
  %v997 = vsel %vm176, %v995, 0.0
  %999 = vset.pattern.permute.xlu0 0
  %1000 = vperm.xlu0 %999, %v919
  %v1001 = vpop.permute.xlu0 %1000
  %v1004 = vsel %vm237, %v918, 0
  %1006 = vmatprep.subr.mxu0 0.0
  %1007 = vmatpush1.msra.mxu0 0.0
  %1008 = vmatprep.subr.mxu0 0.0
  %1009 = vmatpush1.msra.mxu0 0.0
  %1010 = vmatprep.subr.mxu0 0.0
  %1011 = vmatpush1.msra.mxu0 0.0
  %1012 = vmatprep.subr.mxu0 0.0
  %1013 = vmatpush1.msra.mxu0 0.0
  %1014 = vmatprep.subr.mxu0 0.0
  %1015 = vmatpush1.msra.mxu0 0.0
  %1016 = vmatprep.subr.mxu0 0.0
  %1017 = vmatpush1.msra.mxu0 0.0
  %1018 = vmatprep.subr.mxu0 0.0
  %1019 = vmatpush1.msra.mxu0 0.0
  %1020 = vmatprep.subr.mxu0 %v997
  %1021 = vmatpush1.msra.mxu0 %v996
  %1022 = vmatprep.subr.mxu0 %v987
  %1023 = vmatpush1.msra.mxu0 %v984
  %1024 = vmatprep.subr.mxu0 %v979
  %1025 = vmatpush1.msra.mxu0 %v978
  %1026 = vmatprep.subr.mxu0 %v969
  %1027 = vmatpush1.msra.mxu0 %v968
  %1028 = vmatprep.subr.mxu0 %v917
  %1029 = vmatpush1.msra.mxu0 %v916
  %1030 = vmatprep.subr.mxu0 %v959
  %1031 = vmatpush1.msra.mxu0 %v958
  %1032 = vmatprep.subr.mxu0 %v949
  %1033 = vmatpush1.msra.mxu0 %v948
  %1034 = vmatprep.subr.mxu0 %v936
  %1035 = vmatpush1.msra.mxu0 %v939
  %1036 = vmatprep.subr.mxu0 %v931
  %1037 = vmatpush1.msra.mxu0 %v930
  %1038 = vmatprep.subr.mxu0 0.0
  %1039 = vmatpush2.msra.mxu0 0.0
  %1040 = vmatprep.subr.mxu0 0.0
  %1041 = vmatpush2.msra.mxu0 0.0
  %1042 = vmatprep.subr.mxu0 0.0
  %1043 = vmatpush2.msra.mxu0 0.0
  %1044 = vmatprep.subr.mxu0 0.0
  %1045 = vmatpush2.msra.mxu0 0.0
  %1046 = vmatprep.subr.mxu0 0.0
  %1047 = vmatpush2.msra.mxu0 0.0
  %1048 = vmatprep.subr.mxu0 0.0
  %1049 = vmatpush2.msra.mxu0 0.0
  %1050 = vmatprep.subr.mxu0 0.0
  %1051 = vmatpush2.msra.mxu0 0.0
  %1052 = vmatprep.subr.mxu0 0.0
  %1053 = vmatpush2.msra.mxu0 0.0
  %1054 = vmatprep.subr.mxu0 0.0
  %1055 = vmatpush2.msra.mxu0 0.0
  %1056 = vmatprep.subr.mxu0 0.0
  %1057 = vmatpush2.msra.mxu0 0.0
  %1058 = vmatprep.subr.mxu0 0.0
  %1059 = vmatpush2.msra.mxu0 0.0
  %1060 = vmatprep.subr.mxu0 0.0
  %1061 = vmatpush2.msra.mxu0 0.0
  %1062 = vmatprep.subr.mxu0 0.0
  %1063 = vmatpush2.msra.mxu0 0.0
  %1064 = vmatprep.subr.mxu0 0.0
  %1065 = vmatpush2.msra.mxu0 0.0
  %1066 = vmatprep.subr.mxu0 0.0
  %1067 = vmatpush2.msra.mxu0 0.0
  %1068 = vmatprep.subr.mxu0 0.0
  %1069 = vmatpush2.msra.mxu0 0.0
  %1070 = vmatprep.mubr.f32.mxu0 0.0
  %1071 = vmatmul.mubr.f32.gmra.mxu0 %v1004
  %v1072 = vpop.f32.mrf.mxu0
  %v1073 = vadd.f32 %v1001, %v1072
  %v1074 = vpop.f32.mrf.mxu0
  %v1075 = vadd.f32 %v1001, %v1074
  %1076 = vdwg.mxu0
  %v1077 = vadd.f32 %v706, %v1073
  %v1078 = vadd.f32 %v707, %v1075
  %v1079 = vadd.f32 %v1077, %v1078
  %1080 = vadd.xlane.f32.xlu0 %v1079
  %v1081 = vpop.xlane.xlu0 %1080
  %v1082 = vmul.f32 %v1081, %v315
  %v1083 = vsub.f32 %v1077, %v1082
  %v1084 = vsub.f32 %v1078, %v1082
  %v1085 = vmul.f32 %v1083, %v1083
  %v1086 = vmul.f32 %v1084, %v1084
  %v1087 = vadd.f32 %v1085, %v1086
  %1088 = vadd.xlane.f32.xlu0 %v1087
  %v1089 = vpop.xlane.xlu0 %1088
  %v1090 = vmul.f32 %v1089, %v315
  %v1091 = vadd.f32 %v1090, 1e-05
  %v1092 = vrsqrt.pop %v1091
  %v1093 = vmul.f32 %v1083, %v1092
  %v1094 = vmul.f32 %v1084, %v1092
  %v1095 = vadd.f32 %v1093, 3.0
  %v1096 = vadd.f32 %v1094, 3.0
  %v1097 = vmax.f32 %v1095, 0.0
  %v1098 = vmax.f32 %v1096, 0.0
  %v1099 = vmin.f32 %v1097, 6.0
  %v1100 = vmin.f32 %v1098, 6.0
  %v1101 = vmul.f32 %v1093, %v1099
  %v1102 = vmul.f32 %v1094, %v1100
  %v1103 = vmul.f32 %v1101, 0.16666667
  %v1104 = vmul.f32 %v1102, 0.16666667
  %v1105 = vld [vmem:[%s16] sm:$0xff]
  %v1106 = vld [vmem:[%s16 + $0x8] sm:$0xff]
  %v1107 = vld [vmem:[%s17] sm:$0xff]
  %v1108 = vld [vmem:[%s17 + $0x8] sm:$0xff]
  %1111 = vrot.lane.b32.xlu0 %v1103, 17
  %v1112 = vpop.permute.xlu0 %1111
  %1113 = vrot.lane.b32.xlu0 %v1104, 17
  %v1114 = vpop.permute.xlu0 %1113
  %v1115 = vsel %vm144, %v1112, %v1114
  %v1118 = vsel %vm144, 0.0, %v1112
  %v1119 = vsel %vm151, %v1118, 0.0
  %v1120 = vsel %vm152, %v1115, 0.0
  %1121 = vrot.lane.b32.xlu0 %v1103, 16
  %v1122 = vpop.permute.xlu0 %1121
  %1123 = vrot.lane.b32.xlu0 %v1104, 16
  %v1124 = vpop.permute.xlu0 %1123
  %v1125 = vsel %vm159, %v1122, %v1124
  %v1128 = vsel %vm159, 0.0, %v1122
  %1129 = vrot.lane.b32.xlu0 %v1103, 15
  %v1130 = vpop.permute.xlu0 %1129
  %1131 = vrot.lane.b32.xlu0 %v1104, 15
  %v1132 = vpop.permute.xlu0 %1131
  %v1133 = vsel %vm168, %v1130, %v1132
  %v1136 = vsel %vm168, 0.0, %v1130
  %v1137 = vsel %vm175, %v1136, 0.0
  %v1138 = vsel %vm176, %v1133, 0.0
  %1139 = vrot.lane.b32.xlu0 %v1103, 1
  %v1140 = vpop.permute.xlu0 %1139
  %1141 = vrot.lane.b32.xlu0 %v1104, 1
  %v1142 = vpop.permute.xlu0 %1141
  %v1143 = vsel %vm183, %v1140, %v1142
  %v1146 = vsel %vm183, 0.0, %v1140
  %v1147 = vsel %vm151, %v1146, 0.0
  %v1148 = vsel %vm152, %v1143, 0.0
  %1149 = vrot.lane.b32.xlu0 %v1103, 127
  %v1150 = vpop.permute.xlu0 %1149
  %1151 = vrot.lane.b32.xlu0 %v1104, 127
  %v1152 = vpop.permute.xlu0 %1151
  %v1153 = vsel %vm194, %v1150, %v1152
  %v1156 = vsel %vm194, %v1152, 0.0
  %v1157 = vsel %vm175, %v1153, 0.0
  %v1158 = vsel %vm176, %v1156, 0.0
  %1159 = vrot.lane.b32.xlu0 %v1103, 113
  %v1160 = vpop.permute.xlu0 %1159
  %1161 = vrot.lane.b32.xlu0 %v1104, 113
  %v1162 = vpop.permute.xlu0 %1161
  %v1163 = vsel %vm205, %v1160, %v1162
  %v1166 = vsel %vm205, %v1162, 0.0
  %v1167 = vsel %vm151, %v1163, 0.0
  %v1168 = vsel %vm152, %v1166, 0.0
  %1169 = vrot.lane.b32.xlu0 %v1103, 112
  %v1170 = vpop.permute.xlu0 %1169
  %1171 = vrot.lane.b32.xlu0 %v1104, 112
  %v1172 = vpop.permute.xlu0 %1171
  %v1173 = vsel %vm216, %v1170, %v1172
  %v1176 = vsel %vm216, %v1172, 0.0
  %1177 = vrot.lane.b32.xlu0 %v1103, 111
  %v1178 = vpop.permute.xlu0 %1177
  %1179 = vrot.lane.b32.xlu0 %v1104, 111
  %v1180 = vpop.permute.xlu0 %1179
  %v1181 = vsel %vm225, %v1178, %v1180
  %v1184 = vsel %vm225, %v1180, 0.0
  %v1185 = vsel %vm175, %v1181, 0.0
  %v1186 = vsel %vm176, %v1184, 0.0
  %1188 = vset.pattern.permute.xlu0 0
  %1189 = vperm.xlu0 %1188, %v1107
  %v1190 = vpop.permute.xlu0 %1189
  %1193 = vset.pattern.permute.xlu0 0
  %1194 = vperm.xlu0 %1193, %v1108
  %v1195 = vpop.permute.xlu0 %1194
  %v1198 = vsel %vm237, %v1105, 0
  %v1201 = vsel %vm237, %v1106, 0
  %1203 = vmatprep.subr.mxu0 0.0
  %1204 = vmatpush1.msra.mxu0 0.0
  %1205 = vmatprep.subr.mxu0 0.0
  %1206 = vmatpush1.msra.mxu0 0.0
  %1207 = vmatprep.subr.mxu0 0.0
  %1208 = vmatpush1.msra.mxu0 0.0
  %1209 = vmatprep.subr.mxu0 0.0
  %1210 = vmatpush1.msra.mxu0 0.0
  %1211 = vmatprep.subr.mxu0 0.0
  %1212 = vmatpush1.msra.mxu0 0.0
  %1213 = vmatprep.subr.mxu0 0.0
  %1214 = vmatpush1.msra.mxu0 0.0
  %1215 = vmatprep.subr.mxu0 0.0
  %1216 = vmatpush1.msra.mxu0 0.0
  %1217 = vmatprep.subr.mxu0 %v1186
  %1218 = vmatpush1.msra.mxu0 %v1185
  %1219 = vmatprep.subr.mxu0 %v1176
  %1220 = vmatpush1.msra.mxu0 %v1173
  %1221 = vmatprep.subr.mxu0 %v1168
  %1222 = vmatpush1.msra.mxu0 %v1167
  %1223 = vmatprep.subr.mxu0 %v1158
  %1224 = vmatpush1.msra.mxu0 %v1157
  %1225 = vmatprep.subr.mxu0 %v1104
  %1226 = vmatpush1.msra.mxu0 %v1103
  %1227 = vmatprep.subr.mxu0 %v1148
  %1228 = vmatpush1.msra.mxu0 %v1147
  %1229 = vmatprep.subr.mxu0 %v1138
  %1230 = vmatpush1.msra.mxu0 %v1137
  %1231 = vmatprep.subr.mxu0 %v1125
  %1232 = vmatpush1.msra.mxu0 %v1128
  %1233 = vmatprep.subr.mxu0 %v1120
  %1234 = vmatpush1.msra.mxu0 %v1119
  %1235 = vmatprep.subr.mxu0 0.0
  %1236 = vmatpush2.msra.mxu0 0.0
  %1237 = vmatprep.subr.mxu0 0.0
  %1238 = vmatpush2.msra.mxu0 0.0
  %1239 = vmatprep.subr.mxu0 0.0
  %1240 = vmatpush2.msra.mxu0 0.0
  %1241 = vmatprep.subr.mxu0 0.0
  %1242 = vmatpush2.msra.mxu0 0.0
  %1243 = vmatprep.subr.mxu0 0.0
  %1244 = vmatpush2.msra.mxu0 0.0
  %1245 = vmatprep.subr.mxu0 0.0
  %1246 = vmatpush2.msra.mxu0 0.0
  %1247 = vmatprep.subr.mxu0 0.0
  %1248 = vmatpush2.msra.mxu0 0.0
  %1249 = vmatprep.subr.mxu0 0.0
  %1250 = vmatpush2.msra.mxu0 0.0
  %1251 = vmatprep.subr.mxu0 0.0
  %1252 = vmatpush2.msra.mxu0 0.0
  %1253 = vmatprep.subr.mxu0 0.0
  %1254 = vmatpush2.msra.mxu0 0.0
  %1255 = vmatprep.subr.mxu0 0.0
  %1256 = vmatpush2.msra.mxu0 0.0
  %1257 = vmatprep.subr.mxu0 0.0
  %1258 = vmatpush2.msra.mxu0 0.0
  %1259 = vmatprep.subr.mxu0 0.0
  %1260 = vmatpush2.msra.mxu0 0.0
  %1261 = vmatprep.subr.mxu0 0.0
  %1262 = vmatpush2.msra.mxu0 0.0
  %1263 = vmatprep.subr.mxu0 0.0
  %1264 = vmatpush2.msra.mxu0 0.0
  %1265 = vmatprep.subr.mxu0 0.0
  %1266 = vmatpush2.msra.mxu0 0.0
  %1267 = vmatprep.mubr.f32.mxu0 0.0
  %1268 = vmatmul.mubr.f32.gmra.mxu0 %v1198
  %v1269 = vpop.f32.mrf.mxu0
  %v1270 = vadd.f32 %v1190, %v1269
  %v1271 = vpop.f32.mrf.mxu0
  %v1272 = vadd.f32 %v1190, %v1271
  %1273 = vmatprep.mubr.f32.mxu0 0.0
  %1274 = vmatmul.mubr.f32.gmra.mxu0 %v1201
  %v1275 = vpop.f32.mrf.mxu0
  %v1276 = vadd.f32 %v1195, %v1275
  %v1277 = vpop.f32.mrf.mxu0
  %v1278 = vadd.f32 %v1195, %v1277
  %1279 = vdwg.mxu0
  %v1280 = vld [vmem:[%s18] sm:$0xff]
  %v1281 = vld [vmem:[%s18 + $0x8] sm:$0xff]
  %v1282 = vld [vmem:[%s19] sm:$0xff]
  %v1283 = vld [vmem:[%s19 + $0x8] sm:$0xff]
  %1285 = vset.pattern.permute.xlu0 0
  %1286 = vperm.xlu0 %1285, %v1282
  %v1287 = vpop.permute.xlu0 %1286
  %1290 = vset.pattern.permute.xlu0 0
  %1291 = vperm.xlu0 %1290, %v1283
  %v1292 = vpop.permute.xlu0 %1291
  %v1295 = vsel %vm673, %v1280, 0
  %v1298 = vsel %vm673, %v1281, 0
  %1300 = vmatprep.subr.mxu0 0.0
  %1301 = vmatpush1.msra.mxu0 0.0
  %1302 = vmatprep.subr.mxu0 0.0
  %1303 = vmatpush1.msra.mxu0 0.0
  %1304 = vmatprep.subr.mxu0 0.0
  %1305 = vmatpush1.msra.mxu0 0.0
  %1306 = vmatprep.subr.mxu0 0.0
  %1307 = vmatpush1.msra.mxu0 0.0
  %1308 = vmatprep.subr.mxu0 0.0
  %1309 = vmatpush1.msra.mxu0 0.0
  %1310 = vmatprep.subr.mxu0 0.0
  %1311 = vmatpush1.msra.mxu0 0.0
  %1312 = vmatprep.subr.mxu0 0.0
  %1313 = vmatpush1.msra.mxu0 0.0
  %1314 = vmatprep.subr.mxu0 0.0
  %1315 = vmatpush1.msra.mxu0 0.0
  %1316 = vmatprep.subr.mxu0 0.0
  %1317 = vmatpush1.msra.mxu0 0.0
  %1318 = vmatprep.subr.mxu0 0.0
  %1319 = vmatpush1.msra.mxu0 0.0
  %1320 = vmatprep.subr.mxu0 0.0
  %1321 = vmatpush1.msra.mxu0 0.0
  %1322 = vmatprep.subr.mxu0 0.0
  %1323 = vmatpush1.msra.mxu0 0.0
  %1324 = vmatprep.subr.mxu0 0.0
  %1325 = vmatpush1.msra.mxu0 0.0
  %1326 = vmatprep.subr.mxu0 0.0
  %1327 = vmatpush1.msra.mxu0 0.0
  %1328 = vmatprep.subr.mxu0 0.0
  %1329 = vmatpush1.msra.mxu0 0.0
  %1330 = vmatprep.subr.mxu0 %v1078
  %1331 = vmatpush1.msra.mxu0 %v1077
  %1332 = vmatprep.subr.mxu0 0.0
  %1333 = vmatpush2.msra.mxu0 0.0
  %1334 = vmatprep.subr.mxu0 0.0
  %1335 = vmatpush2.msra.mxu0 0.0
  %1336 = vmatprep.subr.mxu0 0.0
  %1337 = vmatpush2.msra.mxu0 0.0
  %1338 = vmatprep.subr.mxu0 0.0
  %1339 = vmatpush2.msra.mxu0 0.0
  %1340 = vmatprep.subr.mxu0 0.0
  %1341 = vmatpush2.msra.mxu0 0.0
  %1342 = vmatprep.subr.mxu0 0.0
  %1343 = vmatpush2.msra.mxu0 0.0
  %1344 = vmatprep.subr.mxu0 0.0
  %1345 = vmatpush2.msra.mxu0 0.0
  %1346 = vmatprep.subr.mxu0 0.0
  %1347 = vmatpush2.msra.mxu0 0.0
  %1348 = vmatprep.subr.mxu0 0.0
  %1349 = vmatpush2.msra.mxu0 0.0
  %1350 = vmatprep.subr.mxu0 0.0
  %1351 = vmatpush2.msra.mxu0 0.0
  %1352 = vmatprep.subr.mxu0 0.0
  %1353 = vmatpush2.msra.mxu0 0.0
  %1354 = vmatprep.subr.mxu0 0.0
  %1355 = vmatpush2.msra.mxu0 0.0
  %1356 = vmatprep.subr.mxu0 0.0
  %1357 = vmatpush2.msra.mxu0 0.0
  %1358 = vmatprep.subr.mxu0 0.0
  %1359 = vmatpush2.msra.mxu0 0.0
  %1360 = vmatprep.subr.mxu0 0.0
  %1361 = vmatpush2.msra.mxu0 0.0
  %1362 = vmatprep.subr.mxu0 0.0
  %1363 = vmatpush2.msra.mxu0 0.0
  %1364 = vmatprep.mubr.f32.mxu0 0.0
  %1365 = vmatmul.mubr.f32.gmra.mxu0 %v1295
  %v1366 = vpop.f32.mrf.mxu0
  %v1367 = vadd.f32 %v1287, %v1366
  %v1368 = vpop.f32.mrf.mxu0
  %v1369 = vadd.f32 %v1287, %v1368
  %1370 = vmatprep.mubr.f32.mxu0 0.0
  %1371 = vmatmul.mubr.f32.gmra.mxu0 %v1298
  %v1372 = vpop.f32.mrf.mxu0
  %v1373 = vadd.f32 %v1292, %v1372
  %v1374 = vpop.f32.mrf.mxu0
  %v1375 = vadd.f32 %v1292, %v1374
  %1376 = vdwg.mxu0
  %v1377 = vadd.f32 %v1270, %v1367
  %v1378 = vadd.f32 %v1272, %v1369
  %v1379 = vadd.f32 %v1276, %v1373
  %v1380 = vadd.f32 %v1278, %v1375
  %1381 = vmatprep.subr.mxu0 0.0
  %1382 = vmatpush1.msra.mxu0 %v117
  %1383 = vmatprep.subr.mxu0 0.0
  %1384 = vmatpush1.msra.mxu0 %v116
  %1385 = vmatprep.subr.mxu0 0.0
  %1386 = vmatpush1.msra.mxu0 %v115
  %1387 = vmatprep.subr.mxu0 0.0
  %1388 = vmatpush1.msra.mxu0 %v114
  %1389 = vmatprep.subr.mxu0 0.0
  %1390 = vmatpush1.msra.mxu0 %v113
  %1391 = vmatprep.subr.mxu0 0.0
  %1392 = vmatpush1.msra.mxu0 %v112
  %1393 = vmatprep.subr.mxu0 0.0
  %1394 = vmatpush1.msra.mxu0 %v111
  %1395 = vmatprep.subr.mxu0 0.0
  %1396 = vmatpush1.msra.mxu0 %v110
  %1397 = vmatprep.subr.mxu0 0.0
  %1398 = vmatpush1.msra.mxu0 %v109
  %1399 = vmatprep.subr.mxu0 0.0
  %1400 = vmatpush1.msra.mxu0 %v108
  %1401 = vmatprep.subr.mxu0 0.0
  %1402 = vmatpush1.msra.mxu0 %v107
  %1403 = vmatprep.subr.mxu0 0.0
  %1404 = vmatpush1.msra.mxu0 %v106
  %1405 = vmatprep.subr.mxu0 0.0
  %1406 = vmatpush1.msra.mxu0 %v105
  %1407 = vmatprep.subr.mxu0 0.0
  %1408 = vmatpush1.msra.mxu0 %v104
  %1409 = vmatprep.subr.mxu0 0.0
  %1410 = vmatpush1.msra.mxu0 %v103
  %1411 = vmatprep.subr.mxu0 0.0
  %1412 = vmatpush1.msra.mxu0 %v102
  %1413 = vmatprep.subr.mxu0 0.0
  %1414 = vmatpush2.msra.mxu0 %v133
  %1415 = vmatprep.subr.mxu0 0.0
  %1416 = vmatpush2.msra.mxu0 %v132
  %1417 = vmatprep.subr.mxu0 0.0
  %1418 = vmatpush2.msra.mxu0 %v131
  %1419 = vmatprep.subr.mxu0 0.0
  %1420 = vmatpush2.msra.mxu0 %v130
  %1421 = vmatprep.subr.mxu0 0.0
  %1422 = vmatpush2.msra.mxu0 %v129
  %1423 = vmatprep.subr.mxu0 0.0
  %1424 = vmatpush2.msra.mxu0 %v128
  %1425 = vmatprep.subr.mxu0 0.0
  %1426 = vmatpush2.msra.mxu0 %v127
  %1427 = vmatprep.subr.mxu0 0.0
  %1428 = vmatpush2.msra.mxu0 %v126
  %1429 = vmatprep.subr.mxu0 0.0
  %1430 = vmatpush2.msra.mxu0 %v125
  %1431 = vmatprep.subr.mxu0 0.0
  %1432 = vmatpush2.msra.mxu0 %v124
  %1433 = vmatprep.subr.mxu0 0.0
  %1434 = vmatpush2.msra.mxu0 %v123
  %1435 = vmatprep.subr.mxu0 0.0
  %1436 = vmatpush2.msra.mxu0 %v122
  %1437 = vmatprep.subr.mxu0 0.0
  %1438 = vmatpush2.msra.mxu0 %v121
  %1439 = vmatprep.subr.mxu0 0.0
  %1440 = vmatpush2.msra.mxu0 %v120
  %1441 = vmatprep.subr.mxu0 0.0
  %1442 = vmatpush2.msra.mxu0 %v119
  %1443 = vmatprep.subr.mxu0 0.0
  %1444 = vmatpush2.msra.mxu0 %v118
  %1445 = vmatprep.mubr.f32.mxu0 %v1378
  %1446 = vmatmul.mubr.f32.gmra.mxu0 %v1377
  %v1447 = vpop.f32.mrf.mxu0
  %v1448 = vadd.f32 0.0, %v1447
  %v1449 = vpop.f32.mrf.mxu0
  %1450 = vmatprep.mubr.f32.mxu0 %v1380
  %1451 = vmatmul.mubr.f32.gmra.mxu0 %v1379
  %v1452 = vpop.f32.mrf.mxu0
  %v1453 = vadd.f32 0.0, %v1452
  %v1454 = vpop.f32.mrf.mxu0
  %1455 = vdwg.mxu0
  %vm1456 = vcmask 523264
  %v1457 = vsel %vm1456, %v1448, 0.0
  %1458 = vadd.xlane.f32.xlu0 %v1457
  %v1459 = vpop.xlane.xlu0 %1458
  %v1460 = vsel %vm1456, %v1453, 0.0
  %1461 = vadd.xlane.f32.xlu0 %v1460
  %v1462 = vpop.xlane.xlu0 %1461
  %v1463 = vrcp.pop 64.0
  %v1464 = vmul.f32 %v1459, %v1463
  %v1465 = vmul.f32 %v1462, %v1463
  %s1466 = scalar_lea.vmem %s0, 16
  %v1467 = vld [vmem:[%s1466] sm:$0xff]
  %v1468 = vld [vmem:[%s1466 + $0x8] sm:$0xff]
  %1471 = vrot.lane.b32.xlu0 %v1467, 17
  %v1472 = vpop.permute.xlu0 %1471
  %1473 = vrot.lane.b32.xlu0 %v1468, 17
  %v1474 = vpop.permute.xlu0 %1473
  %v1475 = vsel %vm144, %v1472, %v1474
  %v1478 = vsel %vm144, 0.0, %v1472
  %v1479 = vsel %vm151, %v1478, 0.0
  %v1480 = vsel %vm152, %v1475, 0.0
  %1481 = vrot.lane.b32.xlu0 %v1467, 16
  %v1482 = vpop.permute.xlu0 %1481
  %1483 = vrot.lane.b32.xlu0 %v1468, 16
  %v1484 = vpop.permute.xlu0 %1483
  %v1485 = vsel %vm159, %v1482, %v1484
  %v1488 = vsel %vm159, 0.0, %v1482
  %1489 = vrot.lane.b32.xlu0 %v1467, 15
  %v1490 = vpop.permute.xlu0 %1489
  %1491 = vrot.lane.b32.xlu0 %v1468, 15
  %v1492 = vpop.permute.xlu0 %1491
  %v1493 = vsel %vm168, %v1490, %v1492
  %v1496 = vsel %vm168, 0.0, %v1490
  %v1497 = vsel %vm175, %v1496, 0.0
  %v1498 = vsel %vm176, %v1493, 0.0
  %1499 = vrot.lane.b32.xlu0 %v1467, 1
  %v1500 = vpop.permute.xlu0 %1499
  %1501 = vrot.lane.b32.xlu0 %v1468, 1
  %v1502 = vpop.permute.xlu0 %1501
  %v1503 = vsel %vm183, %v1500, %v1502
  %v1506 = vsel %vm183, 0.0, %v1500
  %v1507 = vsel %vm151, %v1506, 0.0
  %v1508 = vsel %vm152, %v1503, 0.0
  %1509 = vrot.lane.b32.xlu0 %v1467, 127
  %v1510 = vpop.permute.xlu0 %1509
  %1511 = vrot.lane.b32.xlu0 %v1468, 127
  %v1512 = vpop.permute.xlu0 %1511
  %v1513 = vsel %vm194, %v1510, %v1512
  %v1516 = vsel %vm194, %v1512, 0.0
  %v1517 = vsel %vm175, %v1513, 0.0
  %v1518 = vsel %vm176, %v1516, 0.0
  %1519 = vrot.lane.b32.xlu0 %v1467, 113
  %v1520 = vpop.permute.xlu0 %1519
  %1521 = vrot.lane.b32.xlu0 %v1468, 113
  %v1522 = vpop.permute.xlu0 %1521
  %v1523 = vsel %vm205, %v1520, %v1522
  %v1526 = vsel %vm205, %v1522, 0.0
  %v1527 = vsel %vm151, %v1523, 0.0
  %v1528 = vsel %vm152, %v1526, 0.0
  %1529 = vrot.lane.b32.xlu0 %v1467, 112
  %v1530 = vpop.permute.xlu0 %1529
  %1531 = vrot.lane.b32.xlu0 %v1468, 112
  %v1532 = vpop.permute.xlu0 %1531
  %v1533 = vsel %vm216, %v1530, %v1532
  %v1536 = vsel %vm216, %v1532, 0.0
  %1537 = vrot.lane.b32.xlu0 %v1467, 111
  %v1538 = vpop.permute.xlu0 %1537
  %1539 = vrot.lane.b32.xlu0 %v1468, 111
  %v1540 = vpop.permute.xlu0 %1539
  %v1541 = vsel %vm225, %v1538, %v1540
  %v1544 = vsel %vm225, %v1540, 0.0
  %v1545 = vsel %vm175, %v1541, 0.0
  %v1546 = vsel %vm176, %v1544, 0.0
  %1547 = vmatprep.subr.mxu0 0.0
  %1548 = vmatpush1.msra.mxu0 0.0
  %1549 = vmatprep.subr.mxu0 0.0
  %1550 = vmatpush1.msra.mxu0 0.0
  %1551 = vmatprep.subr.mxu0 0.0
  %1552 = vmatpush1.msra.mxu0 0.0
  %1553 = vmatprep.subr.mxu0 0.0
  %1554 = vmatpush1.msra.mxu0 0.0
  %1555 = vmatprep.subr.mxu0 0.0
  %1556 = vmatpush1.msra.mxu0 0.0
  %1557 = vmatprep.subr.mxu0 0.0
  %1558 = vmatpush1.msra.mxu0 0.0
  %1559 = vmatprep.subr.mxu0 0.0
  %1560 = vmatpush1.msra.mxu0 0.0
  %1561 = vmatprep.subr.mxu0 %v1546
  %1562 = vmatpush1.msra.mxu0 %v1545
  %1563 = vmatprep.subr.mxu0 %v1536
  %1564 = vmatpush1.msra.mxu0 %v1533
  %1565 = vmatprep.subr.mxu0 %v1528
  %1566 = vmatpush1.msra.mxu0 %v1527
  %1567 = vmatprep.subr.mxu0 %v1518
  %1568 = vmatpush1.msra.mxu0 %v1517
  %1569 = vmatprep.subr.mxu0 %v1468
  %1570 = vmatpush1.msra.mxu0 %v1467
  %1571 = vmatprep.subr.mxu0 %v1508
  %1572 = vmatpush1.msra.mxu0 %v1507
  %1573 = vmatprep.subr.mxu0 %v1498
  %1574 = vmatpush1.msra.mxu0 %v1497
  %1575 = vmatprep.subr.mxu0 %v1485
  %1576 = vmatpush1.msra.mxu0 %v1488
  %1577 = vmatprep.subr.mxu0 %v1480
  %1578 = vmatpush1.msra.mxu0 %v1479
  %1579 = vmatprep.subr.mxu0 0.0
  %1580 = vmatpush2.msra.mxu0 0.0
  %1581 = vmatprep.subr.mxu0 0.0
  %1582 = vmatpush2.msra.mxu0 0.0
  %1583 = vmatprep.subr.mxu0 0.0
  %1584 = vmatpush2.msra.mxu0 0.0
  %1585 = vmatprep.subr.mxu0 0.0
  %1586 = vmatpush2.msra.mxu0 0.0
  %1587 = vmatprep.subr.mxu0 0.0
  %1588 = vmatpush2.msra.mxu0 0.0
  %1589 = vmatprep.subr.mxu0 0.0
  %1590 = vmatpush2.msra.mxu0 0.0
  %1591 = vmatprep.subr.mxu0 0.0
  %1592 = vmatpush2.msra.mxu0 0.0
  %1593 = vmatprep.subr.mxu0 0.0
  %1594 = vmatpush2.msra.mxu0 0.0
  %1595 = vmatprep.subr.mxu0 0.0
  %1596 = vmatpush2.msra.mxu0 0.0
  %1597 = vmatprep.subr.mxu0 0.0
  %1598 = vmatpush2.msra.mxu0 0.0
  %1599 = vmatprep.subr.mxu0 0.0
  %1600 = vmatpush2.msra.mxu0 0.0
  %1601 = vmatprep.subr.mxu0 0.0
  %1602 = vmatpush2.msra.mxu0 0.0
  %1603 = vmatprep.subr.mxu0 0.0
  %1604 = vmatpush2.msra.mxu0 0.0
  %1605 = vmatprep.subr.mxu0 0.0
  %1606 = vmatpush2.msra.mxu0 0.0
  %1607 = vmatprep.subr.mxu0 0.0
  %1608 = vmatpush2.msra.mxu0 0.0
  %1609 = vmatprep.subr.mxu0 0.0
  %1610 = vmatpush2.msra.mxu0 0.0
  %1611 = vmatprep.mubr.f32.mxu0 0.0
  %1612 = vmatmul.mubr.f32.gmra.mxu0 %v239
  %v1613 = vpop.f32.mrf.mxu0
  %v1614 = vadd.f32 %v235, %v1613
  %v1615 = vpop.f32.mrf.mxu0
  %v1616 = vadd.f32 %v235, %v1615
  %1617 = vdwg.mxu0
  %v1618 = vadd.f32 %v1614, %v1616
  %1619 = vadd.xlane.f32.xlu0 %v1618
  %v1620 = vpop.xlane.xlu0 %1619
  %v1621 = vmul.f32 %v1620, %v315
  %v1622 = vsub.f32 %v1614, %v1621
  %v1623 = vsub.f32 %v1616, %v1621
  %v1624 = vmul.f32 %v1622, %v1622
  %v1625 = vmul.f32 %v1623, %v1623
  %v1626 = vadd.f32 %v1624, %v1625
  %1627 = vadd.xlane.f32.xlu0 %v1626
  %v1628 = vpop.xlane.xlu0 %1627
  %v1629 = vmul.f32 %v1628, %v315
  %v1630 = vadd.f32 %v1629, 1e-05
  %v1631 = vrsqrt.pop %v1630
  %v1632 = vmul.f32 %v1622, %v1631
  %v1633 = vmul.f32 %v1623, %v1631
  %v1634 = vmax.f32 %v1632, 0.0
  %v1635 = vmax.f32 %v1633, 0.0
  %1638 = vrot.lane.b32.xlu0 %v1634, 17
  %v1639 = vpop.permute.xlu0 %1638
  %1640 = vrot.lane.b32.xlu0 %v1635, 17
  %v1641 = vpop.permute.xlu0 %1640
  %v1642 = vsel %vm144, %v1639, %v1641
  %v1645 = vsel %vm144, 0.0, %v1639
  %v1646 = vsel %vm151, %v1645, 0.0
  %v1647 = vsel %vm152, %v1642, 0.0
  %1648 = vrot.lane.b32.xlu0 %v1634, 16
  %v1649 = vpop.permute.xlu0 %1648
  %1650 = vrot.lane.b32.xlu0 %v1635, 16
  %v1651 = vpop.permute.xlu0 %1650
  %v1652 = vsel %vm159, %v1649, %v1651
  %v1655 = vsel %vm159, 0.0, %v1649
  %1656 = vrot.lane.b32.xlu0 %v1634, 15
  %v1657 = vpop.permute.xlu0 %1656
  %1658 = vrot.lane.b32.xlu0 %v1635, 15
  %v1659 = vpop.permute.xlu0 %1658
  %v1660 = vsel %vm168, %v1657, %v1659
  %v1663 = vsel %vm168, 0.0, %v1657
  %v1664 = vsel %vm175, %v1663, 0.0
  %v1665 = vsel %vm176, %v1660, 0.0
  %1666 = vrot.lane.b32.xlu0 %v1634, 1
  %v1667 = vpop.permute.xlu0 %1666
  %1668 = vrot.lane.b32.xlu0 %v1635, 1
  %v1669 = vpop.permute.xlu0 %1668
  %v1670 = vsel %vm183, %v1667, %v1669
  %v1673 = vsel %vm183, 0.0, %v1667
  %v1674 = vsel %vm151, %v1673, 0.0
  %v1675 = vsel %vm152, %v1670, 0.0
  %1676 = vrot.lane.b32.xlu0 %v1634, 127
  %v1677 = vpop.permute.xlu0 %1676
  %1678 = vrot.lane.b32.xlu0 %v1635, 127
  %v1679 = vpop.permute.xlu0 %1678
  %v1680 = vsel %vm194, %v1677, %v1679
  %v1683 = vsel %vm194, %v1679, 0.0
  %v1684 = vsel %vm175, %v1680, 0.0
  %v1685 = vsel %vm176, %v1683, 0.0
  %1686 = vrot.lane.b32.xlu0 %v1634, 113
  %v1687 = vpop.permute.xlu0 %1686
  %1688 = vrot.lane.b32.xlu0 %v1635, 113
  %v1689 = vpop.permute.xlu0 %1688
  %v1690 = vsel %vm205, %v1687, %v1689
  %v1693 = vsel %vm205, %v1689, 0.0
  %v1694 = vsel %vm151, %v1690, 0.0
  %v1695 = vsel %vm152, %v1693, 0.0
  %1696 = vrot.lane.b32.xlu0 %v1634, 112
  %v1697 = vpop.permute.xlu0 %1696
  %1698 = vrot.lane.b32.xlu0 %v1635, 112
  %v1699 = vpop.permute.xlu0 %1698
  %v1700 = vsel %vm216, %v1697, %v1699
  %v1703 = vsel %vm216, %v1699, 0.0
  %1704 = vrot.lane.b32.xlu0 %v1634, 111
  %v1705 = vpop.permute.xlu0 %1704
  %1706 = vrot.lane.b32.xlu0 %v1635, 111
  %v1707 = vpop.permute.xlu0 %1706
  %v1708 = vsel %vm225, %v1705, %v1707
  %v1711 = vsel %vm225, %v1707, 0.0
  %v1712 = vsel %vm175, %v1708, 0.0
  %v1713 = vsel %vm176, %v1711, 0.0
  %1714 = vmatprep.subr.mxu0 0.0
  %1715 = vmatpush1.msra.mxu0 0.0
  %1716 = vmatprep.subr.mxu0 0.0
  %1717 = vmatpush1.msra.mxu0 0.0
  %1718 = vmatprep.subr.mxu0 0.0
  %1719 = vmatpush1.msra.mxu0 0.0
  %1720 = vmatprep.subr.mxu0 0.0
  %1721 = vmatpush1.msra.mxu0 0.0
  %1722 = vmatprep.subr.mxu0 0.0
  %1723 = vmatpush1.msra.mxu0 0.0
  %1724 = vmatprep.subr.mxu0 0.0
  %1725 = vmatpush1.msra.mxu0 0.0
  %1726 = vmatprep.subr.mxu0 0.0
  %1727 = vmatpush1.msra.mxu0 0.0
  %1728 = vmatprep.subr.mxu0 %v1713
  %1729 = vmatpush1.msra.mxu0 %v1712
  %1730 = vmatprep.subr.mxu0 %v1703
  %1731 = vmatpush1.msra.mxu0 %v1700
  %1732 = vmatprep.subr.mxu0 %v1695
  %1733 = vmatpush1.msra.mxu0 %v1694
  %1734 = vmatprep.subr.mxu0 %v1685
  %1735 = vmatpush1.msra.mxu0 %v1684
  %1736 = vmatprep.subr.mxu0 %v1635
  %1737 = vmatpush1.msra.mxu0 %v1634
  %1738 = vmatprep.subr.mxu0 %v1675
  %1739 = vmatpush1.msra.mxu0 %v1674
  %1740 = vmatprep.subr.mxu0 %v1665
  %1741 = vmatpush1.msra.mxu0 %v1664
  %1742 = vmatprep.subr.mxu0 %v1652
  %1743 = vmatpush1.msra.mxu0 %v1655
  %1744 = vmatprep.subr.mxu0 %v1647
  %1745 = vmatpush1.msra.mxu0 %v1646
  %1746 = vmatprep.subr.mxu0 0.0
  %1747 = vmatpush2.msra.mxu0 0.0
  %1748 = vmatprep.subr.mxu0 0.0
  %1749 = vmatpush2.msra.mxu0 0.0
  %1750 = vmatprep.subr.mxu0 0.0
  %1751 = vmatpush2.msra.mxu0 0.0
  %1752 = vmatprep.subr.mxu0 0.0
  %1753 = vmatpush2.msra.mxu0 0.0
  %1754 = vmatprep.subr.mxu0 0.0
  %1755 = vmatpush2.msra.mxu0 0.0
  %1756 = vmatprep.subr.mxu0 0.0
  %1757 = vmatpush2.msra.mxu0 0.0
  %1758 = vmatprep.subr.mxu0 0.0
  %1759 = vmatpush2.msra.mxu0 0.0
  %1760 = vmatprep.subr.mxu0 0.0
  %1761 = vmatpush2.msra.mxu0 0.0
  %1762 = vmatprep.subr.mxu0 0.0
  %1763 = vmatpush2.msra.mxu0 0.0
  %1764 = vmatprep.subr.mxu0 0.0
  %1765 = vmatpush2.msra.mxu0 0.0
  %1766 = vmatprep.subr.mxu0 0.0
  %1767 = vmatpush2.msra.mxu0 0.0
  %1768 = vmatprep.subr.mxu0 0.0
  %1769 = vmatpush2.msra.mxu0 0.0
  %1770 = vmatprep.subr.mxu0 0.0
  %1771 = vmatpush2.msra.mxu0 0.0
  %1772 = vmatprep.subr.mxu0 0.0
  %1773 = vmatpush2.msra.mxu0 0.0
  %1774 = vmatprep.subr.mxu0 0.0
  %1775 = vmatpush2.msra.mxu0 0.0
  %1776 = vmatprep.subr.mxu0 0.0
  %1777 = vmatpush2.msra.mxu0 0.0
  %1778 = vmatprep.mubr.f32.mxu0 0.0
  %1779 = vmatmul.mubr.f32.gmra.mxu0 %v417
  %v1780 = vpop.f32.mrf.mxu0
  %v1781 = vadd.f32 %v414, %v1780
  %v1782 = vpop.f32.mrf.mxu0
  %v1783 = vadd.f32 %v414, %v1782
  %1784 = vdwg.mxu0
  %v1785 = vadd.f32 %v1781, %v1783
  %1786 = vadd.xlane.f32.xlu0 %v1785
  %v1787 = vpop.xlane.xlu0 %1786
  %v1788 = vmul.f32 %v1787, %v315
  %v1789 = vsub.f32 %v1781, %v1788
  %v1790 = vsub.f32 %v1783, %v1788
  %v1791 = vmul.f32 %v1789, %v1789
  %v1792 = vmul.f32 %v1790, %v1790
  %v1793 = vadd.f32 %v1791, %v1792
  %1794 = vadd.xlane.f32.xlu0 %v1793
  %v1795 = vpop.xlane.xlu0 %1794
  %v1796 = vmul.f32 %v1795, %v315
  %v1797 = vadd.f32 %v1796, 1e-05
  %v1798 = vrsqrt.pop %v1797
  %v1799 = vmul.f32 %v1789, %v1798
  %v1800 = vmul.f32 %v1790, %v1798
  %v1801 = vmax.f32 %v1799, 0.0
  %v1802 = vmax.f32 %v1800, 0.0
  %1805 = vrot.lane.b32.xlu0 %v1801, 17
  %v1806 = vpop.permute.xlu0 %1805
  %1807 = vrot.lane.b32.xlu0 %v1802, 17
  %v1808 = vpop.permute.xlu0 %1807
  %v1809 = vsel %vm144, %v1806, %v1808
  %v1812 = vsel %vm144, 0.0, %v1806
  %v1813 = vsel %vm151, %v1812, 0.0
  %v1814 = vsel %vm152, %v1809, 0.0
  %1815 = vrot.lane.b32.xlu0 %v1801, 16
  %v1816 = vpop.permute.xlu0 %1815
  %1817 = vrot.lane.b32.xlu0 %v1802, 16
  %v1818 = vpop.permute.xlu0 %1817
  %v1819 = vsel %vm159, %v1816, %v1818
  %v1822 = vsel %vm159, 0.0, %v1816
  %1823 = vrot.lane.b32.xlu0 %v1801, 15
  %v1824 = vpop.permute.xlu0 %1823
  %1825 = vrot.lane.b32.xlu0 %v1802, 15
  %v1826 = vpop.permute.xlu0 %1825
  %v1827 = vsel %vm168, %v1824, %v1826
  %v1830 = vsel %vm168, 0.0, %v1824
  %v1831 = vsel %vm175, %v1830, 0.0
  %v1832 = vsel %vm176, %v1827, 0.0
  %1833 = vrot.lane.b32.xlu0 %v1801, 1
  %v1834 = vpop.permute.xlu0 %1833
  %1835 = vrot.lane.b32.xlu0 %v1802, 1
  %v1836 = vpop.permute.xlu0 %1835
  %v1837 = vsel %vm183, %v1834, %v1836
  %v1840 = vsel %vm183, 0.0, %v1834
  %v1841 = vsel %vm151, %v1840, 0.0
  %v1842 = vsel %vm152, %v1837, 0.0
  %1843 = vrot.lane.b32.xlu0 %v1801, 127
  %v1844 = vpop.permute.xlu0 %1843
  %1845 = vrot.lane.b32.xlu0 %v1802, 127
  %v1846 = vpop.permute.xlu0 %1845
  %v1847 = vsel %vm194, %v1844, %v1846
  %v1850 = vsel %vm194, %v1846, 0.0
  %v1851 = vsel %vm175, %v1847, 0.0
  %v1852 = vsel %vm176, %v1850, 0.0
  %1853 = vrot.lane.b32.xlu0 %v1801, 113
  %v1854 = vpop.permute.xlu0 %1853
  %1855 = vrot.lane.b32.xlu0 %v1802, 113
  %v1856 = vpop.permute.xlu0 %1855
  %v1857 = vsel %vm205, %v1854, %v1856
  %v1860 = vsel %vm205, %v1856, 0.0
  %v1861 = vsel %vm151, %v1857, 0.0
  %v1862 = vsel %vm152, %v1860, 0.0
  %1863 = vrot.lane.b32.xlu0 %v1801, 112
  %v1864 = vpop.permute.xlu0 %1863
  %1865 = vrot.lane.b32.xlu0 %v1802, 112
  %v1866 = vpop.permute.xlu0 %1865
  %v1867 = vsel %vm216, %v1864, %v1866
  %v1870 = vsel %vm216, %v1866, 0.0
  %1871 = vrot.lane.b32.xlu0 %v1801, 111
  %v1872 = vpop.permute.xlu0 %1871
  %1873 = vrot.lane.b32.xlu0 %v1802, 111
  %v1874 = vpop.permute.xlu0 %1873
  %v1875 = vsel %vm225, %v1872, %v1874
  %v1878 = vsel %vm225, %v1874, 0.0
  %v1879 = vsel %vm175, %v1875, 0.0
  %v1880 = vsel %vm176, %v1878, 0.0
  %1881 = vmatprep.subr.mxu0 0.0
  %1882 = vmatpush1.msra.mxu0 0.0
  %1883 = vmatprep.subr.mxu0 0.0
  %1884 = vmatpush1.msra.mxu0 0.0
  %1885 = vmatprep.subr.mxu0 0.0
  %1886 = vmatpush1.msra.mxu0 0.0
  %1887 = vmatprep.subr.mxu0 0.0
  %1888 = vmatpush1.msra.mxu0 0.0
  %1889 = vmatprep.subr.mxu0 0.0
  %1890 = vmatpush1.msra.mxu0 0.0
  %1891 = vmatprep.subr.mxu0 0.0
  %1892 = vmatpush1.msra.mxu0 0.0
  %1893 = vmatprep.subr.mxu0 0.0
  %1894 = vmatpush1.msra.mxu0 0.0
  %1895 = vmatprep.subr.mxu0 %v1880
  %1896 = vmatpush1.msra.mxu0 %v1879
  %1897 = vmatprep.subr.mxu0 %v1870
  %1898 = vmatpush1.msra.mxu0 %v1867
  %1899 = vmatprep.subr.mxu0 %v1862
  %1900 = vmatpush1.msra.mxu0 %v1861
  %1901 = vmatprep.subr.mxu0 %v1852
  %1902 = vmatpush1.msra.mxu0 %v1851
  %1903 = vmatprep.subr.mxu0 %v1802
  %1904 = vmatpush1.msra.mxu0 %v1801
  %1905 = vmatprep.subr.mxu0 %v1842
  %1906 = vmatpush1.msra.mxu0 %v1841
  %1907 = vmatprep.subr.mxu0 %v1832
  %1908 = vmatpush1.msra.mxu0 %v1831
  %1909 = vmatprep.subr.mxu0 %v1819
  %1910 = vmatpush1.msra.mxu0 %v1822
  %1911 = vmatprep.subr.mxu0 %v1814
  %1912 = vmatpush1.msra.mxu0 %v1813
  %1913 = vmatprep.subr.mxu0 0.0
  %1914 = vmatpush2.msra.mxu0 0.0
  %1915 = vmatprep.subr.mxu0 0.0
  %1916 = vmatpush2.msra.mxu0 0.0
  %1917 = vmatprep.subr.mxu0 0.0
  %1918 = vmatpush2.msra.mxu0 0.0
  %1919 = vmatprep.subr.mxu0 0.0
  %1920 = vmatpush2.msra.mxu0 0.0
  %1921 = vmatprep.subr.mxu0 0.0
  %1922 = vmatpush2.msra.mxu0 0.0
  %1923 = vmatprep.subr.mxu0 0.0
  %1924 = vmatpush2.msra.mxu0 0.0
  %1925 = vmatprep.subr.mxu0 0.0
  %1926 = vmatpush2.msra.mxu0 0.0
  %1927 = vmatprep.subr.mxu0 0.0
  %1928 = vmatpush2.msra.mxu0 0.0
  %1929 = vmatprep.subr.mxu0 0.0
  %1930 = vmatpush2.msra.mxu0 0.0
  %1931 = vmatprep.subr.mxu0 0.0
  %1932 = vmatpush2.msra.mxu0 0.0
  %1933 = vmatprep.subr.mxu0 0.0
  %1934 = vmatpush2.msra.mxu0 0.0
  %1935 = vmatprep.subr.mxu0 0.0
  %1936 = vmatpush2.msra.mxu0 0.0
  %1937 = vmatprep.subr.mxu0 0.0
  %1938 = vmatpush2.msra.mxu0 0.0
  %1939 = vmatprep.subr.mxu0 0.0
  %1940 = vmatpush2.msra.mxu0 0.0
  %1941 = vmatprep.subr.mxu0 0.0
  %1942 = vmatpush2.msra.mxu0 0.0
  %1943 = vmatprep.subr.mxu0 0.0
  %1944 = vmatpush2.msra.mxu0 0.0
  %1945 = vmatprep.mubr.f32.mxu0 0.0
  %1946 = vmatmul.mubr.f32.gmra.mxu0 %v594
  %v1947 = vpop.f32.mrf.mxu0
  %v1948 = vadd.f32 %v591, %v1947
  %v1949 = vpop.f32.mrf.mxu0
  %v1950 = vadd.f32 %v591, %v1949
  %1951 = vdwg.mxu0
  %v1952 = vadd.f32 %v1948, %v1950
  %1953 = vadd.xlane.f32.xlu0 %v1952
  %v1954 = vpop.xlane.xlu0 %1953
  %v1955 = vmul.f32 %v1954, %v315
  %v1956 = vmul.f32 %v1955, %v671
  %v1957 = vsel %vm673, %v1956, 0.0
  %v1958 = vrot.slane %v1957, 4
  %v1959 = vadd.f32 %v1957, %v1958
  %v1960 = vrot.slane %v1959, 2
  %v1961 = vadd.f32 %v1959, %v1960
  %v1962 = vrot.slane %v1961, 1
  %v1963 = vadd.f32 %v1961, %v1962
  %v1964 = vadd.f32 %v1963, %v681
  %v1965 = vmax.f32 %v1964, 0.0
  %v1966 = vlaneseq
  %v1967 = vshrl.u32 %v1966, 7
  %v1968 = vsub.s32 0, %v1967
  %v1969 = vrot.slane %v1965, %v1968
  %v1970 = vmul.f32 %v684, %v1969
  %v1971 = vsel %vm673, %v1970, 0.0
  %1972 = vadd.xlane.f32.xlu0 %v1971
  %v1973 = vpop.xlane.xlu0 %1972
  %v1974 = vadd.f32 %v1973, %v693
  %v1975 = vadd.f32 %v1974, 3.0
  %v1976 = vmax.f32 %v1975, 0.0
  %v1977 = vmin.f32 %v1976, 6.0
  %v1978 = vmul.f32 %v1977, 0.16666667
  %1980 = vset.pattern.permute.xlu0 0
  %1981 = vperm.xlu0 %1980, %v1978
  %v1982 = vpop.permute.xlu0 %1981
  %v1984 = vmul.f32 %v1948, %v1982
  %v1985 = vmul.f32 %v1950, %v1982
  %v1986 = vadd.f32 %v1614, %v1984
  %v1987 = vadd.f32 %v1616, %v1985
  %v1988 = vadd.f32 %v1986, %v1987
  %1989 = vadd.xlane.f32.xlu0 %v1988
  %v1990 = vpop.xlane.xlu0 %1989
  %v1991 = vmul.f32 %v1990, %v315
  %v1992 = vsub.f32 %v1986, %v1991
  %v1993 = vsub.f32 %v1987, %v1991
  %v1994 = vmul.f32 %v1992, %v1992
  %v1995 = vmul.f32 %v1993, %v1993
  %v1996 = vadd.f32 %v1994, %v1995
  %1997 = vadd.xlane.f32.xlu0 %v1996
  %v1998 = vpop.xlane.xlu0 %1997
  %v1999 = vmul.f32 %v1998, %v315
  %v2000 = vadd.f32 %v1999, 1e-05
  %v2001 = vrsqrt.pop %v2000
  %v2002 = vmul.f32 %v1992, %v2001
  %v2003 = vmul.f32 %v1993, %v2001
  %v2004 = vadd.f32 %v2002, 3.0
  %v2005 = vadd.f32 %v2003, 3.0
  %v2006 = vmax.f32 %v2004, 0.0
  %v2007 = vmax.f32 %v2005, 0.0
  %v2008 = vmin.f32 %v2006, 6.0
  %v2009 = vmin.f32 %v2007, 6.0
  %v2010 = vmul.f32 %v2002, %v2008
  %v2011 = vmul.f32 %v2003, %v2009
  %v2012 = vmul.f32 %v2010, 0.16666667
  %v2013 = vmul.f32 %v2011, 0.16666667
  %2016 = vrot.lane.b32.xlu0 %v2012, 17
  %v2017 = vpop.permute.xlu0 %2016
  %2018 = vrot.lane.b32.xlu0 %v2013, 17
  %v2019 = vpop.permute.xlu0 %2018
  %v2020 = vsel %vm144, %v2017, %v2019
  %v2023 = vsel %vm144, 0.0, %v2017
  %v2024 = vsel %vm151, %v2023, 0.0
  %v2025 = vsel %vm152, %v2020, 0.0
  %2026 = vrot.lane.b32.xlu0 %v2012, 16
  %v2027 = vpop.permute.xlu0 %2026
  %2028 = vrot.lane.b32.xlu0 %v2013, 16
  %v2029 = vpop.permute.xlu0 %2028
  %v2030 = vsel %vm159, %v2027, %v2029
  %v2033 = vsel %vm159, 0.0, %v2027
  %2034 = vrot.lane.b32.xlu0 %v2012, 15
  %v2035 = vpop.permute.xlu0 %2034
  %2036 = vrot.lane.b32.xlu0 %v2013, 15
  %v2037 = vpop.permute.xlu0 %2036
  %v2038 = vsel %vm168, %v2035, %v2037
  %v2041 = vsel %vm168, 0.0, %v2035
  %v2042 = vsel %vm175, %v2041, 0.0
  %v2043 = vsel %vm176, %v2038, 0.0
  %2044 = vrot.lane.b32.xlu0 %v2012, 1
  %v2045 = vpop.permute.xlu0 %2044
  %2046 = vrot.lane.b32.xlu0 %v2013, 1
  %v2047 = vpop.permute.xlu0 %2046
  %v2048 = vsel %vm183, %v2045, %v2047
  %v2051 = vsel %vm183, 0.0, %v2045
  %v2052 = vsel %vm151, %v2051, 0.0
  %v2053 = vsel %vm152, %v2048, 0.0
  %2054 = vrot.lane.b32.xlu0 %v2012, 127
  %v2055 = vpop.permute.xlu0 %2054
  %2056 = vrot.lane.b32.xlu0 %v2013, 127
  %v2057 = vpop.permute.xlu0 %2056
  %v2058 = vsel %vm194, %v2055, %v2057
  %v2061 = vsel %vm194, %v2057, 0.0
  %v2062 = vsel %vm175, %v2058, 0.0
  %v2063 = vsel %vm176, %v2061, 0.0
  %2064 = vrot.lane.b32.xlu0 %v2012, 113
  %v2065 = vpop.permute.xlu0 %2064
  %2066 = vrot.lane.b32.xlu0 %v2013, 113
  %v2067 = vpop.permute.xlu0 %2066
  %v2068 = vsel %vm205, %v2065, %v2067
  %v2071 = vsel %vm205, %v2067, 0.0
  %v2072 = vsel %vm151, %v2068, 0.0
  %v2073 = vsel %vm152, %v2071, 0.0
  %2074 = vrot.lane.b32.xlu0 %v2012, 112
  %v2075 = vpop.permute.xlu0 %2074
  %2076 = vrot.lane.b32.xlu0 %v2013, 112
  %v2077 = vpop.permute.xlu0 %2076
  %v2078 = vsel %vm216, %v2075, %v2077
  %v2081 = vsel %vm216, %v2077, 0.0
  %2082 = vrot.lane.b32.xlu0 %v2012, 111
  %v2083 = vpop.permute.xlu0 %2082
  %2084 = vrot.lane.b32.xlu0 %v2013, 111
  %v2085 = vpop.permute.xlu0 %2084
  %v2086 = vsel %vm225, %v2083, %v2085
  %v2089 = vsel %vm225, %v2085, 0.0
  %v2090 = vsel %vm175, %v2086, 0.0
  %v2091 = vsel %vm176, %v2089, 0.0
  %v2092 = vmul.f32 %v817, %v2024
  %v2093 = vmul.f32 %v817, %v2025
  %v2094 = vadd.f32 %v824, %v2092
  %v2095 = vadd.f32 %v824, %v2093
  %v2096 = vmul.f32 %v830, %v2033
  %v2097 = vmul.f32 %v830, %v2030
  %v2098 = vadd.f32 %v2094, %v2096
  %v2099 = vadd.f32 %v2095, %v2097
  %v2100 = vmul.f32 %v838, %v2042
  %v2101 = vmul.f32 %v838, %v2043
  %v2102 = vadd.f32 %v2098, %v2100
  %v2103 = vadd.f32 %v2099, %v2101
  %v2104 = vmul.f32 %v846, %v2052
  %v2105 = vmul.f32 %v846, %v2053
  %v2106 = vadd.f32 %v2102, %v2104
  %v2107 = vadd.f32 %v2103, %v2105
  %v2108 = vmul.f32 %v854, %v2012
  %v2109 = vmul.f32 %v854, %v2013
  %v2110 = vadd.f32 %v2106, %v2108
  %v2111 = vadd.f32 %v2107, %v2109
  %v2112 = vmul.f32 %v862, %v2062
  %v2113 = vmul.f32 %v862, %v2063
  %v2114 = vadd.f32 %v2110, %v2112
  %v2115 = vadd.f32 %v2111, %v2113
  %v2116 = vmul.f32 %v870, %v2072
  %v2117 = vmul.f32 %v870, %v2073
  %v2118 = vadd.f32 %v2114, %v2116
  %v2119 = vadd.f32 %v2115, %v2117
  %v2120 = vmul.f32 %v878, %v2078
  %v2121 = vmul.f32 %v878, %v2081
  %v2122 = vadd.f32 %v2118, %v2120
  %v2123 = vadd.f32 %v2119, %v2121
  %v2124 = vmul.f32 %v886, %v2090
  %v2125 = vmul.f32 %v886, %v2091
  %v2126 = vadd.f32 %v2122, %v2124
  %v2127 = vadd.f32 %v2123, %v2125
  %v2128 = vadd.f32 %v2126, %v2127
  %2129 = vadd.xlane.f32.xlu0 %v2128
  %v2130 = vpop.xlane.xlu0 %2129
  %v2131 = vmul.f32 %v2130, %v315
  %v2132 = vsub.f32 %v2126, %v2131
  %v2133 = vsub.f32 %v2127, %v2131
  %v2134 = vmul.f32 %v2132, %v2132
  %v2135 = vmul.f32 %v2133, %v2133
  %v2136 = vadd.f32 %v2134, %v2135
  %2137 = vadd.xlane.f32.xlu0 %v2136
  %v2138 = vpop.xlane.xlu0 %2137
  %v2139 = vmul.f32 %v2138, %v315
  %v2140 = vadd.f32 %v2139, 1e-05
  %v2141 = vrsqrt.pop %v2140
  %v2142 = vmul.f32 %v2132, %v2141
  %v2143 = vmul.f32 %v2133, %v2141
  %v2144 = vadd.f32 %v2142, 3.0
  %v2145 = vadd.f32 %v2143, 3.0
  %v2146 = vmax.f32 %v2144, 0.0
  %v2147 = vmax.f32 %v2145, 0.0
  %v2148 = vmin.f32 %v2146, 6.0
  %v2149 = vmin.f32 %v2147, 6.0
  %v2150 = vmul.f32 %v2142, %v2148
  %v2151 = vmul.f32 %v2143, %v2149
  %v2152 = vmul.f32 %v2150, 0.16666667
  %v2153 = vmul.f32 %v2151, 0.16666667
  %2156 = vrot.lane.b32.xlu0 %v2152, 17
  %v2157 = vpop.permute.xlu0 %2156
  %2158 = vrot.lane.b32.xlu0 %v2153, 17
  %v2159 = vpop.permute.xlu0 %2158
  %v2160 = vsel %vm144, %v2157, %v2159
  %v2163 = vsel %vm144, 0.0, %v2157
  %v2164 = vsel %vm151, %v2163, 0.0
  %v2165 = vsel %vm152, %v2160, 0.0
  %2166 = vrot.lane.b32.xlu0 %v2152, 16
  %v2167 = vpop.permute.xlu0 %2166
  %2168 = vrot.lane.b32.xlu0 %v2153, 16
  %v2169 = vpop.permute.xlu0 %2168
  %v2170 = vsel %vm159, %v2167, %v2169
  %v2173 = vsel %vm159, 0.0, %v2167
  %2174 = vrot.lane.b32.xlu0 %v2152, 15
  %v2175 = vpop.permute.xlu0 %2174
  %2176 = vrot.lane.b32.xlu0 %v2153, 15
  %v2177 = vpop.permute.xlu0 %2176
  %v2178 = vsel %vm168, %v2175, %v2177
  %v2181 = vsel %vm168, 0.0, %v2175
  %v2182 = vsel %vm175, %v2181, 0.0
  %v2183 = vsel %vm176, %v2178, 0.0
  %2184 = vrot.lane.b32.xlu0 %v2152, 1
  %v2185 = vpop.permute.xlu0 %2184
  %2186 = vrot.lane.b32.xlu0 %v2153, 1
  %v2187 = vpop.permute.xlu0 %2186
  %v2188 = vsel %vm183, %v2185, %v2187
  %v2191 = vsel %vm183, 0.0, %v2185
  %v2192 = vsel %vm151, %v2191, 0.0
  %v2193 = vsel %vm152, %v2188, 0.0
  %2194 = vrot.lane.b32.xlu0 %v2152, 127
  %v2195 = vpop.permute.xlu0 %2194
  %2196 = vrot.lane.b32.xlu0 %v2153, 127
  %v2197 = vpop.permute.xlu0 %2196
  %v2198 = vsel %vm194, %v2195, %v2197
  %v2201 = vsel %vm194, %v2197, 0.0
  %v2202 = vsel %vm175, %v2198, 0.0
  %v2203 = vsel %vm176, %v2201, 0.0
  %2204 = vrot.lane.b32.xlu0 %v2152, 113
  %v2205 = vpop.permute.xlu0 %2204
  %2206 = vrot.lane.b32.xlu0 %v2153, 113
  %v2207 = vpop.permute.xlu0 %2206
  %v2208 = vsel %vm205, %v2205, %v2207
  %v2211 = vsel %vm205, %v2207, 0.0
  %v2212 = vsel %vm151, %v2208, 0.0
  %v2213 = vsel %vm152, %v2211, 0.0
  %2214 = vrot.lane.b32.xlu0 %v2152, 112
  %v2215 = vpop.permute.xlu0 %2214
  %2216 = vrot.lane.b32.xlu0 %v2153, 112
  %v2217 = vpop.permute.xlu0 %2216
  %v2218 = vsel %vm216, %v2215, %v2217
  %v2221 = vsel %vm216, %v2217, 0.0
  %2222 = vrot.lane.b32.xlu0 %v2152, 111
  %v2223 = vpop.permute.xlu0 %2222
  %2224 = vrot.lane.b32.xlu0 %v2153, 111
  %v2225 = vpop.permute.xlu0 %2224
  %v2226 = vsel %vm225, %v2223, %v2225
  %v2229 = vsel %vm225, %v2225, 0.0
  %v2230 = vsel %vm175, %v2226, 0.0
  %v2231 = vsel %vm176, %v2229, 0.0
  %2232 = vmatprep.subr.mxu0 0.0
  %2233 = vmatpush1.msra.mxu0 0.0
  %2234 = vmatprep.subr.mxu0 0.0
  %2235 = vmatpush1.msra.mxu0 0.0
  %2236 = vmatprep.subr.mxu0 0.0
  %2237 = vmatpush1.msra.mxu0 0.0
  %2238 = vmatprep.subr.mxu0 0.0
  %2239 = vmatpush1.msra.mxu0 0.0
  %2240 = vmatprep.subr.mxu0 0.0
  %2241 = vmatpush1.msra.mxu0 0.0
  %2242 = vmatprep.subr.mxu0 0.0
  %2243 = vmatpush1.msra.mxu0 0.0
  %2244 = vmatprep.subr.mxu0 0.0
  %2245 = vmatpush1.msra.mxu0 0.0
  %2246 = vmatprep.subr.mxu0 %v2231
  %2247 = vmatpush1.msra.mxu0 %v2230
  %2248 = vmatprep.subr.mxu0 %v2221
  %2249 = vmatpush1.msra.mxu0 %v2218
  %2250 = vmatprep.subr.mxu0 %v2213
  %2251 = vmatpush1.msra.mxu0 %v2212
  %2252 = vmatprep.subr.mxu0 %v2203
  %2253 = vmatpush1.msra.mxu0 %v2202
  %2254 = vmatprep.subr.mxu0 %v2153
  %2255 = vmatpush1.msra.mxu0 %v2152
  %2256 = vmatprep.subr.mxu0 %v2193
  %2257 = vmatpush1.msra.mxu0 %v2192
  %2258 = vmatprep.subr.mxu0 %v2183
  %2259 = vmatpush1.msra.mxu0 %v2182
  %2260 = vmatprep.subr.mxu0 %v2170
  %2261 = vmatpush1.msra.mxu0 %v2173
  %2262 = vmatprep.subr.mxu0 %v2165
  %2263 = vmatpush1.msra.mxu0 %v2164
  %2264 = vmatprep.subr.mxu0 0.0
  %2265 = vmatpush2.msra.mxu0 0.0
  %2266 = vmatprep.subr.mxu0 0.0
  %2267 = vmatpush2.msra.mxu0 0.0
  %2268 = vmatprep.subr.mxu0 0.0
  %2269 = vmatpush2.msra.mxu0 0.0
  %2270 = vmatprep.subr.mxu0 0.0
  %2271 = vmatpush2.msra.mxu0 0.0
  %2272 = vmatprep.subr.mxu0 0.0
  %2273 = vmatpush2.msra.mxu0 0.0
  %2274 = vmatprep.subr.mxu0 0.0
  %2275 = vmatpush2.msra.mxu0 0.0
  %2276 = vmatprep.subr.mxu0 0.0
  %2277 = vmatpush2.msra.mxu0 0.0
  %2278 = vmatprep.subr.mxu0 0.0
  %2279 = vmatpush2.msra.mxu0 0.0
  %2280 = vmatprep.subr.mxu0 0.0
  %2281 = vmatpush2.msra.mxu0 0.0
  %2282 = vmatprep.subr.mxu0 0.0
  %2283 = vmatpush2.msra.mxu0 0.0
  %2284 = vmatprep.subr.mxu0 0.0
  %2285 = vmatpush2.msra.mxu0 0.0
  %2286 = vmatprep.subr.mxu0 0.0
  %2287 = vmatpush2.msra.mxu0 0.0
  %2288 = vmatprep.subr.mxu0 0.0
  %2289 = vmatpush2.msra.mxu0 0.0
  %2290 = vmatprep.subr.mxu0 0.0
  %2291 = vmatpush2.msra.mxu0 0.0
  %2292 = vmatprep.subr.mxu0 0.0
  %2293 = vmatpush2.msra.mxu0 0.0
  %2294 = vmatprep.subr.mxu0 0.0
  %2295 = vmatpush2.msra.mxu0 0.0
  %2296 = vmatprep.mubr.f32.mxu0 0.0
  %2297 = vmatmul.mubr.f32.gmra.mxu0 %v1004
  %v2298 = vpop.f32.mrf.mxu0
  %v2299 = vadd.f32 %v1001, %v2298
  %v2300 = vpop.f32.mrf.mxu0
  %v2301 = vadd.f32 %v1001, %v2300
  %2302 = vdwg.mxu0
  %v2303 = vadd.f32 %v1986, %v2299
  %v2304 = vadd.f32 %v1987, %v2301
  %v2305 = vadd.f32 %v2303, %v2304
  %2306 = vadd.xlane.f32.xlu0 %v2305
  %v2307 = vpop.xlane.xlu0 %2306
  %v2308 = vmul.f32 %v2307, %v315
  %v2309 = vsub.f32 %v2303, %v2308
  %v2310 = vsub.f32 %v2304, %v2308
  %v2311 = vmul.f32 %v2309, %v2309
  %v2312 = vmul.f32 %v2310, %v2310
  %v2313 = vadd.f32 %v2311, %v2312
  %2314 = vadd.xlane.f32.xlu0 %v2313
  %v2315 = vpop.xlane.xlu0 %2314
  %v2316 = vmul.f32 %v2315, %v315
  %v2317 = vadd.f32 %v2316, 1e-05
  %v2318 = vrsqrt.pop %v2317
  %v2319 = vmul.f32 %v2309, %v2318
  %v2320 = vmul.f32 %v2310, %v2318
  %v2321 = vadd.f32 %v2319, 3.0
  %v2322 = vadd.f32 %v2320, 3.0
  %v2323 = vmax.f32 %v2321, 0.0
  %v2324 = vmax.f32 %v2322, 0.0
  %v2325 = vmin.f32 %v2323, 6.0
  %v2326 = vmin.f32 %v2324, 6.0
  %v2327 = vmul.f32 %v2319, %v2325
  %v2328 = vmul.f32 %v2320, %v2326
  %v2329 = vmul.f32 %v2327, 0.16666667
  %v2330 = vmul.f32 %v2328, 0.16666667
  %2333 = vrot.lane.b32.xlu0 %v2329, 17
  %v2334 = vpop.permute.xlu0 %2333
  %2335 = vrot.lane.b32.xlu0 %v2330, 17
  %v2336 = vpop.permute.xlu0 %2335
  %v2337 = vsel %vm144, %v2334, %v2336
  %v2340 = vsel %vm144, 0.0, %v2334
  %v2341 = vsel %vm151, %v2340, 0.0
  %v2342 = vsel %vm152, %v2337, 0.0
  %2343 = vrot.lane.b32.xlu0 %v2329, 16
  %v2344 = vpop.permute.xlu0 %2343
  %2345 = vrot.lane.b32.xlu0 %v2330, 16
  %v2346 = vpop.permute.xlu0 %2345
  %v2347 = vsel %vm159, %v2344, %v2346
  %v2350 = vsel %vm159, 0.0, %v2344
  %2351 = vrot.lane.b32.xlu0 %v2329, 15
  %v2352 = vpop.permute.xlu0 %2351
  %2353 = vrot.lane.b32.xlu0 %v2330, 15
  %v2354 = vpop.permute.xlu0 %2353
  %v2355 = vsel %vm168, %v2352, %v2354
  %v2358 = vsel %vm168, 0.0, %v2352
  %v2359 = vsel %vm175, %v2358, 0.0
  %v2360 = vsel %vm176, %v2355, 0.0
  %2361 = vrot.lane.b32.xlu0 %v2329, 1
  %v2362 = vpop.permute.xlu0 %2361
  %2363 = vrot.lane.b32.xlu0 %v2330, 1
  %v2364 = vpop.permute.xlu0 %2363
  %v2365 = vsel %vm183, %v2362, %v2364
  %v2368 = vsel %vm183, 0.0, %v2362
  %v2369 = vsel %vm151, %v2368, 0.0
  %v2370 = vsel %vm152, %v2365, 0.0
  %2371 = vrot.lane.b32.xlu0 %v2329, 127
  %v2372 = vpop.permute.xlu0 %2371
  %2373 = vrot.lane.b32.xlu0 %v2330, 127
  %v2374 = vpop.permute.xlu0 %2373
  %v2375 = vsel %vm194, %v2372, %v2374
  %v2378 = vsel %vm194, %v2374, 0.0
  %v2379 = vsel %vm175, %v2375, 0.0
  %v2380 = vsel %vm176, %v2378, 0.0
  %2381 = vrot.lane.b32.xlu0 %v2329, 113
  %v2382 = vpop.permute.xlu0 %2381
  %2383 = vrot.lane.b32.xlu0 %v2330, 113
  %v2384 = vpop.permute.xlu0 %2383
  %v2385 = vsel %vm205, %v2382, %v2384
  %v2388 = vsel %vm205, %v2384, 0.0
  %v2389 = vsel %vm151, %v2385, 0.0
  %v2390 = vsel %vm152, %v2388, 0.0
  %2391 = vrot.lane.b32.xlu0 %v2329, 112
  %v2392 = vpop.permute.xlu0 %2391
  %2393 = vrot.lane.b32.xlu0 %v2330, 112
  %v2394 = vpop.permute.xlu0 %2393
  %v2395 = vsel %vm216, %v2392, %v2394
  %v2398 = vsel %vm216, %v2394, 0.0
  %2399 = vrot.lane.b32.xlu0 %v2329, 111
  %v2400 = vpop.permute.xlu0 %2399
  %2401 = vrot.lane.b32.xlu0 %v2330, 111
  %v2402 = vpop.permute.xlu0 %2401
  %v2403 = vsel %vm225, %v2400, %v2402
  %v2406 = vsel %vm225, %v2402, 0.0
  %v2407 = vsel %vm175, %v2403, 0.0
  %v2408 = vsel %vm176, %v2406, 0.0
  %2409 = vmatprep.subr.mxu0 0.0
  %2410 = vmatpush1.msra.mxu0 0.0
  %2411 = vmatprep.subr.mxu0 0.0
  %2412 = vmatpush1.msra.mxu0 0.0
  %2413 = vmatprep.subr.mxu0 0.0
  %2414 = vmatpush1.msra.mxu0 0.0
  %2415 = vmatprep.subr.mxu0 0.0
  %2416 = vmatpush1.msra.mxu0 0.0
  %2417 = vmatprep.subr.mxu0 0.0
  %2418 = vmatpush1.msra.mxu0 0.0
  %2419 = vmatprep.subr.mxu0 0.0
  %2420 = vmatpush1.msra.mxu0 0.0
  %2421 = vmatprep.subr.mxu0 0.0
  %2422 = vmatpush1.msra.mxu0 0.0
  %2423 = vmatprep.subr.mxu0 %v2408
  %2424 = vmatpush1.msra.mxu0 %v2407
  %2425 = vmatprep.subr.mxu0 %v2398
  %2426 = vmatpush1.msra.mxu0 %v2395
  %2427 = vmatprep.subr.mxu0 %v2390
  %2428 = vmatpush1.msra.mxu0 %v2389
  %2429 = vmatprep.subr.mxu0 %v2380
  %2430 = vmatpush1.msra.mxu0 %v2379
  %2431 = vmatprep.subr.mxu0 %v2330
  %2432 = vmatpush1.msra.mxu0 %v2329
  %2433 = vmatprep.subr.mxu0 %v2370
  %2434 = vmatpush1.msra.mxu0 %v2369
  %2435 = vmatprep.subr.mxu0 %v2360
  %2436 = vmatpush1.msra.mxu0 %v2359
  %2437 = vmatprep.subr.mxu0 %v2347
  %2438 = vmatpush1.msra.mxu0 %v2350
  %2439 = vmatprep.subr.mxu0 %v2342
  %2440 = vmatpush1.msra.mxu0 %v2341
  %2441 = vmatprep.subr.mxu0 0.0
  %2442 = vmatpush2.msra.mxu0 0.0
  %2443 = vmatprep.subr.mxu0 0.0
  %2444 = vmatpush2.msra.mxu0 0.0
  %2445 = vmatprep.subr.mxu0 0.0
  %2446 = vmatpush2.msra.mxu0 0.0
  %2447 = vmatprep.subr.mxu0 0.0
  %2448 = vmatpush2.msra.mxu0 0.0
  %2449 = vmatprep.subr.mxu0 0.0
  %2450 = vmatpush2.msra.mxu0 0.0
  %2451 = vmatprep.subr.mxu0 0.0
  %2452 = vmatpush2.msra.mxu0 0.0
  %2453 = vmatprep.subr.mxu0 0.0
  %2454 = vmatpush2.msra.mxu0 0.0
  %2455 = vmatprep.subr.mxu0 0.0
  %2456 = vmatpush2.msra.mxu0 0.0
  %2457 = vmatprep.subr.mxu0 0.0
  %2458 = vmatpush2.msra.mxu0 0.0
  %2459 = vmatprep.subr.mxu0 0.0
  %2460 = vmatpush2.msra.mxu0 0.0
  %2461 = vmatprep.subr.mxu0 0.0
  %2462 = vmatpush2.msra.mxu0 0.0
  %2463 = vmatprep.subr.mxu0 0.0
  %2464 = vmatpush2.msra.mxu0 0.0
  %2465 = vmatprep.subr.mxu0 0.0
  %2466 = vmatpush2.msra.mxu0 0.0
  %2467 = vmatprep.subr.mxu0 0.0
  %2468 = vmatpush2.msra.mxu0 0.0
  %2469 = vmatprep.subr.mxu0 0.0
  %2470 = vmatpush2.msra.mxu0 0.0
  %2471 = vmatprep.subr.mxu0 0.0
  %2472 = vmatpush2.msra.mxu0 0.0
  %2473 = vmatprep.mubr.f32.mxu0 0.0
  %2474 = vmatmul.mubr.f32.gmra.mxu0 %v1198
  %v2475 = vpop.f32.mrf.mxu0
  %v2476 = vadd.f32 %v1190, %v2475
  %v2477 = vpop.f32.mrf.mxu0
  %v2478 = vadd.f32 %v1190, %v2477
  %2479 = vmatprep.mubr.f32.mxu0 0.0
  %2480 = vmatmul.mubr.f32.gmra.mxu0 %v1201
  %v2481 = vpop.f32.mrf.mxu0
  %v2482 = vadd.f32 %v1195, %v2481
  %v2483 = vpop.f32.mrf.mxu0
  %v2484 = vadd.f32 %v1195, %v2483
  %2485 = vdwg.mxu0
  %2486 = vmatprep.subr.mxu0 0.0
  %2487 = vmatpush1.msra.mxu0 0.0
  %2488 = vmatprep.subr.mxu0 0.0
  %2489 = vmatpush1.msra.mxu0 0.0
  %2490 = vmatprep.subr.mxu0 0.0
  %2491 = vmatpush1.msra.mxu0 0.0
  %2492 = vmatprep.subr.mxu0 0.0
  %2493 = vmatpush1.msra.mxu0 0.0
  %2494 = vmatprep.subr.mxu0 0.0
  %2495 = vmatpush1.msra.mxu0 0.0
  %2496 = vmatprep.subr.mxu0 0.0
  %2497 = vmatpush1.msra.mxu0 0.0
  %2498 = vmatprep.subr.mxu0 0.0
  %2499 = vmatpush1.msra.mxu0 0.0
  %2500 = vmatprep.subr.mxu0 0.0
  %2501 = vmatpush1.msra.mxu0 0.0
  %2502 = vmatprep.subr.mxu0 0.0
  %2503 = vmatpush1.msra.mxu0 0.0
  %2504 = vmatprep.subr.mxu0 0.0
  %2505 = vmatpush1.msra.mxu0 0.0
  %2506 = vmatprep.subr.mxu0 0.0
  %2507 = vmatpush1.msra.mxu0 0.0
  %2508 = vmatprep.subr.mxu0 0.0
  %2509 = vmatpush1.msra.mxu0 0.0
  %2510 = vmatprep.subr.mxu0 0.0
  %2511 = vmatpush1.msra.mxu0 0.0
  %2512 = vmatprep.subr.mxu0 0.0
  %2513 = vmatpush1.msra.mxu0 0.0
  %2514 = vmatprep.subr.mxu0 0.0
  %2515 = vmatpush1.msra.mxu0 0.0
  %2516 = vmatprep.subr.mxu0 %v2304
  %2517 = vmatpush1.msra.mxu0 %v2303
  %2518 = vmatprep.subr.mxu0 0.0
  %2519 = vmatpush2.msra.mxu0 0.0
  %2520 = vmatprep.subr.mxu0 0.0
  %2521 = vmatpush2.msra.mxu0 0.0
  %2522 = vmatprep.subr.mxu0 0.0
  %2523 = vmatpush2.msra.mxu0 0.0
  %2524 = vmatprep.subr.mxu0 0.0
  %2525 = vmatpush2.msra.mxu0 0.0
  %2526 = vmatprep.subr.mxu0 0.0
  %2527 = vmatpush2.msra.mxu0 0.0
  %2528 = vmatprep.subr.mxu0 0.0
  %2529 = vmatpush2.msra.mxu0 0.0
  %2530 = vmatprep.subr.mxu0 0.0
  %2531 = vmatpush2.msra.mxu0 0.0
  %2532 = vmatprep.subr.mxu0 0.0
  %2533 = vmatpush2.msra.mxu0 0.0
  %2534 = vmatprep.subr.mxu0 0.0
  %2535 = vmatpush2.msra.mxu0 0.0
  %2536 = vmatprep.subr.mxu0 0.0
  %2537 = vmatpush2.msra.mxu0 0.0
  %2538 = vmatprep.subr.mxu0 0.0
  %2539 = vmatpush2.msra.mxu0 0.0
  %2540 = vmatprep.subr.mxu0 0.0
  %2541 = vmatpush2.msra.mxu0 0.0
  %2542 = vmatprep.subr.mxu0 0.0
  %2543 = vmatpush2.msra.mxu0 0.0
  %2544 = vmatprep.subr.mxu0 0.0
  %2545 = vmatpush2.msra.mxu0 0.0
  %2546 = vmatprep.subr.mxu0 0.0
  %2547 = vmatpush2.msra.mxu0 0.0
  %2548 = vmatprep.subr.mxu0 0.0
  %2549 = vmatpush2.msra.mxu0 0.0
  %2550 = vmatprep.mubr.f32.mxu0 0.0
  %2551 = vmatmul.mubr.f32.gmra.mxu0 %v1295
  %v2552 = vpop.f32.mrf.mxu0
  %v2553 = vadd.f32 %v1287, %v2552
  %v2554 = vpop.f32.mrf.mxu0
  %v2555 = vadd.f32 %v1287, %v2554
  %2556 = vmatprep.mubr.f32.mxu0 0.0
  %2557 = vmatmul.mubr.f32.gmra.mxu0 %v1298
  %v2558 = vpop.f32.mrf.mxu0
  %v2559 = vadd.f32 %v1292, %v2558
  %v2560 = vpop.f32.mrf.mxu0
  %v2561 = vadd.f32 %v1292, %v2560
  %2562 = vdwg.mxu0
  %v2563 = vadd.f32 %v2476, %v2553
  %v2564 = vadd.f32 %v2478, %v2555
  %v2565 = vadd.f32 %v2482, %v2559
  %v2566 = vadd.f32 %v2484, %v2561
  %2567 = vmatprep.subr.mxu0 0.0
  %2568 = vmatpush1.msra.mxu0 %v117
  %2569 = vmatprep.subr.mxu0 0.0
  %2570 = vmatpush1.msra.mxu0 %v116
  %2571 = vmatprep.subr.mxu0 0.0
  %2572 = vmatpush1.msra.mxu0 %v115
  %2573 = vmatprep.subr.mxu0 0.0
  %2574 = vmatpush1.msra.mxu0 %v114
  %2575 = vmatprep.subr.mxu0 0.0
  %2576 = vmatpush1.msra.mxu0 %v113
  %2577 = vmatprep.subr.mxu0 0.0
  %2578 = vmatpush1.msra.mxu0 %v112
  %2579 = vmatprep.subr.mxu0 0.0
  %2580 = vmatpush1.msra.mxu0 %v111
  %2581 = vmatprep.subr.mxu0 0.0
  %2582 = vmatpush1.msra.mxu0 %v110
  %2583 = vmatprep.subr.mxu0 0.0
  %2584 = vmatpush1.msra.mxu0 %v109
  %2585 = vmatprep.subr.mxu0 0.0
  %2586 = vmatpush1.msra.mxu0 %v108
  %2587 = vmatprep.subr.mxu0 0.0
  %2588 = vmatpush1.msra.mxu0 %v107
  %2589 = vmatprep.subr.mxu0 0.0
  %2590 = vmatpush1.msra.mxu0 %v106
  %2591 = vmatprep.subr.mxu0 0.0
  %2592 = vmatpush1.msra.mxu0 %v105
  %2593 = vmatprep.subr.mxu0 0.0
  %2594 = vmatpush1.msra.mxu0 %v104
  %2595 = vmatprep.subr.mxu0 0.0
  %2596 = vmatpush1.msra.mxu0 %v103
  %2597 = vmatprep.subr.mxu0 0.0
  %2598 = vmatpush1.msra.mxu0 %v102
  %2599 = vmatprep.subr.mxu0 0.0
  %2600 = vmatpush2.msra.mxu0 %v133
  %2601 = vmatprep.subr.mxu0 0.0
  %2602 = vmatpush2.msra.mxu0 %v132
  %2603 = vmatprep.subr.mxu0 0.0
  %2604 = vmatpush2.msra.mxu0 %v131
  %2605 = vmatprep.subr.mxu0 0.0
  %2606 = vmatpush2.msra.mxu0 %v130
  %2607 = vmatprep.subr.mxu0 0.0
  %2608 = vmatpush2.msra.mxu0 %v129
  %2609 = vmatprep.subr.mxu0 0.0
  %2610 = vmatpush2.msra.mxu0 %v128
  %2611 = vmatprep.subr.mxu0 0.0
  %2612 = vmatpush2.msra.mxu0 %v127
  %2613 = vmatprep.subr.mxu0 0.0
  %2614 = vmatpush2.msra.mxu0 %v126
  %2615 = vmatprep.subr.mxu0 0.0
  %2616 = vmatpush2.msra.mxu0 %v125
  %2617 = vmatprep.subr.mxu0 0.0
  %2618 = vmatpush2.msra.mxu0 %v124
  %2619 = vmatprep.subr.mxu0 0.0
  %2620 = vmatpush2.msra.mxu0 %v123
  %2621 = vmatprep.subr.mxu0 0.0
  %2622 = vmatpush2.msra.mxu0 %v122
  %2623 = vmatprep.subr.mxu0 0.0
  %2624 = vmatpush2.msra.mxu0 %v121
  %2625 = vmatprep.subr.mxu0 0.0
  %2626 = vmatpush2.msra.mxu0 %v120
  %2627 = vmatprep.subr.mxu0 0.0
  %2628 = vmatpush2.msra.mxu0 %v119
  %2629 = vmatprep.subr.mxu0 0.0
  %2630 = vmatpush2.msra.mxu0 %v118
  %2631 = vmatprep.mubr.f32.mxu0 %v2564
  %2632 = vmatmul.mubr.f32.gmra.mxu0 %v2563
  %v2633 = vpop.f32.mrf.mxu0
  %v2634 = vadd.f32 0.0, %v2633
  %v2635 = vpop.f32.mrf.mxu0
  %2636 = vmatprep.mubr.f32.mxu0 %v2566
  %2637 = vmatmul.mubr.f32.gmra.mxu0 %v2565
  %v2638 = vpop.f32.mrf.mxu0
  %v2639 = vadd.f32 0.0, %v2638
  %v2640 = vpop.f32.mrf.mxu0
  %2641 = vdwg.mxu0
  %v2642 = vsel %vm1456, %v2634, 0.0
  %2643 = vadd.xlane.f32.xlu0 %v2642
  %v2644 = vpop.xlane.xlu0 %2643
  %v2645 = vsel %vm1456, %v2639, 0.0
  %2646 = vadd.xlane.f32.xlu0 %v2645
  %v2647 = vpop.xlane.xlu0 %2646
  %v2648 = vmul.f32 %v2644, %v1463
  %v2649 = vmul.f32 %v2647, %v1463
  %v2650 = vsel %vm183, %v1464, %v2648
  %v2651 = vsel %vm183, %v1465, %v2649
  %v2652 = vld [vmem:[%s20] sm:$0xff]
  %v2653 = vld [vmem:[%s20 + $0x8] sm:$0xff]
  %v2654 = vld [vmem:[%s20 + $0x10] sm:$0xff]
  %v2655 = vld [vmem:[%s20 + $0x18] sm:$0xff]
  %v2656 = vld [vmem:[%s21] sm:$0xff]
  %v2657 = vld [vmem:[%s21 + $0x8] sm:$0xff]
  %v2658 = vld [vmem:[%s21 + $0x10] sm:$0xff]
  %v2659 = vld [vmem:[%s21 + $0x18] sm:$0xff]
  %2661 = vset.pattern.permute.xlu0 0
  %2662 = vperm.xlu0 %2661, %v2656
  %v2663 = vpop.permute.xlu0 %2662
  %2666 = vset.pattern.permute.xlu0 0
  %2667 = vperm.xlu0 %2666, %v2657
  %v2668 = vpop.permute.xlu0 %2667
  %2671 = vset.pattern.permute.xlu0 0
  %2672 = vperm.xlu0 %2671, %v2658
  %v2673 = vpop.permute.xlu0 %2672
  %2676 = vset.pattern.permute.xlu0 0
  %2677 = vperm.xlu0 %2676, %v2659
  %v2678 = vpop.permute.xlu0 %2677
  %v2681 = vsel %vm159, %v2652, 0
  %v2684 = vsel %vm159, %v2653, 0
  %v2687 = vsel %vm159, %v2654, 0
  %v2690 = vsel %vm159, %v2655, 0
  %2692 = vmatprep.subr.mxu0 0.0
  %2693 = vmatpush1.msra.mxu0 0.0
  %2694 = vmatprep.subr.mxu0 0.0
  %2695 = vmatpush1.msra.mxu0 0.0
  %2696 = vmatprep.subr.mxu0 0.0
  %2697 = vmatpush1.msra.mxu0 0.0
  %2698 = vmatprep.subr.mxu0 0.0
  %2699 = vmatpush1.msra.mxu0 0.0
  %2700 = vmatprep.subr.mxu0 0.0
  %2701 = vmatpush1.msra.mxu0 0.0
  %2702 = vmatprep.subr.mxu0 0.0
  %2703 = vmatpush1.msra.mxu0 0.0
  %2704 = vmatprep.subr.mxu0 0.0
  %2705 = vmatpush1.msra.mxu0 0.0
  %2706 = vmatprep.subr.mxu0 0.0
  %2707 = vmatpush1.msra.mxu0 0.0
  %2708 = vmatprep.subr.mxu0 0.0
  %2709 = vmatpush1.msra.mxu0 0.0
  %2710 = vmatprep.subr.mxu0 0.0
  %2711 = vmatpush1.msra.mxu0 0.0
  %2712 = vmatprep.subr.mxu0 0.0
  %2713 = vmatpush1.msra.mxu0 0.0
  %2714 = vmatprep.subr.mxu0 0.0
  %2715 = vmatpush1.msra.mxu0 0.0
  %2716 = vmatprep.subr.mxu0 0.0
  %2717 = vmatpush1.msra.mxu0 0.0
  %2718 = vmatprep.subr.mxu0 0.0
  %2719 = vmatpush1.msra.mxu0 0.0
  %2720 = vmatprep.subr.mxu0 0.0
  %2721 = vmatpush1.msra.mxu0 %v2651
  %2722 = vmatprep.subr.mxu0 0.0
  %2723 = vmatpush1.msra.mxu0 %v2650
  %2724 = vmatprep.subr.mxu0 0.0
  %2725 = vmatpush2.msra.mxu0 0.0
  %2726 = vmatprep.subr.mxu0 0.0
  %2727 = vmatpush2.msra.mxu0 0.0
  %2728 = vmatprep.subr.mxu0 0.0
  %2729 = vmatpush2.msra.mxu0 0.0
  %2730 = vmatprep.subr.mxu0 0.0
  %2731 = vmatpush2.msra.mxu0 0.0
  %2732 = vmatprep.subr.mxu0 0.0
  %2733 = vmatpush2.msra.mxu0 0.0
  %2734 = vmatprep.subr.mxu0 0.0
  %2735 = vmatpush2.msra.mxu0 0.0
  %2736 = vmatprep.subr.mxu0 0.0
  %2737 = vmatpush2.msra.mxu0 0.0
  %2738 = vmatprep.subr.mxu0 0.0
  %2739 = vmatpush2.msra.mxu0 0.0
  %2740 = vmatprep.subr.mxu0 0.0
  %2741 = vmatpush2.msra.mxu0 0.0
  %2742 = vmatprep.subr.mxu0 0.0
  %2743 = vmatpush2.msra.mxu0 0.0
  %2744 = vmatprep.subr.mxu0 0.0
  %2745 = vmatpush2.msra.mxu0 0.0
  %2746 = vmatprep.subr.mxu0 0.0
  %2747 = vmatpush2.msra.mxu0 0.0
  %2748 = vmatprep.subr.mxu0 0.0
  %2749 = vmatpush2.msra.mxu0 0.0
  %2750 = vmatprep.subr.mxu0 0.0
  %2751 = vmatpush2.msra.mxu0 0.0
  %2752 = vmatprep.subr.mxu0 0.0
  %2753 = vmatpush2.msra.mxu0 0.0
  %2754 = vmatprep.subr.mxu0 0.0
  %2755 = vmatpush2.msra.mxu0 0.0
  %2756 = vmatprep.mubr.f32.mxu0 0.0
  %2757 = vmatmul.mubr.f32.gmra.mxu0 %v2681
  %v2758 = vpop.f32.mrf.mxu0
  %v2759 = vadd.f32 %v2663, %v2758
  %v2760 = vpop.f32.mrf.mxu0
  %2761 = vmatprep.mubr.f32.mxu0 0.0
  %2762 = vmatmul.mubr.f32.gmra.mxu0 %v2684
  %v2763 = vpop.f32.mrf.mxu0
  %v2764 = vadd.f32 %v2668, %v2763
  %v2765 = vpop.f32.mrf.mxu0
  %2766 = vmatprep.mubr.f32.mxu0 0.0
  %2767 = vmatmul.mubr.f32.gmra.mxu0 %v2687
  %v2768 = vpop.f32.mrf.mxu0
  %v2769 = vadd.f32 %v2673, %v2768
  %v2770 = vpop.f32.mrf.mxu0
  %2771 = vmatprep.mubr.f32.mxu0 0.0
  %2772 = vmatmul.mubr.f32.gmra.mxu0 %v2690
  %v2773 = vpop.f32.mrf.mxu0
  %v2774 = vadd.f32 %v2678, %v2773
  %v2775 = vpop.f32.mrf.mxu0
  %2776 = vdwg.mxu0
  %vm2777 = vcmask 15360
  %2778 = vst.msk [vmem:[%s22] sm:$0xff] %vm2777, %v2759
  %2779 = vst.msk [vmem:[%s22 + $0x8] sm:$0xff] %vm2777, %v2764
  %2780 = vst.msk [vmem:[%s22 + $0x10] sm:$0xff] %vm2777, %v2769
  %2781 = vst.msk [vmem:[%s22 + $0x18] sm:$0xff] %vm2777, %v2774
  // Predicated region
  $region90: #{modelparse_forward.1} parent=0 // pred_check
    _
  $region91: #{modelparse_forward.1} parent=0 // pred_check_branch
    %2783 = sbr.rel (0) target = $region93
  $region92: #{modelparse_forward.1} parent=0 // pred_region
    _
  $region93: #{modelparse_forward.1} parent=0 // pred_fallthru
    _
  // Predicated region
  $region94: #{modelparse_forward.1} parent=0 // pred_check
    _
  $region95: #{modelparse_forward.1} parent=0 // pred_check_branch
    %2785 = sbr.rel (0) target = $region97
  $region96: #{modelparse_forward.1} parent=0 // pred_region
    _
  $region97: #{modelparse_forward.1} parent=0 // pred_fallthru
    _

</llo_original>
